<compile_context>
chip_gen: v7x
topology: tpu7x:2x2x1
jax: 0.10.0
libtpu: 0.0.40
codegen_flags: <defaults>
</compile_context>

<pallas_src>
import jax
import jax.numpy as jnp
import numpy as np
from jax import lax
from jax.experimental import pallas as pl
from jax.experimental.pallas import tpu as pltpu

N_TILE = 20
CLS_POS = 81                 # 9x9 positions per conv1 stride-parity class
CONV_COLS = 4 * CLS_POS      # 324 spatial columns (4 parity classes)
COL_PAD = 384                # lane-dense padding (>= 334 needed by the conv2 taps)


# ------------------------------ Pallas kernel ------------------------------- #

def critic_kernel(p_ref, va_ref,
                  w1_ref, b1_ref, w2t_ref, b2c_ref,
                  w0_ref, b0_ref, w1fc_ref, b1fc_ref, w2fc_ref, b2fc_ref,
                  out_ref):
    """conv1 -> ReLU -> conv2 -> ReLU -> fc0 -> ReLU -> fc1 -> ReLU -> fc2, batched."""
    TB = out_ref.shape[0]

    # ---- conv1 (+bias+ReLU): one block-diagonal MXU matmul for all TB samples.
    #      h rows = (ic, oc, b)  [oc is pre-replicated for the conv2 taps],
    #      h lanes = cls*81 + class_position  (zero-padded to COL_PAD lanes).
    h = jnp.dot(w1_ref[...], p_ref[...], preferred_element_type=jnp.float32)
    h = jnp.maximum(h + b1_ref[...], 0.0)                       # (8*TB, COL_PAD)

    # ---- conv2: 16 shift-and-FMA taps, (ic, oc, b) packed on sublanes.
    #      Tap (kh, kw) reads parity class (kh%2, kw%2) at lane shift 9*(kh//2)+(kw//2).
    w2t = w2t_ref[...]                                          # (8*TB, 16)
    acc = None
    for kh in range(4):
        for kw in range(4):
            cls = 2 * (kh % 2) + (kw % 2)
            shift = 9 * (kh // 2) + (kw // 2)
            off = cls * CLS_POS + shift
            t = kh * 4 + kw
            term = h[:, off:off + CLS_POS] * w2t[:, t:t + 1]    # (8*TB, 81)
            acc = term if acc is None else acc + term
    z = acc[:4 * TB, :] + acc[4 * TB:, :]                       # reduce ic -> (oc, b)
    y = jnp.maximum(z + b2c_ref[...], 0.0)                      # (4*TB, 81)

    # ---- fc0 (+ReLU): ONE fused (TB, 4*81 + sd + ad) @ (., 400) dot.
    #      Junk lanes (q%9==8 or q>=72) have zero weight rows in w0_ref.
    x0 = jnp.concatenate(
        [y[0:TB, :], y[TB:2 * TB, :], y[2 * TB:3 * TB, :], y[3 * TB:4 * TB, :],
         va_ref[...]], axis=1)
    h0 = jnp.maximum(
        jnp.dot(x0, w0_ref[...], preferred_element_type=jnp.float32) + b0_ref[...],
        0.0)                                                    # (TB, 400)

    # ---- fc1 (+ReLU) and fc2 (VPU multiply + lane reduce; no (300,1) MXU RHS).
    h1 = jnp.maximum(
        jnp.dot(h0, w1fc_ref[...], preferred_element_type=jnp.float32) + b1fc_ref[...],
        0.0)                                                    # (TB, 300)
    out_ref[...] = (jnp.sum(h1 * w2fc_ref[...], axis=1, keepdims=True)
                    + b2fc_ref[...])                            # (TB, 1)


# ------------------------------ JAX wrapper --------------------------------- #

def _make_patches(image):
    """conv1 im2col split by output-position parity, laid out kernel-ready.

    Returns (B*C*64, COL_PAD) f32: row = (b, feature(c,kh,kw)),
    column = cls*81 + (hh*9 + ww) for parity class cls = 2*r + s, zero-padded lanes.
    """
    B, C, _, _ = image.shape
    classes = []
    for r in (0, 1):
        for s in (0, 1):
            p = lax.conv_general_dilated_patches(
                image[:, :, 2 * r:, 2 * s:], filter_shape=(8, 8),
                window_strides=(4, 4), padding="VALID",
                dimension_numbers=("NCHW", "OIHW", "NCHW"),
                precision=lax.Precision.HIGHEST)                # (B, C*64, 9, 9)
            classes.append(p.reshape(B, C * 64, CLS_POS))
    pat = jnp.stack(classes, axis=2)                            # (B, C*64, 4, 81)
    pat = pat.reshape(B * C * 64, CONV_COLS)
    return jnp.pad(pat, ((0, 0), (0, COL_PAD - CONV_COLS)))


def critic_forward(kparams, image, velocity, action):
    B, C, H, W = image.shape
    assert H == 42 and W == 42, "fc_0 pins the image to 42x42 (8*8*4 conv features)"
    F = C * 64
    TB = kparams["w2t"].shape[0] // 8                           # batch tile (static)

    # Pad batch to a multiple of the batch tile (padded rows are sliced off at the end).
    Bp = ((B + TB - 1) // TB) * TB
    if Bp != B:
        pad = Bp - B
        image = jnp.pad(image, ((0, pad), (0, 0), (0, 0), (0, 0)))
        velocity = jnp.pad(velocity, ((0, pad), (0, 0)))
        action = jnp.pad(action, ((0, pad), (0, 0)))

    patches = _make_patches(image)                              # (Bp*F, COL_PAD)
    va = jnp.concatenate([velocity, action], axis=1)            # (Bp, sd+ad)
    n_va = va.shape[1]
    nb = Bp // TB

    def _full(a):
        nd = a.ndim
        return pl.BlockSpec(a.shape, lambda i: (0,) * nd)

    in_specs = [
        pl.BlockSpec((TB * F, COL_PAD), lambda i: (i, 0)),      # patches (per batch tile)
        pl.BlockSpec((TB, n_va), lambda i: (i, 0)),             # [velocity, action]
        _full(kparams["w1_big"]), _full(kparams["b1_big"]),
        _full(kparams["w2t"]), _full(kparams["b2col"]),
        _full(kparams["w0cat"]), _full(kparams["b0"]),
        _full(kparams["w1fc"]), _full(kparams["b1fc"]),
        _full(kparams["w2fc"]), _full(kparams["b2fc"]),
    ]
    out_specs = pl.BlockSpec((TB, 1), lambda i: (i, 0))

    w0_rows = kparams["w0cat"].shape[0]
    flops = nb * (2 * (8 * TB) * (TB * F) * COL_PAD             # conv1 (block-diag)
                  + 16 * 2 * (8 * TB) * CLS_POS                 # conv2 taps
                  + 2 * TB * w0_rows * 400                      # fc0
                  + 2 * TB * 400 * 300                          # fc1
                  + 2 * TB * 300)                               # fc2
    weight_keys = ("w1_big", "b1_big", "w2t", "b2col", "w0cat", "b0",
                   "w1fc", "b1fc", "w2fc", "b2fc")
    bytes_accessed = (patches.size + va.size + Bp) * 4 + sum(
        int(np.prod(kparams[k].shape)) * 4 for k in weight_keys)

    q = pl.pallas_call(
        critic_kernel,
        out_shape=jax.ShapeDtypeStruct((Bp, 1), jnp.float32),
        grid_spec=pltpu.PrefetchScalarGridSpec(
            num_scalar_prefetch=0, grid=(nb,),
            in_specs=in_specs, out_specs=out_specs),
        compiler_params=pltpu.CompilerParams(
            dimension_semantics=("parallel",)),
        cost_estimate=pl.CostEstimate(flops=flops, transcendentals=0,
                                      bytes_accessed=int(bytes_accessed)),
    )(patches, va,
      kparams["w1_big"], kparams["b1_big"], kparams["w2t"], kparams["b2col"],
      kparams["w0cat"], kparams["b0"], kparams["w1fc"], kparams["b1fc"],
      kparams["w2fc"], kparams["b2fc"])
    return q[:B]


# ----------------------------- parameter init ------------------------------- #

def init_params(key, channel_num, state_dim, action_dim):
    """Parameters in the original PyTorch layout (used by the reference check)."""
    ks = jax.random.split(key, 5)

    def xavier_conv(k, shape):  # (OC, IC, KH, KW)
        fan_in = shape[1] * shape[2] * shape[3]
        fan_out = shape[0] * shape[2] * shape[3]
        std = (2.0 / (fan_in + fan_out)) ** 0.5
        return std * jax.random.normal(k, shape, jnp.float32)

    def kaiming_linear(k, fan_in, fan_out):  # stored as (in, out)
        std = (2.0 / fan_in) ** 0.5
        return std * jax.random.normal(k, (fan_in, fan_out), jnp.float32)

    in0 = 8 * 8 * 4 + N_TILE * state_dim + action_dim
    return dict(
        conv1_w=xavier_conv(ks[0], (2, channel_num, 8, 8)),
        conv1_b=jnp.zeros((2,), jnp.float32),
        conv2_w=xavier_conv(ks[1], (4, 2, 4, 4)),
        conv2_b=jnp.zeros((4,), jnp.float32),
        fc0_w=kaiming_linear(ks[2], in0, 400),
        fc0_b=jnp.zeros((1, 400), jnp.float32),
        fc1_w=kaiming_linear(ks[3], 400, 300),
        fc1_b=jnp.zeros((1, 300), jnp.float32),
        fc2_w=kaiming_linear(ks[4], 300, 1),
        fc2_b=jnp.zeros((1, 1), jnp.float32),
    )


def prepare_params(p, state_dim, batch_tile=8):
    """One-time prep: fold /255 into conv1, build the block-diagonal conv1 weight and
    pre-broadcast conv2 tap/bias tables for the batch tile, pre-sum the N_TILE velocity
    weights, and re-index fc0's rows to the kernel's (oc, 9x9-lane) + [vel, act] layout."""
    TB = batch_tile
    C = p["conv1_w"].shape[1]
    F = C * 64

    # conv1: block-diagonal over the batch tile, rows (ic, oc, b), cols (b, feature).
    w1 = p["conv1_w"].reshape(2, F) * (1.0 / 255.0)
    eye = jnp.eye(TB, dtype=jnp.float32)
    w1_big = w1[:, None, None, None, :] * eye[None, None, :, :, None]   # (2,1,TB,TB,F)
    w1_big = jnp.broadcast_to(w1_big, (2, 4, TB, TB, F)).reshape(8 * TB, TB * F)
    b1_big = jnp.broadcast_to(p["conv1_b"].reshape(2, 1, 1, 1),
                              (2, 4, TB, 1)).reshape(8 * TB, 1)

    # conv2 tap table: rows (ic, oc, b), cols t = kh*4 + kw.
    w2 = p["conv2_w"].transpose(1, 0, 2, 3).reshape(2, 4, 16)            # (ic, oc, t)
    w2t = jnp.broadcast_to(w2[:, :, None, :], (2, 4, TB, 16)).reshape(8 * TB, 16)
    b2col = jnp.broadcast_to(p["conv2_b"].reshape(4, 1, 1),
                             (4, TB, 1)).reshape(4 * TB, 1)

    # fc0: features re-indexed to 4 x 81 lanes (zeros at the 17 junk lanes/channel),
    # velocity weights pre-summed over the N_TILE replicas, then [vel, act] rows.
    w0 = p["fc0_w"]
    n_out = w0.shape[1]
    wf = w0[:256].reshape(4, 8, 8, n_out)
    w0f = jnp.zeros((4, 9, 9, n_out), jnp.float32).at[:, :8, :8, :].set(wf)
    w0f = w0f.reshape(4 * CLS_POS, n_out)
    w0v = w0[256:256 + N_TILE * state_dim].reshape(N_TILE, state_dim, n_out).sum(axis=0)
    w0a = w0[256 + N_TILE * state_dim:]
    w0cat = jnp.concatenate([w0f, w0v, w0a], axis=0)             # (324+sd+ad, 400)

    return dict(w1_big=w1_big, b1_big=b1_big, w2t=w2t, b2col=b2col,
                w0cat=w0cat, b0=p["fc0_b"],
                w1fc=p["fc1_w"], b1fc=p["fc1_b"],
                w2fc=p["fc2_w"].reshape(1, -1), b2fc=p["fc2_b"])


# ------------------------- pure-JAX reference check ------------------------- #

def reference_forward(params, image, velocity, action):
    dn = ("NCHW", "OIHW", "NCHW")
    x = image / 255.0
    x = lax.conv_general_dilated(x, params["conv1_w"], (2, 2), "VALID",
                                 dimension_numbers=dn)
    x = jnp.maximum(x + params["conv1_b"].reshape(1, -1, 1, 1), 0.0)
    x = lax.conv_general_dilated(x, params["conv2_w"], (2, 2), "VALID",
                                 dimension_numbers=dn)
    x = jnp.maximum(x + params["conv2_b"].reshape(1, -1, 1, 1), 0.0)
    B = image.shape[0]
    x = x.reshape(B, -1)
    vel = jnp.tile(velocity.reshape(B, -1), (1, N_TILE))
    x = jnp.concatenate([x, vel, action.reshape(B, -1)], axis=1)
    x = jnp.maximum(x @ params["fc0_w"] + params["fc0_b"], 0.0)
    x = jnp.maximum(x @ params["fc1_w"] + params["fc1_b"], 0.0)
    return x @ params["fc2_w"] + params["fc2_b"]


if __name__ == "__main__":
    channel_num, state_dim, action_dim, batch = 3, 3, 2, 16
    key = jax.random.PRNGKey(0)
    kp, ki, kv, ka = jax.random.split(key, 4)

    params = init_params(kp, channel_num, state_dim, action_dim)
    kparams = prepare_params(params, state_dim, batch_tile=8)    # grid = (2,)

    image = jnp.floor(jax.random.uniform(ki, (batch, channel_num, 42, 42),
                                         jnp.float32, 0.0, 256.0))
    image = jnp.clip(image, 0.0, 255.0)                          # uint8-style pixels
    velocity = jax.random.normal(kv, (batch, state_dim), jnp.float32)
    action = jax.random.normal(ka, (batch, action_dim), jnp.float32)

    fwd = jax.jit(critic_forward)
    value = jax.block_until_ready(fwd(kparams, image, velocity, action))
    assert value.shape == (batch, 1)

    ref = reference_forward(params, image, velocity, action)
    np.testing.assert_allclose(np.asarray(value), np.asarray(ref),
                               rtol=1e-3, atol=1e-3)
    print("KERNEL_OK")
</pallas_src>

<mosaic_0001>
module attributes {stable_mosaic.version = 11 : i64} {
  func.func @critic_kernel(%arg0: i32, %arg1: memref<1536x384xf32, #tpu.memory_space<vmem>>, %arg2: memref<8x5xf32, #tpu.memory_space<vmem>>, %arg3: memref<64x1536xf32, #tpu.memory_space<vmem>>, %arg4: memref<64x1xf32, #tpu.memory_space<vmem>>, %arg5: memref<64x16xf32, #tpu.memory_space<vmem>>, %arg6: memref<32x1xf32, #tpu.memory_space<vmem>>, %arg7: memref<329x400xf32, #tpu.memory_space<vmem>>, %arg8: memref<1x400xf32, #tpu.memory_space<vmem>>, %arg9: memref<400x300xf32, #tpu.memory_space<vmem>>, %arg10: memref<1x300xf32, #tpu.memory_space<vmem>>, %arg11: memref<1x300xf32, #tpu.memory_space<vmem>>, %arg12: memref<1x1xf32, #tpu.memory_space<vmem>>, %arg13: memref<8x1xf32, #tpu.memory_space<vmem>>) attributes {dimension_semantics = [#tpu.dimension_semantics<parallel>], iteration_bounds = array<i64: 2>, scalar_prefetch = 0 : i64, scratch_operands = 0 : i64, tpu.core_type = #tpu.core_type<tc>, window_params = [{transform_indices = @transform_0, window_bounds = array<i64: 1536, 384>}, {transform_indices = @transform_1, window_bounds = array<i64: 8, 5>}, {pipeline_mode = #tpu.pipeline_mode<synchronous>, transform_indices = @transform_2, window_bounds = array<i64: 64, 1536>}, {pipeline_mode = #tpu.pipeline_mode<synchronous>, transform_indices = @transform_3, window_bounds = array<i64: 64, 1>}, {pipeline_mode = #tpu.pipeline_mode<synchronous>, transform_indices = @transform_4, window_bounds = array<i64: 64, 16>}, {pipeline_mode = #tpu.pipeline_mode<synchronous>, transform_indices = @transform_5, window_bounds = array<i64: 32, 1>}, {pipeline_mode = #tpu.pipeline_mode<synchronous>, transform_indices = @transform_6, window_bounds = array<i64: 329, 400>}, {pipeline_mode = #tpu.pipeline_mode<synchronous>, transform_indices = @transform_7, window_bounds = array<i64: 1, 400>}, {pipeline_mode = #tpu.pipeline_mode<synchronous>, transform_indices = @transform_8, window_bounds = array<i64: 400, 300>}, {pipeline_mode = #tpu.pipeline_mode<synchronous>, transform_indices = @transform_9, window_bounds = array<i64: 1, 300>}, {pipeline_mode = #tpu.pipeline_mode<synchronous>, transform_indices = @transform_10, window_bounds = array<i64: 1, 300>}, {pipeline_mode = #tpu.pipeline_mode<synchronous>, transform_indices = @transform_11, window_bounds = array<i64: 1, 1>}, {transform_indices = @transform_12, window_bounds = array<i64: 8, 1>}]} {
    %c0 = arith.constant 0 : index
    %c0_0 = arith.constant 0 : index
    %0 = vector.load %arg3[%c0, %c0_0] : memref<64x1536xf32, #tpu.memory_space<vmem>>, vector<64x1536xf32>
    %c0_1 = arith.constant 0 : index
    %c0_2 = arith.constant 0 : index
    %1 = vector.load %arg1[%c0_1, %c0_2] : memref<1536x384xf32, #tpu.memory_space<vmem>>, vector<1536x384xf32>
    %cst = arith.constant dense<0.000000e+00> : vector<64x384xf32>
    %2 = tpu.matmul %0, %1, %cst {dimension_numbers = #tpu.dot_dimension_numbers<[1], [0], [0], [1], [0, 0, 1, 1], [], []>} : vector<64x1536xf32>, vector<1536x384xf32>, vector<64x384xf32> -> vector<64x384xf32>
    %c0_3 = arith.constant 0 : index
    %c0_4 = arith.constant 0 : index
    %3 = vector.load %arg4[%c0_3, %c0_4] : memref<64x1xf32, #tpu.memory_space<vmem>>, vector<64x1xf32>
    %4 = vector.broadcast %3 : vector<64x1xf32> to vector<64x384xf32>
    %5 = arith.addf %2, %4 : vector<64x384xf32>
    %cst_5 = arith.constant 0.000000e+00 : f32
    %6 = vector.broadcast %cst_5 : f32 to vector<64x384xf32>
    %7 = arith.maximumf %5, %6 : vector<64x384xf32>
    %c0_6 = arith.constant 0 : index
    %c0_7 = arith.constant 0 : index
    %8 = vector.load %arg5[%c0_6, %c0_7] : memref<64x16xf32, #tpu.memory_space<vmem>>, vector<64x16xf32>
    %9 = vector.extract_strided_slice %7 {offsets = [0, 0], sizes = [64, 81], strides = [1, 1]} : vector<64x384xf32> to vector<64x81xf32>
    %10 = vector.extract_strided_slice %8 {offsets = [0, 0], sizes = [64, 1], strides = [1, 1]} : vector<64x16xf32> to vector<64x1xf32>
    %11 = vector.broadcast %10 : vector<64x1xf32> to vector<64x81xf32>
    %12 = arith.mulf %9, %11 : vector<64x81xf32>
    %13 = vector.extract_strided_slice %7 {offsets = [0, 81], sizes = [64, 81], strides = [1, 1]} : vector<64x384xf32> to vector<64x81xf32>
    %14 = vector.extract_strided_slice %8 {offsets = [0, 1], sizes = [64, 1], strides = [1, 1]} : vector<64x16xf32> to vector<64x1xf32>
    %15 = vector.broadcast %14 : vector<64x1xf32> to vector<64x81xf32>
    %16 = arith.mulf %13, %15 : vector<64x81xf32>
    %17 = arith.addf %12, %16 : vector<64x81xf32>
    %18 = vector.extract_strided_slice %7 {offsets = [0, 1], sizes = [64, 81], strides = [1, 1]} : vector<64x384xf32> to vector<64x81xf32>
    %19 = vector.extract_strided_slice %8 {offsets = [0, 2], sizes = [64, 1], strides = [1, 1]} : vector<64x16xf32> to vector<64x1xf32>
    %20 = vector.broadcast %19 : vector<64x1xf32> to vector<64x81xf32>
    %21 = arith.mulf %18, %20 : vector<64x81xf32>
    %22 = arith.addf %17, %21 : vector<64x81xf32>
    %23 = vector.extract_strided_slice %7 {offsets = [0, 82], sizes = [64, 81], strides = [1, 1]} : vector<64x384xf32> to vector<64x81xf32>
    %24 = vector.extract_strided_slice %8 {offsets = [0, 3], sizes = [64, 1], strides = [1, 1]} : vector<64x16xf32> to vector<64x1xf32>
    %25 = vector.broadcast %24 : vector<64x1xf32> to vector<64x81xf32>
    %26 = arith.mulf %23, %25 : vector<64x81xf32>
    %27 = arith.addf %22, %26 : vector<64x81xf32>
    %28 = vector.extract_strided_slice %7 {offsets = [0, 162], sizes = [64, 81], strides = [1, 1]} : vector<64x384xf32> to vector<64x81xf32>
    %29 = vector.extract_strided_slice %8 {offsets = [0, 4], sizes = [64, 1], strides = [1, 1]} : vector<64x16xf32> to vector<64x1xf32>
    %30 = vector.broadcast %29 : vector<64x1xf32> to vector<64x81xf32>
    %31 = arith.mulf %28, %30 : vector<64x81xf32>
    %32 = arith.addf %27, %31 : vector<64x81xf32>
    %33 = vector.extract_strided_slice %7 {offsets = [0, 243], sizes = [64, 81], strides = [1, 1]} : vector<64x384xf32> to vector<64x81xf32>
    %34 = vector.extract_strided_slice %8 {offsets = [0, 5], sizes = [64, 1], strides = [1, 1]} : vector<64x16xf32> to vector<64x1xf32>
    %35 = vector.broadcast %34 : vector<64x1xf32> to vector<64x81xf32>
    %36 = arith.mulf %33, %35 : vector<64x81xf32>
    %37 = arith.addf %32, %36 : vector<64x81xf32>
    %38 = vector.extract_strided_slice %7 {offsets = [0, 163], sizes = [64, 81], strides = [1, 1]} : vector<64x384xf32> to vector<64x81xf32>
    %39 = vector.extract_strided_slice %8 {offsets = [0, 6], sizes = [64, 1], strides = [1, 1]} : vector<64x16xf32> to vector<64x1xf32>
    %40 = vector.broadcast %39 : vector<64x1xf32> to vector<64x81xf32>
    %41 = arith.mulf %38, %40 : vector<64x81xf32>
    %42 = arith.addf %37, %41 : vector<64x81xf32>
    %43 = vector.extract_strided_slice %7 {offsets = [0, 244], sizes = [64, 81], strides = [1, 1]} : vector<64x384xf32> to vector<64x81xf32>
    %44 = vector.extract_strided_slice %8 {offsets = [0, 7], sizes = [64, 1], strides = [1, 1]} : vector<64x16xf32> to vector<64x1xf32>
    %45 = vector.broadcast %44 : vector<64x1xf32> to vector<64x81xf32>
    %46 = arith.mulf %43, %45 : vector<64x81xf32>
    %47 = arith.addf %42, %46 : vector<64x81xf32>
    %48 = vector.extract_strided_slice %7 {offsets = [0, 9], sizes = [64, 81], strides = [1, 1]} : vector<64x384xf32> to vector<64x81xf32>
    %49 = vector.extract_strided_slice %8 {offsets = [0, 8], sizes = [64, 1], strides = [1, 1]} : vector<64x16xf32> to vector<64x1xf32>
    %50 = vector.broadcast %49 : vector<64x1xf32> to vector<64x81xf32>
    %51 = arith.mulf %48, %50 : vector<64x81xf32>
    %52 = arith.addf %47, %51 : vector<64x81xf32>
    %53 = vector.extract_strided_slice %7 {offsets = [0, 90], sizes = [64, 81], strides = [1, 1]} : vector<64x384xf32> to vector<64x81xf32>
    %54 = vector.extract_strided_slice %8 {offsets = [0, 9], sizes = [64, 1], strides = [1, 1]} : vector<64x16xf32> to vector<64x1xf32>
    %55 = vector.broadcast %54 : vector<64x1xf32> to vector<64x81xf32>
    %56 = arith.mulf %53, %55 : vector<64x81xf32>
    %57 = arith.addf %52, %56 : vector<64x81xf32>
    %58 = vector.extract_strided_slice %7 {offsets = [0, 10], sizes = [64, 81], strides = [1, 1]} : vector<64x384xf32> to vector<64x81xf32>
    %59 = vector.extract_strided_slice %8 {offsets = [0, 10], sizes = [64, 1], strides = [1, 1]} : vector<64x16xf32> to vector<64x1xf32>
    %60 = vector.broadcast %59 : vector<64x1xf32> to vector<64x81xf32>
    %61 = arith.mulf %58, %60 : vector<64x81xf32>
    %62 = arith.addf %57, %61 : vector<64x81xf32>
    %63 = vector.extract_strided_slice %7 {offsets = [0, 91], sizes = [64, 81], strides = [1, 1]} : vector<64x384xf32> to vector<64x81xf32>
    %64 = vector.extract_strided_slice %8 {offsets = [0, 11], sizes = [64, 1], strides = [1, 1]} : vector<64x16xf32> to vector<64x1xf32>
    %65 = vector.broadcast %64 : vector<64x1xf32> to vector<64x81xf32>
    %66 = arith.mulf %63, %65 : vector<64x81xf32>
    %67 = arith.addf %62, %66 : vector<64x81xf32>
    %68 = vector.extract_strided_slice %7 {offsets = [0, 171], sizes = [64, 81], strides = [1, 1]} : vector<64x384xf32> to vector<64x81xf32>
    %69 = vector.extract_strided_slice %8 {offsets = [0, 12], sizes = [64, 1], strides = [1, 1]} : vector<64x16xf32> to vector<64x1xf32>
    %70 = vector.broadcast %69 : vector<64x1xf32> to vector<64x81xf32>
    %71 = arith.mulf %68, %70 : vector<64x81xf32>
    %72 = arith.addf %67, %71 : vector<64x81xf32>
    %73 = vector.extract_strided_slice %7 {offsets = [0, 252], sizes = [64, 81], strides = [1, 1]} : vector<64x384xf32> to vector<64x81xf32>
    %74 = vector.extract_strided_slice %8 {offsets = [0, 13], sizes = [64, 1], strides = [1, 1]} : vector<64x16xf32> to vector<64x1xf32>
    %75 = vector.broadcast %74 : vector<64x1xf32> to vector<64x81xf32>
    %76 = arith.mulf %73, %75 : vector<64x81xf32>
    %77 = arith.addf %72, %76 : vector<64x81xf32>
    %78 = vector.extract_strided_slice %7 {offsets = [0, 172], sizes = [64, 81], strides = [1, 1]} : vector<64x384xf32> to vector<64x81xf32>
    %79 = vector.extract_strided_slice %8 {offsets = [0, 14], sizes = [64, 1], strides = [1, 1]} : vector<64x16xf32> to vector<64x1xf32>
    %80 = vector.broadcast %79 : vector<64x1xf32> to vector<64x81xf32>
    %81 = arith.mulf %78, %80 : vector<64x81xf32>
    %82 = arith.addf %77, %81 : vector<64x81xf32>
    %83 = vector.extract_strided_slice %7 {offsets = [0, 253], sizes = [64, 81], strides = [1, 1]} : vector<64x384xf32> to vector<64x81xf32>
    %84 = vector.extract_strided_slice %8 {offsets = [0, 15], sizes = [64, 1], strides = [1, 1]} : vector<64x16xf32> to vector<64x1xf32>
    %85 = vector.broadcast %84 : vector<64x1xf32> to vector<64x81xf32>
    %86 = arith.mulf %83, %85 : vector<64x81xf32>
    %87 = arith.addf %82, %86 : vector<64x81xf32>
    %88 = vector.extract_strided_slice %87 {offsets = [0, 0], sizes = [32, 81], strides = [1, 1]} : vector<64x81xf32> to vector<32x81xf32>
    %89 = vector.extract_strided_slice %87 {offsets = [32, 0], sizes = [32, 81], strides = [1, 1]} : vector<64x81xf32> to vector<32x81xf32>
    %90 = arith.addf %88, %89 : vector<32x81xf32>
    %c0_8 = arith.constant 0 : index
    %c0_9 = arith.constant 0 : index
    %91 = vector.load %arg6[%c0_8, %c0_9] : memref<32x1xf32, #tpu.memory_space<vmem>>, vector<32x1xf32>
    %92 = vector.broadcast %91 : vector<32x1xf32> to vector<32x81xf32>
    %93 = arith.addf %90, %92 : vector<32x81xf32>
    %cst_10 = arith.constant 0.000000e+00 : f32
    %94 = vector.broadcast %cst_10 : f32 to vector<32x81xf32>
    %95 = arith.maximumf %93, %94 : vector<32x81xf32>
    %96 = vector.extract_strided_slice %95 {offsets = [0, 0], sizes = [8, 81], strides = [1, 1]} : vector<32x81xf32> to vector<8x81xf32>
    %97 = vector.extract_strided_slice %95 {offsets = [8, 0], sizes = [8, 81], strides = [1, 1]} : vector<32x81xf32> to vector<8x81xf32>
    %98 = vector.extract_strided_slice %95 {offsets = [16, 0], sizes = [8, 81], strides = [1, 1]} : vector<32x81xf32> to vector<8x81xf32>
    %99 = vector.extract_strided_slice %95 {offsets = [24, 0], sizes = [8, 81], strides = [1, 1]} : vector<32x81xf32> to vector<8x81xf32>
    %c0_11 = arith.constant 0 : index
    %c0_12 = arith.constant 0 : index
    %100 = vector.load %arg2[%c0_11, %c0_12] : memref<8x5xf32, #tpu.memory_space<vmem>>, vector<8x5xf32>
    %101 = tpu.concatenate %96, %97, %98, %99, %100 in 1 : vector<8x81xf32>, vector<8x81xf32>, vector<8x81xf32>, vector<8x81xf32>, vector<8x5xf32> -> vector<8x329xf32>
    %c0_13 = arith.constant 0 : index
    %c0_14 = arith.constant 0 : index
    %102 = vector.load %arg7[%c0_13, %c0_14] : memref<329x400xf32, #tpu.memory_space<vmem>>, vector<329x400xf32>
    %cst_15 = arith.constant dense<0.000000e+00> : vector<8x400xf32>
    %103 = tpu.matmul %101, %102, %cst_15 {dimension_numbers = #tpu.dot_dimension_numbers<[1], [0], [0], [1], [0, 0, 1, 1], [], []>} : vector<8x329xf32>, vector<329x400xf32>, vector<8x400xf32> -> vector<8x400xf32>
    %c0_16 = arith.constant 0 : index
    %c0_17 = arith.constant 0 : index
    %104 = vector.load %arg8[%c0_16, %c0_17] : memref<1x400xf32, #tpu.memory_space<vmem>>, vector<1x400xf32>
    %105 = vector.broadcast %104 : vector<1x400xf32> to vector<8x400xf32>
    %106 = arith.addf %103, %105 : vector<8x400xf32>
    %cst_18 = arith.constant 0.000000e+00 : f32
    %107 = vector.broadcast %cst_18 : f32 to vector<8x400xf32>
    %108 = arith.maximumf %106, %107 : vector<8x400xf32>
    %c0_19 = arith.constant 0 : index
    %c0_20 = arith.constant 0 : index
    %109 = vector.load %arg9[%c0_19, %c0_20] : memref<400x300xf32, #tpu.memory_space<vmem>>, vector<400x300xf32>
    %cst_21 = arith.constant dense<0.000000e+00> : vector<8x300xf32>
    %110 = tpu.matmul %108, %109, %cst_21 {dimension_numbers = #tpu.dot_dimension_numbers<[1], [0], [0], [1], [0, 0, 1, 1], [], []>} : vector<8x400xf32>, vector<400x300xf32>, vector<8x300xf32> -> vector<8x300xf32>
    %c0_22 = arith.constant 0 : index
    %c0_23 = arith.constant 0 : index
    %111 = vector.load %arg10[%c0_22, %c0_23] : memref<1x300xf32, #tpu.memory_space<vmem>>, vector<1x300xf32>
    %112 = vector.broadcast %111 : vector<1x300xf32> to vector<8x300xf32>
    %113 = arith.addf %110, %112 : vector<8x300xf32>
    %cst_24 = arith.constant 0.000000e+00 : f32
    %114 = vector.broadcast %cst_24 : f32 to vector<8x300xf32>
    %115 = arith.maximumf %113, %114 : vector<8x300xf32>
    %c0_25 = arith.constant 0 : index
    %c0_26 = arith.constant 0 : index
    %116 = vector.load %arg11[%c0_25, %c0_26] : memref<1x300xf32, #tpu.memory_space<vmem>>, vector<1x300xf32>
    %117 = vector.broadcast %116 : vector<1x300xf32> to vector<8x300xf32>
    %118 = arith.mulf %115, %117 : vector<8x300xf32>
    %cst_27 = arith.constant dense<0.000000e+00> : vector<8xf32>
    %119 = vector.multi_reduction <add>, %118, %cst_27 [1] : vector<8x300xf32> to vector<8xf32>
    %120 = vector.shape_cast %119 : vector<8xf32> to vector<8x1xf32>
    %c0_28 = arith.constant 0 : index
    %c0_29 = arith.constant 0 : index
    %121 = vector.load %arg12[%c0_28, %c0_29] : memref<1x1xf32, #tpu.memory_space<vmem>>, vector<1x1xf32>
    %122 = vector.broadcast %121 : vector<1x1xf32> to vector<8x1xf32>
    %123 = arith.addf %120, %122 : vector<8x1xf32>
    %c0_30 = arith.constant 0 : index
    %c0_31 = arith.constant 0 : index
    %124 = vector.load %arg13[%c0_30, %c0_31] : memref<8x1xf32, #tpu.memory_space<vmem>>, vector<8x1xf32>
    tpu.vector_store %arg13[%c0_30, %c0_31], %123 {strides = array<i32>} : memref<8x1xf32, #tpu.memory_space<vmem>>, vector<8x1xf32>,
    return
  }
  func.func @transform_0(%arg0: i32) -> (i32, i32) {
    %c0_i32 = arith.constant 0 : i32
    %c0_i32_0 = arith.constant 0 : i32
    return %arg0, %c0_i32 : i32, i32
  }
  func.func @transform_1(%arg0: i32) -> (i32, i32) {
    %c0_i32 = arith.constant 0 : i32
    %c0_i32_0 = arith.constant 0 : i32
    return %arg0, %c0_i32 : i32, i32
  }
  func.func @transform_2(%arg0: i32) -> (i32, i32) {
    %c0_i32 = arith.constant 0 : i32
    %c0_i32_0 = arith.constant 0 : i32
    %c0_i32_1 = arith.constant 0 : i32
    return %c0_i32, %c0_i32_0 : i32, i32
  }
  func.func @transform_3(%arg0: i32) -> (i32, i32) {
    %c0_i32 = arith.constant 0 : i32
    %c0_i32_0 = arith.constant 0 : i32
    %c0_i32_1 = arith.constant 0 : i32
    return %c0_i32, %c0_i32_0 : i32, i32
  }
  func.func @transform_4(%arg0: i32) -> (i32, i32) {
    %c0_i32 = arith.constant 0 : i32
    %c0_i32_0 = arith.constant 0 : i32
    %c0_i32_1 = arith.constant 0 : i32
    return %c0_i32, %c0_i32_0 : i32, i32
  }
  func.func @transform_5(%arg0: i32) -> (i32, i32) {
    %c0_i32 = arith.constant 0 : i32
    %c0_i32_0 = arith.constant 0 : i32
    %c0_i32_1 = arith.constant 0 : i32
    return %c0_i32, %c0_i32_0 : i32, i32
  }
  func.func @transform_6(%arg0: i32) -> (i32, i32) {
    %c0_i32 = arith.constant 0 : i32
    %c0_i32_0 = arith.constant 0 : i32
    %c0_i32_1 = arith.constant 0 : i32
    return %c0_i32, %c0_i32_0 : i32, i32
  }
  func.func @transform_7(%arg0: i32) -> (i32, i32) {
    %c0_i32 = arith.constant 0 : i32
    %c0_i32_0 = arith.constant 0 : i32
    %c0_i32_1 = arith.constant 0 : i32
    return %c0_i32, %c0_i32_0 : i32, i32
  }
  func.func @transform_8(%arg0: i32) -> (i32, i32) {
    %c0_i32 = arith.constant 0 : i32
    %c0_i32_0 = arith.constant 0 : i32
    %c0_i32_1 = arith.constant 0 : i32
    return %c0_i32, %c0_i32_0 : i32, i32
  }
  func.func @transform_9(%arg0: i32) -> (i32, i32) {
    %c0_i32 = arith.constant 0 : i32
    %c0_i32_0 = arith.constant 0 : i32
    %c0_i32_1 = arith.constant 0 : i32
    return %c0_i32, %c0_i32_0 : i32, i32
  }
  func.func @transform_10(%arg0: i32) -> (i32, i32) {
    %c0_i32 = arith.constant 0 : i32
    %c0_i32_0 = arith.constant 0 : i32
    %c0_i32_1 = arith.constant 0 : i32
    return %c0_i32, %c0_i32_0 : i32, i32
  }
  func.func @transform_11(%arg0: i32) -> (i32, i32) {
    %c0_i32 = arith.constant 0 : i32
    %c0_i32_0 = arith.constant 0 : i32
    %c0_i32_1 = arith.constant 0 : i32
    return %c0_i32, %c0_i32_0 : i32, i32
  }
  func.func @transform_12(%arg0: i32) -> (i32, i32) {
    %c0_i32 = arith.constant 0 : i32
    %c0_i32_0 = arith.constant 0 : i32
    return %arg0, %c0_i32 : i32, i32
  }
}

</mosaic_0001>

<llo_original>
// kernel: critic_forward.1
$region0: #{critic_forward.1}
  #allocation0 [shape = 'u32[]', space=smem, size = 0x4, offset = 0x4, fixed_abs, tag = 'smem constant byte address 0x4 - core index']
  #allocation1 [shape = 'u32[144,128]{1,0:T(1,128)}', space=vmem, size = 0x12000, scoped, tag = 'internal scratch']
  #allocation2 [shape = 'f32[1,1]{1,0:T(1,128)S(1)}', space=vmem, size = 0x200, scoped, tag = 'scoped memory for critic_forward.1']
  %s0 = inlined_call_operand.vmem [shape: f32[3072,384], index: 0, kind: input, shape index: {}]
  %s1 = inlined_call_operand.vmem [shape: f32[16,5], index: 1, kind: input, shape index: {}]
  %s2 = inlined_call_operand.vmem [shape: f32[64,1536], index: 2, kind: input, shape index: {}]
  %s3 = inlined_call_operand.vmem [shape: f32[64,1], index: 3, kind: input, shape index: {}]
  %s4 = inlined_call_operand.vmem [shape: f32[64,16], index: 4, kind: input, shape index: {}]
  %s5 = inlined_call_operand.vmem [shape: f32[32,1], index: 5, kind: input, shape index: {}]
  %s6 = inlined_call_operand.vmem [shape: f32[329,400], index: 6, kind: input, shape index: {}]
  %s7 = inlined_call_operand.vmem [shape: f32[1,400], index: 7, kind: input, shape index: {}]
  %s8 = inlined_call_operand.vmem [shape: f32[400,300], index: 8, kind: input, shape index: {}]
  %s9 = inlined_call_operand.vmem [shape: f32[1,300], index: 9, kind: input, shape index: {}]
  %s10 = inlined_call_operand.vmem [shape: f32[1,300], index: 10, kind: input, shape index: {}]
  %s11 = inlined_call_operand.<no memory space> [shape: f32[1,1], index: 11, kind: input, shape index: {}]
  %s12 = inlined_call_operand.vmem [shape: f32[16,1], index: 12, kind: output, shape index: {}]
  %s13 = sld [smem:[#allocation0]]
  $region81: #{critic_forward.1} parent=0
    _
  %s15 = ssub.s32 1, %s13
  %s16 = scalar_select 0, %s15, %s13
  %v17 = vstv %s11
  %18 = vst [vmem:[#allocation2] sm:$0x1] %v17
  loop: start=0, step=1, limit=4
  $region2: #{critic_forward.1} parent=0 // loop_pre_header
    _
  $region3: #{critic_forward.1} parent=0 // loop_header
    %s20 = sphi 0, %s24
    %p21 = scmp.ge.s32.totalorder %s20, 4
    %s30 = sphi 0, %s32
    %s33 = sphi 0, %s30
    %s34 = sphi 0, %s33
    %s50 = sphi 0, %s34
    %s56 = sphi 0, %s58
    %s59 = sphi 0, %s56
    %s60 = sphi 0, %s59
    %s76 = sphi 0, %s60
    %s80 = sphi 0, %s80
    %s82 = sphi 0, %s80
    %s83 = sphi 0, %s82
    %s97 = sphi 0, %s83
    %s101 = sphi 0, %s101
    %s103 = sphi 0, %s101
    %s104 = sphi 0, %s103
    %s118 = sphi 0, %s104
    %s122 = sphi 0, %s122
    %s124 = sphi 0, %s122
    %s125 = sphi 0, %s124
    %s139 = sphi 0, %s125
    %s143 = sphi 0, %s143
    %s145 = sphi 0, %s143
    %s146 = sphi 0, %s145
    %s160 = sphi 0, %s146
    %s164 = sphi 0, %s164
    %s166 = sphi 0, %s164
    %s167 = sphi 0, %s166
    %s181 = sphi 0, %s167
    %s185 = sphi 0, %s185
    %s187 = sphi 0, %s185
    %s188 = sphi 0, %s187
    %s202 = sphi 0, %s188
    %s206 = sphi 0, %s206
    %s208 = sphi 0, %s206
    %s209 = sphi 0, %s208
    %s223 = sphi 0, %s209
    %s227 = sphi 0, %s227
    %s229 = sphi 0, %s227
    %s230 = sphi 0, %s229
    %s244 = sphi 0, %s230
    %s248 = sphi 0, %s248
    %s250 = sphi 0, %s248
    %s251 = sphi 0, %s250
    %s265 = sphi 0, %s251
    %s269 = sphi 0, %s269
    %s271 = sphi 0, %s269
    %s272 = sphi 0, %s271
    %s286 = sphi 0, %s272
    %s292 = sphi 0, %s294
    %s295 = sphi 0, %s292
    %s296 = sphi 0, %s295
    %s312 = sphi 0, %s296
  $region4: #{critic_forward.1} parent=0 // loop_header_branch
    %23 = sbr.rel (%p21) target = $region8
  $region5: #{critic_forward.1} parent=0 // loop_body
    %s25 = ssub.s32 %s20, 1
    %s26 = ssub.s32 %s20, 2
    %s27 = sadd.s32 %s20, 1
    %s28 = ssub.s32 %s20, %s27
    %p29 = scmp.eq.s32.totalorder %s28, 0
    %s31 = sadd.s32 %s30, 1
    %s32 = scalar_select %p29, %s30, %s31
    %p35 = pneg %p29
    %p36 = scmp.eq.s32.totalorder %s20, 1
    %p37 = por %p35, %p36
    %p38 = scmp.ne.s32.totalorder %s30, %s33
    %p39 = scmp.eq.s32.totalorder %s20, 0
    %p40 = por %p38, %p39
    %p41 = scmp.ne.s32.totalorder %s30, %s33
    %p42 = scmp.eq.s32.totalorder %s25, 1
    %p43 = por %p41, %p42
    %p44 = scmp.ne.s32.totalorder %s33, %s34
    %p45 = scmp.eq.s32.totalorder %s25, 0
    %p46 = por %p44, %p45
    %p47 = scmp.ne.s32.totalorder %s33, %s34
    %p48 = scmp.eq.s32.totalorder %s26, 1
    %p49 = por %p47, %p48
    %p51 = scmp.ne.s32.totalorder %s34, %s50
    %p52 = scmp.eq.s32.totalorder %s26, 0
    %p53 = por %p51, %p52
    %s54 = ssub.s32 %s20, %s27
    %p55 = scmp.eq.s32.totalorder %s54, 0
    %s57 = sadd.s32 %s56, 1
    %s58 = scalar_select %p55, %s56, %s57
    %p61 = pneg %p55
    %p62 = scmp.eq.s32.totalorder %s20, 1
    %p63 = por %p61, %p62
    %p64 = scmp.ne.s32.totalorder %s56, %s59
    %p65 = scmp.eq.s32.totalorder %s20, 0
    %p66 = por %p64, %p65
    %p67 = scmp.ne.s32.totalorder %s56, %s59
    %p68 = scmp.eq.s32.totalorder %s25, 1
    %p69 = por %p67, %p68
    %p70 = scmp.ne.s32.totalorder %s59, %s60
    %p71 = scmp.eq.s32.totalorder %s25, 0
    %p72 = por %p70, %p71
    %p73 = scmp.ne.s32.totalorder %s59, %s60
    %p74 = scmp.eq.s32.totalorder %s26, 1
    %p75 = por %p73, %p74
    %p77 = scmp.ne.s32.totalorder %s60, %s76
    %p78 = scmp.eq.s32.totalorder %s26, 0
    %p79 = por %p77, %p78
    %s81 = sadd.s32 %s80, 1
    %p84 = scmp.eq.s32.totalorder %s20, 1
    %p85 = scmp.ne.s32.totalorder %s80, %s82
    %p86 = scmp.eq.s32.totalorder %s20, 0
    %p87 = por %p85, %p86
    %p88 = scmp.ne.s32.totalorder %s80, %s82
    %p89 = scmp.eq.s32.totalorder %s25, 1
    %p90 = por %p88, %p89
    %p91 = scmp.ne.s32.totalorder %s82, %s83
    %p92 = scmp.eq.s32.totalorder %s25, 0
    %p93 = por %p91, %p92
    %p94 = scmp.ne.s32.totalorder %s82, %s83
    %p95 = scmp.eq.s32.totalorder %s26, 1
    %p96 = por %p94, %p95
    %p98 = scmp.ne.s32.totalorder %s83, %s97
    %p99 = scmp.eq.s32.totalorder %s26, 0
    %p100 = por %p98, %p99
    %s102 = sadd.s32 %s101, 1
    %p105 = scmp.eq.s32.totalorder %s20, 1
    %p106 = scmp.ne.s32.totalorder %s101, %s103
    %p107 = scmp.eq.s32.totalorder %s20, 0
    %p108 = por %p106, %p107
    %p109 = scmp.ne.s32.totalorder %s101, %s103
    %p110 = scmp.eq.s32.totalorder %s25, 1
    %p111 = por %p109, %p110
    %p112 = scmp.ne.s32.totalorder %s103, %s104
    %p113 = scmp.eq.s32.totalorder %s25, 0
    %p114 = por %p112, %p113
    %p115 = scmp.ne.s32.totalorder %s103, %s104
    %p116 = scmp.eq.s32.totalorder %s26, 1
    %p117 = por %p115, %p116
    %p119 = scmp.ne.s32.totalorder %s104, %s118
    %p120 = scmp.eq.s32.totalorder %s26, 0
    %p121 = por %p119, %p120
    %s123 = sadd.s32 %s122, 1
    %p126 = scmp.eq.s32.totalorder %s20, 1
    %p127 = scmp.ne.s32.totalorder %s122, %s124
    %p128 = scmp.eq.s32.totalorder %s20, 0
    %p129 = por %p127, %p128
    %p130 = scmp.ne.s32.totalorder %s122, %s124
    %p131 = scmp.eq.s32.totalorder %s25, 1
    %p132 = por %p130, %p131
    %p133 = scmp.ne.s32.totalorder %s124, %s125
    %p134 = scmp.eq.s32.totalorder %s25, 0
    %p135 = por %p133, %p134
    %p136 = scmp.ne.s32.totalorder %s124, %s125
    %p137 = scmp.eq.s32.totalorder %s26, 1
    %p138 = por %p136, %p137
    %p140 = scmp.ne.s32.totalorder %s125, %s139
    %p141 = scmp.eq.s32.totalorder %s26, 0
    %p142 = por %p140, %p141
    %s144 = sadd.s32 %s143, 1
    %p147 = scmp.eq.s32.totalorder %s20, 1
    %p148 = scmp.ne.s32.totalorder %s143, %s145
    %p149 = scmp.eq.s32.totalorder %s20, 0
    %p150 = por %p148, %p149
    %p151 = scmp.ne.s32.totalorder %s143, %s145
    %p152 = scmp.eq.s32.totalorder %s25, 1
    %p153 = por %p151, %p152
    %p154 = scmp.ne.s32.totalorder %s145, %s146
    %p155 = scmp.eq.s32.totalorder %s25, 0
    %p156 = por %p154, %p155
    %p157 = scmp.ne.s32.totalorder %s145, %s146
    %p158 = scmp.eq.s32.totalorder %s26, 1
    %p159 = por %p157, %p158
    %p161 = scmp.ne.s32.totalorder %s146, %s160
    %p162 = scmp.eq.s32.totalorder %s26, 0
    %p163 = por %p161, %p162
    %s165 = sadd.s32 %s164, 1
    %p168 = scmp.eq.s32.totalorder %s20, 1
    %p169 = scmp.ne.s32.totalorder %s164, %s166
    %p170 = scmp.eq.s32.totalorder %s20, 0
    %p171 = por %p169, %p170
    %p172 = scmp.ne.s32.totalorder %s164, %s166
    %p173 = scmp.eq.s32.totalorder %s25, 1
    %p174 = por %p172, %p173
    %p175 = scmp.ne.s32.totalorder %s166, %s167
    %p176 = scmp.eq.s32.totalorder %s25, 0
    %p177 = por %p175, %p176
    %p178 = scmp.ne.s32.totalorder %s166, %s167
    %p179 = scmp.eq.s32.totalorder %s26, 1
    %p180 = por %p178, %p179
    %p182 = scmp.ne.s32.totalorder %s167, %s181
    %p183 = scmp.eq.s32.totalorder %s26, 0
    %p184 = por %p182, %p183
    %s186 = sadd.s32 %s185, 1
    %p189 = scmp.eq.s32.totalorder %s20, 1
    %p190 = scmp.ne.s32.totalorder %s185, %s187
    %p191 = scmp.eq.s32.totalorder %s20, 0
    %p192 = por %p190, %p191
    %p193 = scmp.ne.s32.totalorder %s185, %s187
    %p194 = scmp.eq.s32.totalorder %s25, 1
    %p195 = por %p193, %p194
    %p196 = scmp.ne.s32.totalorder %s187, %s188
    %p197 = scmp.eq.s32.totalorder %s25, 0
    %p198 = por %p196, %p197
    %p199 = scmp.ne.s32.totalorder %s187, %s188
    %p200 = scmp.eq.s32.totalorder %s26, 1
    %p201 = por %p199, %p200
    %p203 = scmp.ne.s32.totalorder %s188, %s202
    %p204 = scmp.eq.s32.totalorder %s26, 0
    %p205 = por %p203, %p204
    %s207 = sadd.s32 %s206, 1
    %p210 = scmp.eq.s32.totalorder %s20, 1
    %p211 = scmp.ne.s32.totalorder %s206, %s208
    %p212 = scmp.eq.s32.totalorder %s20, 0
    %p213 = por %p211, %p212
    %p214 = scmp.ne.s32.totalorder %s206, %s208
    %p215 = scmp.eq.s32.totalorder %s25, 1
    %p216 = por %p214, %p215
    %p217 = scmp.ne.s32.totalorder %s208, %s209
    %p218 = scmp.eq.s32.totalorder %s25, 0
    %p219 = por %p217, %p218
    %p220 = scmp.ne.s32.totalorder %s208, %s209
    %p221 = scmp.eq.s32.totalorder %s26, 1
    %p222 = por %p220, %p221
    %p224 = scmp.ne.s32.totalorder %s209, %s223
    %p225 = scmp.eq.s32.totalorder %s26, 0
    %p226 = por %p224, %p225
    %s228 = sadd.s32 %s227, 1
    %p231 = scmp.eq.s32.totalorder %s20, 1
    %p232 = scmp.ne.s32.totalorder %s227, %s229
    %p233 = scmp.eq.s32.totalorder %s20, 0
    %p234 = por %p232, %p233
    %p235 = scmp.ne.s32.totalorder %s227, %s229
    %p236 = scmp.eq.s32.totalorder %s25, 1
    %p237 = por %p235, %p236
    %p238 = scmp.ne.s32.totalorder %s229, %s230
    %p239 = scmp.eq.s32.totalorder %s25, 0
    %p240 = por %p238, %p239
    %p241 = scmp.ne.s32.totalorder %s229, %s230
    %p242 = scmp.eq.s32.totalorder %s26, 1
    %p243 = por %p241, %p242
    %p245 = scmp.ne.s32.totalorder %s230, %s244
    %p246 = scmp.eq.s32.totalorder %s26, 0
    %p247 = por %p245, %p246
    %s249 = sadd.s32 %s248, 1
    %p252 = scmp.eq.s32.totalorder %s20, 1
    %p253 = scmp.ne.s32.totalorder %s248, %s250
    %p254 = scmp.eq.s32.totalorder %s20, 0
    %p255 = por %p253, %p254
    %p256 = scmp.ne.s32.totalorder %s248, %s250
    %p257 = scmp.eq.s32.totalorder %s25, 1
    %p258 = por %p256, %p257
    %p259 = scmp.ne.s32.totalorder %s250, %s251
    %p260 = scmp.eq.s32.totalorder %s25, 0
    %p261 = por %p259, %p260
    %p262 = scmp.ne.s32.totalorder %s250, %s251
    %p263 = scmp.eq.s32.totalorder %s26, 1
    %p264 = por %p262, %p263
    %p266 = scmp.ne.s32.totalorder %s251, %s265
    %p267 = scmp.eq.s32.totalorder %s26, 0
    %p268 = por %p266, %p267
    %s270 = sadd.s32 %s269, 1
    %p273 = scmp.eq.s32.totalorder %s20, 1
    %p274 = scmp.ne.s32.totalorder %s269, %s271
    %p275 = scmp.eq.s32.totalorder %s20, 0
    %p276 = por %p274, %p275
    %p277 = scmp.ne.s32.totalorder %s269, %s271
    %p278 = scmp.eq.s32.totalorder %s25, 1
    %p279 = por %p277, %p278
    %p280 = scmp.ne.s32.totalorder %s271, %s272
    %p281 = scmp.eq.s32.totalorder %s25, 0
    %p282 = por %p280, %p281
    %p283 = scmp.ne.s32.totalorder %s271, %s272
    %p284 = scmp.eq.s32.totalorder %s26, 1
    %p285 = por %p283, %p284
    %p287 = scmp.ne.s32.totalorder %s272, %s286
    %p288 = scmp.eq.s32.totalorder %s26, 0
    %p289 = por %p287, %p288
    %s290 = ssub.s32 %s20, %s27
    %p291 = scmp.eq.s32.totalorder %s290, 0
    %s293 = sadd.s32 %s292, 1
    %s294 = scalar_select %p291, %s292, %s293
    %p297 = pneg %p291
    %p298 = scmp.eq.s32.totalorder %s20, 1
    %p299 = por %p297, %p298
    %p300 = scmp.ne.s32.totalorder %s292, %s295
    %p301 = scmp.eq.s32.totalorder %s20, 0
    %p302 = por %p300, %p301
    %p303 = scmp.ne.s32.totalorder %s292, %s295
    %p304 = scmp.eq.s32.totalorder %s25, 1
    %p305 = por %p303, %p304
    %p306 = scmp.ne.s32.totalorder %s295, %s296
    %p307 = scmp.eq.s32.totalorder %s25, 0
    %p308 = por %p306, %p307
    %p309 = scmp.ne.s32.totalorder %s295, %s296
    %p310 = scmp.eq.s32.totalorder %s26, 1
    %p311 = por %p309, %p310
    %p313 = scmp.ne.s32.totalorder %s296, %s312
    %p314 = scmp.eq.s32.totalorder %s26, 0
    %p315 = por %p313, %p314
    %p316 = scmp.le.s32.totalorder 1, %s20
    %p317 = scmp.lt.s32.totalorder %s20, 3
    %p318 = pnand %p316, %p317
    %p319 = pneg %p318
    // Predicated region
    $region9: #{critic_forward.1} parent=5 // pred_check
      _
    $region10: #{critic_forward.1} parent=5 // pred_check_branch
      %321 = sbr.rel (%p318) target = $region12
    $region11: #{critic_forward.1} parent=5 // pred_region
      %s322 = ssub.s32 %s20, 1
      // Predicated region
      $region13: #{critic_forward.1} parent=11 // pred_check
        %p323 = pneg %p93
      $region14: #{critic_forward.1} parent=11 // pred_check_branch
        %325 = sbr.rel (%p323) target = $region16
      $region15: #{critic_forward.1} parent=11 // pred_region
        _
      $region16: #{critic_forward.1} parent=11 // pred_fallthru
        _
      // Predicated region
      $region17: #{critic_forward.1} parent=11 // pred_check
        %p326 = pneg %p114
      $region18: #{critic_forward.1} parent=11 // pred_check_branch
        %328 = sbr.rel (%p326) target = $region20
      $region19: #{critic_forward.1} parent=11 // pred_region
        _
      $region20: #{critic_forward.1} parent=11 // pred_fallthru
        _
      // Predicated region
      $region21: #{critic_forward.1} parent=11 // pred_check
        %p329 = pneg %p135
      $region22: #{critic_forward.1} parent=11 // pred_check_branch
        %331 = sbr.rel (%p329) target = $region24
      $region23: #{critic_forward.1} parent=11 // pred_region
        _
      $region24: #{critic_forward.1} parent=11 // pred_fallthru
        _
      // Predicated region
      $region25: #{critic_forward.1} parent=11 // pred_check
        %p332 = pneg %p156
      $region26: #{critic_forward.1} parent=11 // pred_check_branch
        %334 = sbr.rel (%p332) target = $region28
      $region27: #{critic_forward.1} parent=11 // pred_region
        _
      $region28: #{critic_forward.1} parent=11 // pred_fallthru
        _
      // Predicated region
      $region29: #{critic_forward.1} parent=11 // pred_check
        %p335 = pneg %p177
      $region30: #{critic_forward.1} parent=11 // pred_check_branch
        %337 = sbr.rel (%p335) target = $region32
      $region31: #{critic_forward.1} parent=11 // pred_region
        _
      $region32: #{critic_forward.1} parent=11 // pred_fallthru
        _
      // Predicated region
      $region33: #{critic_forward.1} parent=11 // pred_check
        %p338 = pneg %p198
      $region34: #{critic_forward.1} parent=11 // pred_check_branch
        %340 = sbr.rel (%p338) target = $region36
      $region35: #{critic_forward.1} parent=11 // pred_region
        _
      $region36: #{critic_forward.1} parent=11 // pred_fallthru
        _
      // Predicated region
      $region37: #{critic_forward.1} parent=11 // pred_check
        %p341 = pneg %p219
      $region38: #{critic_forward.1} parent=11 // pred_check_branch
        %343 = sbr.rel (%p341) target = $region40
      $region39: #{critic_forward.1} parent=11 // pred_region
        _
      $region40: #{critic_forward.1} parent=11 // pred_fallthru
        _
      // Predicated region
      $region41: #{critic_forward.1} parent=11 // pred_check
        %p344 = pneg %p240
      $region42: #{critic_forward.1} parent=11 // pred_check_branch
        %346 = sbr.rel (%p344) target = $region44
      $region43: #{critic_forward.1} parent=11 // pred_region
        _
      $region44: #{critic_forward.1} parent=11 // pred_fallthru
        _
      // Predicated region
      $region45: #{critic_forward.1} parent=11 // pred_check
        %p347 = pneg %p261
      $region46: #{critic_forward.1} parent=11 // pred_check_branch
        %349 = sbr.rel (%p347) target = $region48
      $region47: #{critic_forward.1} parent=11 // pred_region
        _
      $region48: #{critic_forward.1} parent=11 // pred_fallthru
        _
      // Predicated region
      $region49: #{critic_forward.1} parent=11 // pred_check
        %p350 = pneg %p282
      $region50: #{critic_forward.1} parent=11 // pred_check_branch
        %352 = sbr.rel (%p350) target = $region52
      $region51: #{critic_forward.1} parent=11 // pred_region
        _
      $region52: #{critic_forward.1} parent=11 // pred_fallthru
        _
    $region12: #{critic_forward.1} parent=5 // pred_fallthru
      _
    %p353 = scmp.lt.s32.totalorder %s20, 2
    // Predicated region
    $region53: #{critic_forward.1} parent=5 // pred_check
      %p354 = pneg %p353
    $region54: #{critic_forward.1} parent=5 // pred_check_branch
      %356 = sbr.rel (%p354) target = $region56
    $region55: #{critic_forward.1} parent=5 // pred_region
      // Predicated region
      $region57: #{critic_forward.1} parent=55 // pred_check
        %p357 = pneg %p40
      $region58: #{critic_forward.1} parent=55 // pred_check_branch
        %359 = sbr.rel (%p357) target = $region60
      $region59: #{critic_forward.1} parent=55 // pred_region
        %s360 = smul.u32 192, %s20
        %p361 = scmp.lt.s32.totalorder %s360, 383
        %s362 = scalar_select %p361, %s360, 383
        %s363 = smul.addr %s362, 3
        %s364 = smul.addr %s363, 8
        %s365 = scalar_lea.vmem %s0, %s364
        %s366 = smul.u32 192, %s20
      $region60: #{critic_forward.1} parent=55 // pred_fallthru
        _
      // Predicated region
      $region61: #{critic_forward.1} parent=55 // pred_check
        %p367 = pneg %p66
      $region62: #{critic_forward.1} parent=55 // pred_check_branch
        %369 = sbr.rel (%p367) target = $region64
      $region63: #{critic_forward.1} parent=55 // pred_region
        %p370 = scmp.lt.s32.totalorder %s20, 1
        %s371 = scalar_select %p370, %s20, 1
        %s372 = smul.addr %s371, 8
        %s373 = scalar_lea.vmem %s1, %s372
      $region64: #{critic_forward.1} parent=55 // pred_fallthru
        _
    $region56: #{critic_forward.1} parent=5 // pred_fallthru
      _
    %p374 = scmp.le.s32.totalorder 1, %s20
    %p375 = scmp.lt.s32.totalorder %s20, 3
    %p376 = pnand %p374, %p375
    %p377 = pneg %p376
    // Predicated region
    $region65: #{critic_forward.1} parent=5 // pred_check
      _
    $region66: #{critic_forward.1} parent=5 // pred_check_branch
      %379 = sbr.rel (%p376) target = $region68
    $region67: #{critic_forward.1} parent=5 // pred_region
      %s380 = ssub.s32 %s20, 1
      %s381 = smul.u32 192, %s25
      %p382 = scmp.lt.s32.totalorder %s381, 383
      %s383 = scalar_select %p382, %s381, 383
      %s384 = smul.addr %s383, 3
      %s385 = smul.addr %s384, 8
      %s386 = scalar_lea.vmem %s0, %s385
      %p387 = pneg %p46
      %p388 = pneg %p43
      %p389 = scmp.lt.s32.totalorder %s25, 1
      %s390 = scalar_select %p389, %s25, 1
      %s391 = smul.addr %s390, 8
      %s392 = scalar_lea.vmem %s1, %s391
      %p393 = pneg %p72
      %p394 = pneg %p69
      %p395 = pneg %p93
      %p396 = pneg %p90
      %p397 = pneg %p114
      %p398 = pneg %p111
      %p399 = pneg %p135
      %p400 = pneg %p132
      %p401 = pneg %p156
      %p402 = pneg %p153
      %p403 = pneg %p177
      %p404 = pneg %p174
      %p405 = pneg %p198
      %p406 = pneg %p195
      %p407 = pneg %p219
      %p408 = pneg %p216
      %p409 = pneg %p240
      %p410 = pneg %p237
      %p411 = pneg %p261
      %p412 = pneg %p258
      %p413 = pneg %p282
      %p414 = pneg %p279
      %p415 = pneg %p308
      %p416 = pneg %p305
      %p417 = scmp.lt.s32.totalorder %s25, 1
      %s418 = scalar_select %p417, %s25, 1
      %s419 = smul.addr %s418, 8
      %s420 = scalar_lea.vmem %s12, %s419
      %s421 = smul.u32 192, %s25
      %p422 = scmp.lt.s32.totalorder %s421, 383
      %s423 = scalar_select %p422, %s421, 383
      %s424 = smul.addr %s423, 3
      %s425 = smul.addr %s424, 8
      %s426 = scalar_lea.vmem %s0, %s425
      %s427 = smul.u32 192, %s25
      %p428 = scmp.lt.s32.totalorder %s25, 1
      %s429 = scalar_select %p428, %s25, 1
      %s430 = smul.addr %s429, 8
      %s431 = scalar_lea.vmem %s1, %s430
      %p432 = scmp.lt.s32.totalorder %s25, 1
      %s433 = scalar_select %p432, %s25, 1
      %s434 = smul.addr %s433, 8
      %s435 = scalar_lea.vmem %s12, %s434
      %v436 = vld [vmem:[%s2] sm:$0xff]
      %v437 = vld [vmem:[%s2 + $0x8] sm:$0xff]
      %v438 = vld [vmem:[%s2 + $0x10] sm:$0xff]
      %v439 = vld [vmem:[%s2 + $0x18] sm:$0xff]
      %v440 = vld [vmem:[%s2 + $0x20] sm:$0xff]
      %v441 = vld [vmem:[%s2 + $0x28] sm:$0xff]
      %v442 = vld [vmem:[%s2 + $0x30] sm:$0xff]
      %v443 = vld [vmem:[%s2 + $0x38] sm:$0xff]
      %v444 = vld [vmem:[%s2 + $0x40] sm:$0xff]
      %v445 = vld [vmem:[%s2 + $0x48] sm:$0xff]
      %v446 = vld [vmem:[%s2 + $0x50] sm:$0xff]
      %v447 = vld [vmem:[%s2 + $0x58] sm:$0xff]
      %v448 = vld [vmem:[%s2 + $0x60] sm:$0xff]
      %v449 = vld [vmem:[%s2 + $0x68] sm:$0xff]
      %v450 = vld [vmem:[%s2 + $0x70] sm:$0xff]
      %v451 = vld [vmem:[%s2 + $0x78] sm:$0xff]
      %v452 = vld [vmem:[%s2 + $0x80] sm:$0xff]
      %v453 = vld [vmem:[%s2 + $0x88] sm:$0xff]
      %v454 = vld [vmem:[%s2 + $0x90] sm:$0xff]
      %v455 = vld [vmem:[%s2 + $0x98] sm:$0xff]
      %v456 = vld [vmem:[%s2 + $0xa0] sm:$0xff]
      %v457 = vld [vmem:[%s2 + $0xa8] sm:$0xff]
      %v458 = vld [vmem:[%s2 + $0xb0] sm:$0xff]
      %v459 = vld [vmem:[%s2 + $0xb8] sm:$0xff]
      %v460 = vld [vmem:[%s2 + $0xc0] sm:$0xff]
      %v461 = vld [vmem:[%s2 + $0xc8] sm:$0xff]
      %v462 = vld [vmem:[%s2 + $0xd0] sm:$0xff]
      %v463 = vld [vmem:[%s2 + $0xd8] sm:$0xff]
      %v464 = vld [vmem:[%s2 + $0xe0] sm:$0xff]
      %v465 = vld [vmem:[%s2 + $0xe8] sm:$0xff]
      %v466 = vld [vmem:[%s2 + $0xf0] sm:$0xff]
      %v467 = vld [vmem:[%s2 + $0xf8] sm:$0xff]
      %v468 = vld [vmem:[%s2 + $0x100] sm:$0xff]
      %v469 = vld [vmem:[%s2 + $0x108] sm:$0xff]
      %v470 = vld [vmem:[%s2 + $0x110] sm:$0xff]
      %v471 = vld [vmem:[%s2 + $0x118] sm:$0xff]
      %v472 = vld [vmem:[%s2 + $0x120] sm:$0xff]
      %v473 = vld [vmem:[%s2 + $0x128] sm:$0xff]
      %v474 = vld [vmem:[%s2 + $0x130] sm:$0xff]
      %v475 = vld [vmem:[%s2 + $0x138] sm:$0xff]
      %v476 = vld [vmem:[%s2 + $0x140] sm:$0xff]
      %v477 = vld [vmem:[%s2 + $0x148] sm:$0xff]
      %v478 = vld [vmem:[%s2 + $0x150] sm:$0xff]
      %v479 = vld [vmem:[%s2 + $0x158] sm:$0xff]
      %v480 = vld [vmem:[%s2 + $0x160] sm:$0xff]
      %v481 = vld [vmem:[%s2 + $0x168] sm:$0xff]
      %v482 = vld [vmem:[%s2 + $0x170] sm:$0xff]
      %v483 = vld [vmem:[%s2 + $0x178] sm:$0xff]
      %v484 = vld [vmem:[%s2 + $0x180] sm:$0xff]
      %v485 = vld [vmem:[%s2 + $0x188] sm:$0xff]
      %v486 = vld [vmem:[%s2 + $0x190] sm:$0xff]
      %v487 = vld [vmem:[%s2 + $0x198] sm:$0xff]
      %v488 = vld [vmem:[%s2 + $0x1a0] sm:$0xff]
      %v489 = vld [vmem:[%s2 + $0x1a8] sm:$0xff]
      %v490 = vld [vmem:[%s2 + $0x1b0] sm:$0xff]
      %v491 = vld [vmem:[%s2 + $0x1b8] sm:$0xff]
      %v492 = vld [vmem:[%s2 + $0x1c0] sm:$0xff]
      %v493 = vld [vmem:[%s2 + $0x1c8] sm:$0xff]
      %v494 = vld [vmem:[%s2 + $0x1d0] sm:$0xff]
      %v495 = vld [vmem:[%s2 + $0x1d8] sm:$0xff]
      %v496 = vld [vmem:[%s2 + $0x1e0] sm:$0xff]
      %v497 = vld [vmem:[%s2 + $0x1e8] sm:$0xff]
      %v498 = vld [vmem:[%s2 + $0x1f0] sm:$0xff]
      %v499 = vld [vmem:[%s2 + $0x1f8] sm:$0xff]
      %v500 = vld [vmem:[%s2 + $0x200] sm:$0xff]
      %v501 = vld [vmem:[%s2 + $0x208] sm:$0xff]
      %v502 = vld [vmem:[%s2 + $0x210] sm:$0xff]
      %v503 = vld [vmem:[%s2 + $0x218] sm:$0xff]
      %v504 = vld [vmem:[%s2 + $0x220] sm:$0xff]
      %v505 = vld [vmem:[%s2 + $0x228] sm:$0xff]
      %v506 = vld [vmem:[%s2 + $0x230] sm:$0xff]
      %v507 = vld [vmem:[%s2 + $0x238] sm:$0xff]
      %v508 = vld [vmem:[%s2 + $0x240] sm:$0xff]
      %v509 = vld [vmem:[%s2 + $0x248] sm:$0xff]
      %v510 = vld [vmem:[%s2 + $0x250] sm:$0xff]
      %v511 = vld [vmem:[%s2 + $0x258] sm:$0xff]
      %v512 = vld [vmem:[%s2 + $0x260] sm:$0xff]
      %v513 = vld [vmem:[%s2 + $0x268] sm:$0xff]
      %v514 = vld [vmem:[%s2 + $0x270] sm:$0xff]
      %v515 = vld [vmem:[%s2 + $0x278] sm:$0xff]
      %v516 = vld [vmem:[%s2 + $0x280] sm:$0xff]
      %v517 = vld [vmem:[%s2 + $0x288] sm:$0xff]
      %v518 = vld [vmem:[%s2 + $0x290] sm:$0xff]
      %v519 = vld [vmem:[%s2 + $0x298] sm:$0xff]
      %v520 = vld [vmem:[%s2 + $0x2a0] sm:$0xff]
      %v521 = vld [vmem:[%s2 + $0x2a8] sm:$0xff]
      %v522 = vld [vmem:[%s2 + $0x2b0] sm:$0xff]
      %v523 = vld [vmem:[%s2 + $0x2b8] sm:$0xff]
      %v524 = vld [vmem:[%s2 + $0x2c0] sm:$0xff]
      %v525 = vld [vmem:[%s2 + $0x2c8] sm:$0xff]
      %v526 = vld [vmem:[%s2 + $0x2d0] sm:$0xff]
      %v527 = vld [vmem:[%s2 + $0x2d8] sm:$0xff]
      %v528 = vld [vmem:[%s2 + $0x2e0] sm:$0xff]
      %v529 = vld [vmem:[%s2 + $0x2e8] sm:$0xff]
      %v530 = vld [vmem:[%s2 + $0x2f0] sm:$0xff]
      %v531 = vld [vmem:[%s2 + $0x2f8] sm:$0xff]
      %v532 = vld [vmem:[%s426] sm:$0xff]
      %v533 = vld [vmem:[%s426 + $0x8] sm:$0xff]
      %v534 = vld [vmem:[%s426 + $0x10] sm:$0xff]
      %v535 = vld [vmem:[%s426 + $0x18] sm:$0xff]
      %v536 = vld [vmem:[%s426 + $0x20] sm:$0xff]
      %v537 = vld [vmem:[%s426 + $0x28] sm:$0xff]
      %v538 = vld [vmem:[%s426 + $0x30] sm:$0xff]
      %v539 = vld [vmem:[%s426 + $0x38] sm:$0xff]
      %v540 = vld [vmem:[%s426 + $0x40] sm:$0xff]
      %v541 = vld [vmem:[%s426 + $0x48] sm:$0xff]
      %v542 = vld [vmem:[%s426 + $0x50] sm:$0xff]
      %v543 = vld [vmem:[%s426 + $0x58] sm:$0xff]
      %v544 = vld [vmem:[%s426 + $0x60] sm:$0xff]
      %v545 = vld [vmem:[%s426 + $0x68] sm:$0xff]
      %v546 = vld [vmem:[%s426 + $0x70] sm:$0xff]
      %v547 = vld [vmem:[%s426 + $0x78] sm:$0xff]
      %v548 = vld [vmem:[%s426 + $0x80] sm:$0xff]
      %v549 = vld [vmem:[%s426 + $0x88] sm:$0xff]
      %v550 = vld [vmem:[%s426 + $0x90] sm:$0xff]
      %v551 = vld [vmem:[%s426 + $0x98] sm:$0xff]
      %v552 = vld [vmem:[%s426 + $0xa0] sm:$0xff]
      %v553 = vld [vmem:[%s426 + $0xa8] sm:$0xff]
      %v554 = vld [vmem:[%s426 + $0xb0] sm:$0xff]
      %v555 = vld [vmem:[%s426 + $0xb8] sm:$0xff]
      %v556 = vld [vmem:[%s426 + $0xc0] sm:$0xff]
      %v557 = vld [vmem:[%s426 + $0xc8] sm:$0xff]
      %v558 = vld [vmem:[%s426 + $0xd0] sm:$0xff]
      %v559 = vld [vmem:[%s426 + $0xd8] sm:$0xff]
      %v560 = vld [vmem:[%s426 + $0xe0] sm:$0xff]
      %v561 = vld [vmem:[%s426 + $0xe8] sm:$0xff]
      %v562 = vld [vmem:[%s426 + $0xf0] sm:$0xff]
      %v563 = vld [vmem:[%s426 + $0xf8] sm:$0xff]
      %v564 = vld [vmem:[%s426 + $0x100] sm:$0xff]
      %v565 = vld [vmem:[%s426 + $0x108] sm:$0xff]
      %v566 = vld [vmem:[%s426 + $0x110] sm:$0xff]
      %v567 = vld [vmem:[%s426 + $0x118] sm:$0xff]
      %v568 = vld [vmem:[%s426 + $0x120] sm:$0xff]
      %v569 = vld [vmem:[%s426 + $0x128] sm:$0xff]
      %v570 = vld [vmem:[%s426 + $0x130] sm:$0xff]
      %v571 = vld [vmem:[%s426 + $0x138] sm:$0xff]
      %v572 = vld [vmem:[%s426 + $0x140] sm:$0xff]
      %v573 = vld [vmem:[%s426 + $0x148] sm:$0xff]
      %v574 = vld [vmem:[%s426 + $0x150] sm:$0xff]
      %v575 = vld [vmem:[%s426 + $0x158] sm:$0xff]
      %v576 = vld [vmem:[%s426 + $0x160] sm:$0xff]
      %v577 = vld [vmem:[%s426 + $0x168] sm:$0xff]
      %v578 = vld [vmem:[%s426 + $0x170] sm:$0xff]
      %v579 = vld [vmem:[%s426 + $0x178] sm:$0xff]
      %v580 = vld [vmem:[%s426 + $0x180] sm:$0xff]
      %v581 = vld [vmem:[%s426 + $0x188] sm:$0xff]
      %v582 = vld [vmem:[%s426 + $0x190] sm:$0xff]
      %v583 = vld [vmem:[%s426 + $0x198] sm:$0xff]
      %v584 = vld [vmem:[%s426 + $0x1a0] sm:$0xff]
      %v585 = vld [vmem:[%s426 + $0x1a8] sm:$0xff]
      %v586 = vld [vmem:[%s426 + $0x1b0] sm:$0xff]
      %v587 = vld [vmem:[%s426 + $0x1b8] sm:$0xff]
      %v588 = vld [vmem:[%s426 + $0x1c0] sm:$0xff]
      %v589 = vld [vmem:[%s426 + $0x1c8] sm:$0xff]
      %v590 = vld [vmem:[%s426 + $0x1d0] sm:$0xff]
      %v591 = vld [vmem:[%s426 + $0x1d8] sm:$0xff]
      %v592 = vld [vmem:[%s426 + $0x1e0] sm:$0xff]
      %v593 = vld [vmem:[%s426 + $0x1e8] sm:$0xff]
      %v594 = vld [vmem:[%s426 + $0x1f0] sm:$0xff]
      %v595 = vld [vmem:[%s426 + $0x1f8] sm:$0xff]
      %v596 = vld [vmem:[%s426 + $0x200] sm:$0xff]
      %v597 = vld [vmem:[%s426 + $0x208] sm:$0xff]
      %v598 = vld [vmem:[%s426 + $0x210] sm:$0xff]
      %v599 = vld [vmem:[%s426 + $0x218] sm:$0xff]
      %v600 = vld [vmem:[%s426 + $0x220] sm:$0xff]
      %v601 = vld [vmem:[%s426 + $0x228] sm:$0xff]
      %v602 = vld [vmem:[%s426 + $0x230] sm:$0xff]
      %v603 = vld [vmem:[%s426 + $0x238] sm:$0xff]
      %v604 = vld [vmem:[%s426 + $0x240] sm:$0xff]
      %v605 = vld [vmem:[%s426 + $0x248] sm:$0xff]
      %v606 = vld [vmem:[%s426 + $0x250] sm:$0xff]
      %v607 = vld [vmem:[%s426 + $0x258] sm:$0xff]
      %v608 = vld [vmem:[%s426 + $0x260] sm:$0xff]
      %v609 = vld [vmem:[%s426 + $0x268] sm:$0xff]
      %v610 = vld [vmem:[%s426 + $0x270] sm:$0xff]
      %v611 = vld [vmem:[%s426 + $0x278] sm:$0xff]
      %v612 = vld [vmem:[%s426 + $0x280] sm:$0xff]
      %v613 = vld [vmem:[%s426 + $0x288] sm:$0xff]
      %v614 = vld [vmem:[%s426 + $0x290] sm:$0xff]
      %v615 = vld [vmem:[%s426 + $0x298] sm:$0xff]
      %v616 = vld [vmem:[%s426 + $0x2a0] sm:$0xff]
      %v617 = vld [vmem:[%s426 + $0x2a8] sm:$0xff]
      %v618 = vld [vmem:[%s426 + $0x2b0] sm:$0xff]
      %v619 = vld [vmem:[%s426 + $0x2b8] sm:$0xff]
      %v620 = vld [vmem:[%s426 + $0x2c0] sm:$0xff]
      %v621 = vld [vmem:[%s426 + $0x2c8] sm:$0xff]
      %v622 = vld [vmem:[%s426 + $0x2d0] sm:$0xff]
      %v623 = vld [vmem:[%s426 + $0x2d8] sm:$0xff]
      %v624 = vld [vmem:[%s426 + $0x2e0] sm:$0xff]
      %v625 = vld [vmem:[%s426 + $0x2e8] sm:$0xff]
      %v626 = vld [vmem:[%s426 + $0x2f0] sm:$0xff]
      %v627 = vld [vmem:[%s426 + $0x2f8] sm:$0xff]
      %v628 = vld [vmem:[%s426 + $0x300] sm:$0xff]
      %v629 = vld [vmem:[%s426 + $0x308] sm:$0xff]
      %v630 = vld [vmem:[%s426 + $0x310] sm:$0xff]
      %v631 = vld [vmem:[%s426 + $0x318] sm:$0xff]
      %v632 = vld [vmem:[%s426 + $0x320] sm:$0xff]
      %v633 = vld [vmem:[%s426 + $0x328] sm:$0xff]
      %v634 = vld [vmem:[%s426 + $0x330] sm:$0xff]
      %v635 = vld [vmem:[%s426 + $0x338] sm:$0xff]
      %v636 = vld [vmem:[%s426 + $0x340] sm:$0xff]
      %v637 = vld [vmem:[%s426 + $0x348] sm:$0xff]
      %v638 = vld [vmem:[%s426 + $0x350] sm:$0xff]
      %v639 = vld [vmem:[%s426 + $0x358] sm:$0xff]
      %v640 = vld [vmem:[%s426 + $0x360] sm:$0xff]
      %v641 = vld [vmem:[%s426 + $0x368] sm:$0xff]
      %v642 = vld [vmem:[%s426 + $0x370] sm:$0xff]
      %v643 = vld [vmem:[%s426 + $0x378] sm:$0xff]
      %v644 = vld [vmem:[%s426 + $0x380] sm:$0xff]
      %v645 = vld [vmem:[%s426 + $0x388] sm:$0xff]
      %v646 = vld [vmem:[%s426 + $0x390] sm:$0xff]
      %v647 = vld [vmem:[%s426 + $0x398] sm:$0xff]
      %v648 = vld [vmem:[%s426 + $0x3a0] sm:$0xff]
      %v649 = vld [vmem:[%s426 + $0x3a8] sm:$0xff]
      %v650 = vld [vmem:[%s426 + $0x3b0] sm:$0xff]
      %v651 = vld [vmem:[%s426 + $0x3b8] sm:$0xff]
      %v652 = vld [vmem:[%s426 + $0x3c0] sm:$0xff]
      %v653 = vld [vmem:[%s426 + $0x3c8] sm:$0xff]
      %v654 = vld [vmem:[%s426 + $0x3d0] sm:$0xff]
      %v655 = vld [vmem:[%s426 + $0x3d8] sm:$0xff]
      %v656 = vld [vmem:[%s426 + $0x3e0] sm:$0xff]
      %v657 = vld [vmem:[%s426 + $0x3e8] sm:$0xff]
      %v658 = vld [vmem:[%s426 + $0x3f0] sm:$0xff]
      %v659 = vld [vmem:[%s426 + $0x3f8] sm:$0xff]
      %v660 = vld [vmem:[%s426 + $0x400] sm:$0xff]
      %v661 = vld [vmem:[%s426 + $0x408] sm:$0xff]
      %v662 = vld [vmem:[%s426 + $0x410] sm:$0xff]
      %v663 = vld [vmem:[%s426 + $0x418] sm:$0xff]
      %v664 = vld [vmem:[%s426 + $0x420] sm:$0xff]
      %v665 = vld [vmem:[%s426 + $0x428] sm:$0xff]
      %v666 = vld [vmem:[%s426 + $0x430] sm:$0xff]
      %v667 = vld [vmem:[%s426 + $0x438] sm:$0xff]
      %v668 = vld [vmem:[%s426 + $0x440] sm:$0xff]
      %v669 = vld [vmem:[%s426 + $0x448] sm:$0xff]
      %v670 = vld [vmem:[%s426 + $0x450] sm:$0xff]
      %v671 = vld [vmem:[%s426 + $0x458] sm:$0xff]
      %v672 = vld [vmem:[%s426 + $0x460] sm:$0xff]
      %v673 = vld [vmem:[%s426 + $0x468] sm:$0xff]
      %v674 = vld [vmem:[%s426 + $0x470] sm:$0xff]
      %v675 = vld [vmem:[%s426 + $0x478] sm:$0xff]
      %v676 = vld [vmem:[%s426 + $0x480] sm:$0xff]
      %v677 = vld [vmem:[%s426 + $0x488] sm:$0xff]
      %v678 = vld [vmem:[%s426 + $0x490] sm:$0xff]
      %v679 = vld [vmem:[%s426 + $0x498] sm:$0xff]
      %v680 = vld [vmem:[%s426 + $0x4a0] sm:$0xff]
      %v681 = vld [vmem:[%s426 + $0x4a8] sm:$0xff]
      %v682 = vld [vmem:[%s426 + $0x4b0] sm:$0xff]
      %v683 = vld [vmem:[%s426 + $0x4b8] sm:$0xff]
      %v684 = vld [vmem:[%s426 + $0x4c0] sm:$0xff]
      %v685 = vld [vmem:[%s426 + $0x4c8] sm:$0xff]
      %v686 = vld [vmem:[%s426 + $0x4d0] sm:$0xff]
      %v687 = vld [vmem:[%s426 + $0x4d8] sm:$0xff]
      %v688 = vld [vmem:[%s426 + $0x4e0] sm:$0xff]
      %v689 = vld [vmem:[%s426 + $0x4e8] sm:$0xff]
      %v690 = vld [vmem:[%s426 + $0x4f0] sm:$0xff]
      %v691 = vld [vmem:[%s426 + $0x4f8] sm:$0xff]
      %v692 = vld [vmem:[%s426 + $0x500] sm:$0xff]
      %v693 = vld [vmem:[%s426 + $0x508] sm:$0xff]
      %v694 = vld [vmem:[%s426 + $0x510] sm:$0xff]
      %v695 = vld [vmem:[%s426 + $0x518] sm:$0xff]
      %v696 = vld [vmem:[%s426 + $0x520] sm:$0xff]
      %v697 = vld [vmem:[%s426 + $0x528] sm:$0xff]
      %v698 = vld [vmem:[%s426 + $0x530] sm:$0xff]
      %v699 = vld [vmem:[%s426 + $0x538] sm:$0xff]
      %v700 = vld [vmem:[%s426 + $0x540] sm:$0xff]
      %v701 = vld [vmem:[%s426 + $0x548] sm:$0xff]
      %v702 = vld [vmem:[%s426 + $0x550] sm:$0xff]
      %v703 = vld [vmem:[%s426 + $0x558] sm:$0xff]
      %v704 = vld [vmem:[%s426 + $0x560] sm:$0xff]
      %v705 = vld [vmem:[%s426 + $0x568] sm:$0xff]
      %v706 = vld [vmem:[%s426 + $0x570] sm:$0xff]
      %v707 = vld [vmem:[%s426 + $0x578] sm:$0xff]
      %v708 = vld [vmem:[%s426 + $0x580] sm:$0xff]
      %v709 = vld [vmem:[%s426 + $0x588] sm:$0xff]
      %v710 = vld [vmem:[%s426 + $0x590] sm:$0xff]
      %v711 = vld [vmem:[%s426 + $0x598] sm:$0xff]
      %v712 = vld [vmem:[%s426 + $0x5a0] sm:$0xff]
      %v713 = vld [vmem:[%s426 + $0x5a8] sm:$0xff]
      %v714 = vld [vmem:[%s426 + $0x5b0] sm:$0xff]
      %v715 = vld [vmem:[%s426 + $0x5b8] sm:$0xff]
      %v716 = vld [vmem:[%s426 + $0x5c0] sm:$0xff]
      %v717 = vld [vmem:[%s426 + $0x5c8] sm:$0xff]
      %v718 = vld [vmem:[%s426 + $0x5d0] sm:$0xff]
      %v719 = vld [vmem:[%s426 + $0x5d8] sm:$0xff]
      %v720 = vld [vmem:[%s426 + $0x5e0] sm:$0xff]
      %v721 = vld [vmem:[%s426 + $0x5e8] sm:$0xff]
      %v722 = vld [vmem:[%s426 + $0x5f0] sm:$0xff]
      %v723 = vld [vmem:[%s426 + $0x5f8] sm:$0xff]
      %v724 = vld [vmem:[%s426 + $0x600] sm:$0xff]
      %v725 = vld [vmem:[%s426 + $0x608] sm:$0xff]
      %v726 = vld [vmem:[%s426 + $0x610] sm:$0xff]
      %v727 = vld [vmem:[%s426 + $0x618] sm:$0xff]
      %v728 = vld [vmem:[%s426 + $0x620] sm:$0xff]
      %v729 = vld [vmem:[%s426 + $0x628] sm:$0xff]
      %v730 = vld [vmem:[%s426 + $0x630] sm:$0xff]
      %v731 = vld [vmem:[%s426 + $0x638] sm:$0xff]
      %v732 = vld [vmem:[%s426 + $0x640] sm:$0xff]
      %v733 = vld [vmem:[%s426 + $0x648] sm:$0xff]
      %v734 = vld [vmem:[%s426 + $0x650] sm:$0xff]
      %v735 = vld [vmem:[%s426 + $0x658] sm:$0xff]
      %v736 = vld [vmem:[%s426 + $0x660] sm:$0xff]
      %v737 = vld [vmem:[%s426 + $0x668] sm:$0xff]
      %v738 = vld [vmem:[%s426 + $0x670] sm:$0xff]
      %v739 = vld [vmem:[%s426 + $0x678] sm:$0xff]
      %v740 = vld [vmem:[%s426 + $0x680] sm:$0xff]
      %v741 = vld [vmem:[%s426 + $0x688] sm:$0xff]
      %v742 = vld [vmem:[%s426 + $0x690] sm:$0xff]
      %v743 = vld [vmem:[%s426 + $0x698] sm:$0xff]
      %v744 = vld [vmem:[%s426 + $0x6a0] sm:$0xff]
      %v745 = vld [vmem:[%s426 + $0x6a8] sm:$0xff]
      %v746 = vld [vmem:[%s426 + $0x6b0] sm:$0xff]
      %v747 = vld [vmem:[%s426 + $0x6b8] sm:$0xff]
      %v748 = vld [vmem:[%s426 + $0x6c0] sm:$0xff]
      %v749 = vld [vmem:[%s426 + $0x6c8] sm:$0xff]
      %v750 = vld [vmem:[%s426 + $0x6d0] sm:$0xff]
      %v751 = vld [vmem:[%s426 + $0x6d8] sm:$0xff]
      %v752 = vld [vmem:[%s426 + $0x6e0] sm:$0xff]
      %v753 = vld [vmem:[%s426 + $0x6e8] sm:$0xff]
      %v754 = vld [vmem:[%s426 + $0x6f0] sm:$0xff]
      %v755 = vld [vmem:[%s426 + $0x6f8] sm:$0xff]
      %v756 = vld [vmem:[%s426 + $0x700] sm:$0xff]
      %v757 = vld [vmem:[%s426 + $0x708] sm:$0xff]
      %v758 = vld [vmem:[%s426 + $0x710] sm:$0xff]
      %v759 = vld [vmem:[%s426 + $0x718] sm:$0xff]
      %v760 = vld [vmem:[%s426 + $0x720] sm:$0xff]
      %v761 = vld [vmem:[%s426 + $0x728] sm:$0xff]
      %v762 = vld [vmem:[%s426 + $0x730] sm:$0xff]
      %v763 = vld [vmem:[%s426 + $0x738] sm:$0xff]
      %v764 = vld [vmem:[%s426 + $0x740] sm:$0xff]
      %v765 = vld [vmem:[%s426 + $0x748] sm:$0xff]
      %v766 = vld [vmem:[%s426 + $0x750] sm:$0xff]
      %v767 = vld [vmem:[%s426 + $0x758] sm:$0xff]
      %v768 = vld [vmem:[%s426 + $0x760] sm:$0xff]
      %v769 = vld [vmem:[%s426 + $0x768] sm:$0xff]
      %v770 = vld [vmem:[%s426 + $0x770] sm:$0xff]
      %v771 = vld [vmem:[%s426 + $0x778] sm:$0xff]
      %v772 = vld [vmem:[%s426 + $0x780] sm:$0xff]
      %v773 = vld [vmem:[%s426 + $0x788] sm:$0xff]
      %v774 = vld [vmem:[%s426 + $0x790] sm:$0xff]
      %v775 = vld [vmem:[%s426 + $0x798] sm:$0xff]
      %v776 = vld [vmem:[%s426 + $0x7a0] sm:$0xff]
      %v777 = vld [vmem:[%s426 + $0x7a8] sm:$0xff]
      %v778 = vld [vmem:[%s426 + $0x7b0] sm:$0xff]
      %v779 = vld [vmem:[%s426 + $0x7b8] sm:$0xff]
      %v780 = vld [vmem:[%s426 + $0x7c0] sm:$0xff]
      %v781 = vld [vmem:[%s426 + $0x7c8] sm:$0xff]
      %v782 = vld [vmem:[%s426 + $0x7d0] sm:$0xff]
      %v783 = vld [vmem:[%s426 + $0x7d8] sm:$0xff]
      %v784 = vld [vmem:[%s426 + $0x7e0] sm:$0xff]
      %v785 = vld [vmem:[%s426 + $0x7e8] sm:$0xff]
      %v786 = vld [vmem:[%s426 + $0x7f0] sm:$0xff]
      %v787 = vld [vmem:[%s426 + $0x7f8] sm:$0xff]
      %v788 = vld [vmem:[%s426 + $0x800] sm:$0xff]
      %v789 = vld [vmem:[%s426 + $0x808] sm:$0xff]
      %v790 = vld [vmem:[%s426 + $0x810] sm:$0xff]
      %v791 = vld [vmem:[%s426 + $0x818] sm:$0xff]
      %v792 = vld [vmem:[%s426 + $0x820] sm:$0xff]
      %v793 = vld [vmem:[%s426 + $0x828] sm:$0xff]
      %v794 = vld [vmem:[%s426 + $0x830] sm:$0xff]
      %v795 = vld [vmem:[%s426 + $0x838] sm:$0xff]
      %v796 = vld [vmem:[%s426 + $0x840] sm:$0xff]
      %v797 = vld [vmem:[%s426 + $0x848] sm:$0xff]
      %v798 = vld [vmem:[%s426 + $0x850] sm:$0xff]
      %v799 = vld [vmem:[%s426 + $0x858] sm:$0xff]
      %v800 = vld [vmem:[%s426 + $0x860] sm:$0xff]
      %v801 = vld [vmem:[%s426 + $0x868] sm:$0xff]
      %v802 = vld [vmem:[%s426 + $0x870] sm:$0xff]
      %v803 = vld [vmem:[%s426 + $0x878] sm:$0xff]
      %v804 = vld [vmem:[%s426 + $0x880] sm:$0xff]
      %v805 = vld [vmem:[%s426 + $0x888] sm:$0xff]
      %v806 = vld [vmem:[%s426 + $0x890] sm:$0xff]
      %v807 = vld [vmem:[%s426 + $0x898] sm:$0xff]
      %v808 = vld [vmem:[%s426 + $0x8a0] sm:$0xff]
      %v809 = vld [vmem:[%s426 + $0x8a8] sm:$0xff]
      %v810 = vld [vmem:[%s426 + $0x8b0] sm:$0xff]
      %v811 = vld [vmem:[%s426 + $0x8b8] sm:$0xff]
      %v812 = vld [vmem:[%s426 + $0x8c0] sm:$0xff]
      %v813 = vld [vmem:[%s426 + $0x8c8] sm:$0xff]
      %v814 = vld [vmem:[%s426 + $0x8d0] sm:$0xff]
      %v815 = vld [vmem:[%s426 + $0x8d8] sm:$0xff]
      %v816 = vld [vmem:[%s426 + $0x8e0] sm:$0xff]
      %v817 = vld [vmem:[%s426 + $0x8e8] sm:$0xff]
      %v818 = vld [vmem:[%s426 + $0x8f0] sm:$0xff]
      %v819 = vld [vmem:[%s426 + $0x8f8] sm:$0xff]
      %v820 = vld [vmem:[%s426 + $0x900] sm:$0xff]
      %v821 = vld [vmem:[%s426 + $0x908] sm:$0xff]
      %v822 = vld [vmem:[%s426 + $0x910] sm:$0xff]
      %v823 = vld [vmem:[%s426 + $0x918] sm:$0xff]
      %v824 = vld [vmem:[%s426 + $0x920] sm:$0xff]
      %v825 = vld [vmem:[%s426 + $0x928] sm:$0xff]
      %v826 = vld [vmem:[%s426 + $0x930] sm:$0xff]
      %v827 = vld [vmem:[%s426 + $0x938] sm:$0xff]
      %v828 = vld [vmem:[%s426 + $0x940] sm:$0xff]
      %v829 = vld [vmem:[%s426 + $0x948] sm:$0xff]
      %v830 = vld [vmem:[%s426 + $0x950] sm:$0xff]
      %v831 = vld [vmem:[%s426 + $0x958] sm:$0xff]
      %v832 = vld [vmem:[%s426 + $0x960] sm:$0xff]
      %v833 = vld [vmem:[%s426 + $0x968] sm:$0xff]
      %v834 = vld [vmem:[%s426 + $0x970] sm:$0xff]
      %v835 = vld [vmem:[%s426 + $0x978] sm:$0xff]
      %v836 = vld [vmem:[%s426 + $0x980] sm:$0xff]
      %v837 = vld [vmem:[%s426 + $0x988] sm:$0xff]
      %v838 = vld [vmem:[%s426 + $0x990] sm:$0xff]
      %v839 = vld [vmem:[%s426 + $0x998] sm:$0xff]
      %v840 = vld [vmem:[%s426 + $0x9a0] sm:$0xff]
      %v841 = vld [vmem:[%s426 + $0x9a8] sm:$0xff]
      %v842 = vld [vmem:[%s426 + $0x9b0] sm:$0xff]
      %v843 = vld [vmem:[%s426 + $0x9b8] sm:$0xff]
      %v844 = vld [vmem:[%s426 + $0x9c0] sm:$0xff]
      %v845 = vld [vmem:[%s426 + $0x9c8] sm:$0xff]
      %v846 = vld [vmem:[%s426 + $0x9d0] sm:$0xff]
      %v847 = vld [vmem:[%s426 + $0x9d8] sm:$0xff]
      %v848 = vld [vmem:[%s426 + $0x9e0] sm:$0xff]
      %v849 = vld [vmem:[%s426 + $0x9e8] sm:$0xff]
      %v850 = vld [vmem:[%s426 + $0x9f0] sm:$0xff]
      %v851 = vld [vmem:[%s426 + $0x9f8] sm:$0xff]
      %v852 = vld [vmem:[%s426 + $0xa00] sm:$0xff]
      %v853 = vld [vmem:[%s426 + $0xa08] sm:$0xff]
      %v854 = vld [vmem:[%s426 + $0xa10] sm:$0xff]
      %v855 = vld [vmem:[%s426 + $0xa18] sm:$0xff]
      %v856 = vld [vmem:[%s426 + $0xa20] sm:$0xff]
      %v857 = vld [vmem:[%s426 + $0xa28] sm:$0xff]
      %v858 = vld [vmem:[%s426 + $0xa30] sm:$0xff]
      %v859 = vld [vmem:[%s426 + $0xa38] sm:$0xff]
      %v860 = vld [vmem:[%s426 + $0xa40] sm:$0xff]
      %v861 = vld [vmem:[%s426 + $0xa48] sm:$0xff]
      %v862 = vld [vmem:[%s426 + $0xa50] sm:$0xff]
      %v863 = vld [vmem:[%s426 + $0xa58] sm:$0xff]
      %v864 = vld [vmem:[%s426 + $0xa60] sm:$0xff]
      %v865 = vld [vmem:[%s426 + $0xa68] sm:$0xff]
      %v866 = vld [vmem:[%s426 + $0xa70] sm:$0xff]
      %v867 = vld [vmem:[%s426 + $0xa78] sm:$0xff]
      %v868 = vld [vmem:[%s426 + $0xa80] sm:$0xff]
      %v869 = vld [vmem:[%s426 + $0xa88] sm:$0xff]
      %v870 = vld [vmem:[%s426 + $0xa90] sm:$0xff]
      %v871 = vld [vmem:[%s426 + $0xa98] sm:$0xff]
      %v872 = vld [vmem:[%s426 + $0xaa0] sm:$0xff]
      %v873 = vld [vmem:[%s426 + $0xaa8] sm:$0xff]
      %v874 = vld [vmem:[%s426 + $0xab0] sm:$0xff]
      %v875 = vld [vmem:[%s426 + $0xab8] sm:$0xff]
      %v876 = vld [vmem:[%s426 + $0xac0] sm:$0xff]
      %v877 = vld [vmem:[%s426 + $0xac8] sm:$0xff]
      %v878 = vld [vmem:[%s426 + $0xad0] sm:$0xff]
      %v879 = vld [vmem:[%s426 + $0xad8] sm:$0xff]
      %v880 = vld [vmem:[%s426 + $0xae0] sm:$0xff]
      %v881 = vld [vmem:[%s426 + $0xae8] sm:$0xff]
      %v882 = vld [vmem:[%s426 + $0xaf0] sm:$0xff]
      %v883 = vld [vmem:[%s426 + $0xaf8] sm:$0xff]
      %v884 = vld [vmem:[%s426 + $0xb00] sm:$0xff]
      %v885 = vld [vmem:[%s426 + $0xb08] sm:$0xff]
      %v886 = vld [vmem:[%s426 + $0xb10] sm:$0xff]
      %v887 = vld [vmem:[%s426 + $0xb18] sm:$0xff]
      %v888 = vld [vmem:[%s426 + $0xb20] sm:$0xff]
      %v889 = vld [vmem:[%s426 + $0xb28] sm:$0xff]
      %v890 = vld [vmem:[%s426 + $0xb30] sm:$0xff]
      %v891 = vld [vmem:[%s426 + $0xb38] sm:$0xff]
      %v892 = vld [vmem:[%s426 + $0xb40] sm:$0xff]
      %v893 = vld [vmem:[%s426 + $0xb48] sm:$0xff]
      %v894 = vld [vmem:[%s426 + $0xb50] sm:$0xff]
      %v895 = vld [vmem:[%s426 + $0xb58] sm:$0xff]
      %v896 = vld [vmem:[%s426 + $0xb60] sm:$0xff]
      %v897 = vld [vmem:[%s426 + $0xb68] sm:$0xff]
      %v898 = vld [vmem:[%s426 + $0xb70] sm:$0xff]
      %v899 = vld [vmem:[%s426 + $0xb78] sm:$0xff]
      %v900 = vld [vmem:[%s426 + $0xb80] sm:$0xff]
      %v901 = vld [vmem:[%s426 + $0xb88] sm:$0xff]
      %v902 = vld [vmem:[%s426 + $0xb90] sm:$0xff]
      %v903 = vld [vmem:[%s426 + $0xb98] sm:$0xff]
      %v904 = vld [vmem:[%s426 + $0xba0] sm:$0xff]
      %v905 = vld [vmem:[%s426 + $0xba8] sm:$0xff]
      %v906 = vld [vmem:[%s426 + $0xbb0] sm:$0xff]
      %v907 = vld [vmem:[%s426 + $0xbb8] sm:$0xff]
      %v908 = vld [vmem:[%s426 + $0xbc0] sm:$0xff]
      %v909 = vld [vmem:[%s426 + $0xbc8] sm:$0xff]
      %v910 = vld [vmem:[%s426 + $0xbd0] sm:$0xff]
      %v911 = vld [vmem:[%s426 + $0xbd8] sm:$0xff]
      %v912 = vld [vmem:[%s426 + $0xbe0] sm:$0xff]
      %v913 = vld [vmem:[%s426 + $0xbe8] sm:$0xff]
      %v914 = vld [vmem:[%s426 + $0xbf0] sm:$0xff]
      %v915 = vld [vmem:[%s426 + $0xbf8] sm:$0xff]
      %v916 = vld [vmem:[%s426 + $0xc00] sm:$0xff]
      %v917 = vld [vmem:[%s426 + $0xc08] sm:$0xff]
      %v918 = vld [vmem:[%s426 + $0xc10] sm:$0xff]
      %v919 = vld [vmem:[%s426 + $0xc18] sm:$0xff]
      %v920 = vld [vmem:[%s426 + $0xc20] sm:$0xff]
      %v921 = vld [vmem:[%s426 + $0xc28] sm:$0xff]
      %v922 = vld [vmem:[%s426 + $0xc30] sm:$0xff]
      %v923 = vld [vmem:[%s426 + $0xc38] sm:$0xff]
      %v924 = vld [vmem:[%s426 + $0xc40] sm:$0xff]
      %v925 = vld [vmem:[%s426 + $0xc48] sm:$0xff]
      %v926 = vld [vmem:[%s426 + $0xc50] sm:$0xff]
      %v927 = vld [vmem:[%s426 + $0xc58] sm:$0xff]
      %v928 = vld [vmem:[%s426 + $0xc60] sm:$0xff]
      %v929 = vld [vmem:[%s426 + $0xc68] sm:$0xff]
      %v930 = vld [vmem:[%s426 + $0xc70] sm:$0xff]
      %v931 = vld [vmem:[%s426 + $0xc78] sm:$0xff]
      %v932 = vld [vmem:[%s426 + $0xc80] sm:$0xff]
      %v933 = vld [vmem:[%s426 + $0xc88] sm:$0xff]
      %v934 = vld [vmem:[%s426 + $0xc90] sm:$0xff]
      %v935 = vld [vmem:[%s426 + $0xc98] sm:$0xff]
      %v936 = vld [vmem:[%s426 + $0xca0] sm:$0xff]
      %v937 = vld [vmem:[%s426 + $0xca8] sm:$0xff]
      %v938 = vld [vmem:[%s426 + $0xcb0] sm:$0xff]
      %v939 = vld [vmem:[%s426 + $0xcb8] sm:$0xff]
      %v940 = vld [vmem:[%s426 + $0xcc0] sm:$0xff]
      %v941 = vld [vmem:[%s426 + $0xcc8] sm:$0xff]
      %v942 = vld [vmem:[%s426 + $0xcd0] sm:$0xff]
      %v943 = vld [vmem:[%s426 + $0xcd8] sm:$0xff]
      %v944 = vld [vmem:[%s426 + $0xce0] sm:$0xff]
      %v945 = vld [vmem:[%s426 + $0xce8] sm:$0xff]
      %v946 = vld [vmem:[%s426 + $0xcf0] sm:$0xff]
      %v947 = vld [vmem:[%s426 + $0xcf8] sm:$0xff]
      %v948 = vld [vmem:[%s426 + $0xd00] sm:$0xff]
      %v949 = vld [vmem:[%s426 + $0xd08] sm:$0xff]
      %v950 = vld [vmem:[%s426 + $0xd10] sm:$0xff]
      %v951 = vld [vmem:[%s426 + $0xd18] sm:$0xff]
      %v952 = vld [vmem:[%s426 + $0xd20] sm:$0xff]
      %v953 = vld [vmem:[%s426 + $0xd28] sm:$0xff]
      %v954 = vld [vmem:[%s426 + $0xd30] sm:$0xff]
      %v955 = vld [vmem:[%s426 + $0xd38] sm:$0xff]
      %v956 = vld [vmem:[%s426 + $0xd40] sm:$0xff]
      %v957 = vld [vmem:[%s426 + $0xd48] sm:$0xff]
      %v958 = vld [vmem:[%s426 + $0xd50] sm:$0xff]
      %v959 = vld [vmem:[%s426 + $0xd58] sm:$0xff]
      %v960 = vld [vmem:[%s426 + $0xd60] sm:$0xff]
      %v961 = vld [vmem:[%s426 + $0xd68] sm:$0xff]
      %v962 = vld [vmem:[%s426 + $0xd70] sm:$0xff]
      %v963 = vld [vmem:[%s426 + $0xd78] sm:$0xff]
      %v964 = vld [vmem:[%s426 + $0xd80] sm:$0xff]
      %v965 = vld [vmem:[%s426 + $0xd88] sm:$0xff]
      %v966 = vld [vmem:[%s426 + $0xd90] sm:$0xff]
      %v967 = vld [vmem:[%s426 + $0xd98] sm:$0xff]
      %v968 = vld [vmem:[%s426 + $0xda0] sm:$0xff]
      %v969 = vld [vmem:[%s426 + $0xda8] sm:$0xff]
      %v970 = vld [vmem:[%s426 + $0xdb0] sm:$0xff]
      %v971 = vld [vmem:[%s426 + $0xdb8] sm:$0xff]
      %v972 = vld [vmem:[%s426 + $0xdc0] sm:$0xff]
      %v973 = vld [vmem:[%s426 + $0xdc8] sm:$0xff]
      %v974 = vld [vmem:[%s426 + $0xdd0] sm:$0xff]
      %v975 = vld [vmem:[%s426 + $0xdd8] sm:$0xff]
      %v976 = vld [vmem:[%s426 + $0xde0] sm:$0xff]
      %v977 = vld [vmem:[%s426 + $0xde8] sm:$0xff]
      %v978 = vld [vmem:[%s426 + $0xdf0] sm:$0xff]
      %v979 = vld [vmem:[%s426 + $0xdf8] sm:$0xff]
      %v980 = vld [vmem:[%s426 + $0xe00] sm:$0xff]
      %v981 = vld [vmem:[%s426 + $0xe08] sm:$0xff]
      %v982 = vld [vmem:[%s426 + $0xe10] sm:$0xff]
      %v983 = vld [vmem:[%s426 + $0xe18] sm:$0xff]
      %v984 = vld [vmem:[%s426 + $0xe20] sm:$0xff]
      %v985 = vld [vmem:[%s426 + $0xe28] sm:$0xff]
      %v986 = vld [vmem:[%s426 + $0xe30] sm:$0xff]
      %v987 = vld [vmem:[%s426 + $0xe38] sm:$0xff]
      %v988 = vld [vmem:[%s426 + $0xe40] sm:$0xff]
      %v989 = vld [vmem:[%s426 + $0xe48] sm:$0xff]
      %v990 = vld [vmem:[%s426 + $0xe50] sm:$0xff]
      %v991 = vld [vmem:[%s426 + $0xe58] sm:$0xff]
      %v992 = vld [vmem:[%s426 + $0xe60] sm:$0xff]
      %v993 = vld [vmem:[%s426 + $0xe68] sm:$0xff]
      %v994 = vld [vmem:[%s426 + $0xe70] sm:$0xff]
      %v995 = vld [vmem:[%s426 + $0xe78] sm:$0xff]
      %v996 = vld [vmem:[%s426 + $0xe80] sm:$0xff]
      %v997 = vld [vmem:[%s426 + $0xe88] sm:$0xff]
      %v998 = vld [vmem:[%s426 + $0xe90] sm:$0xff]
      %v999 = vld [vmem:[%s426 + $0xe98] sm:$0xff]
      %v1000 = vld [vmem:[%s426 + $0xea0] sm:$0xff]
      %v1001 = vld [vmem:[%s426 + $0xea8] sm:$0xff]
      %v1002 = vld [vmem:[%s426 + $0xeb0] sm:$0xff]
      %v1003 = vld [vmem:[%s426 + $0xeb8] sm:$0xff]
      %v1004 = vld [vmem:[%s426 + $0xec0] sm:$0xff]
      %v1005 = vld [vmem:[%s426 + $0xec8] sm:$0xff]
      %v1006 = vld [vmem:[%s426 + $0xed0] sm:$0xff]
      %v1007 = vld [vmem:[%s426 + $0xed8] sm:$0xff]
      %v1008 = vld [vmem:[%s426 + $0xee0] sm:$0xff]
      %v1009 = vld [vmem:[%s426 + $0xee8] sm:$0xff]
      %v1010 = vld [vmem:[%s426 + $0xef0] sm:$0xff]
      %v1011 = vld [vmem:[%s426 + $0xef8] sm:$0xff]
      %v1012 = vld [vmem:[%s426 + $0xf00] sm:$0xff]
      %v1013 = vld [vmem:[%s426 + $0xf08] sm:$0xff]
      %v1014 = vld [vmem:[%s426 + $0xf10] sm:$0xff]
      %v1015 = vld [vmem:[%s426 + $0xf18] sm:$0xff]
      %v1016 = vld [vmem:[%s426 + $0xf20] sm:$0xff]
      %v1017 = vld [vmem:[%s426 + $0xf28] sm:$0xff]
      %v1018 = vld [vmem:[%s426 + $0xf30] sm:$0xff]
      %v1019 = vld [vmem:[%s426 + $0xf38] sm:$0xff]
      %v1020 = vld [vmem:[%s426 + $0xf40] sm:$0xff]
      %v1021 = vld [vmem:[%s426 + $0xf48] sm:$0xff]
      %v1022 = vld [vmem:[%s426 + $0xf50] sm:$0xff]
      %v1023 = vld [vmem:[%s426 + $0xf58] sm:$0xff]
      %v1024 = vld [vmem:[%s426 + $0xf60] sm:$0xff]
      %v1025 = vld [vmem:[%s426 + $0xf68] sm:$0xff]
      %v1026 = vld [vmem:[%s426 + $0xf70] sm:$0xff]
      %v1027 = vld [vmem:[%s426 + $0xf78] sm:$0xff]
      %v1028 = vld [vmem:[%s426 + $0xf80] sm:$0xff]
      %v1029 = vld [vmem:[%s426 + $0xf88] sm:$0xff]
      %v1030 = vld [vmem:[%s426 + $0xf90] sm:$0xff]
      %v1031 = vld [vmem:[%s426 + $0xf98] sm:$0xff]
      %v1032 = vld [vmem:[%s426 + $0xfa0] sm:$0xff]
      %v1033 = vld [vmem:[%s426 + $0xfa8] sm:$0xff]
      %v1034 = vld [vmem:[%s426 + $0xfb0] sm:$0xff]
      %v1035 = vld [vmem:[%s426 + $0xfb8] sm:$0xff]
      %v1036 = vld [vmem:[%s426 + $0xfc0] sm:$0xff]
      %v1037 = vld [vmem:[%s426 + $0xfc8] sm:$0xff]
      %v1038 = vld [vmem:[%s426 + $0xfd0] sm:$0xff]
      %v1039 = vld [vmem:[%s426 + $0xfd8] sm:$0xff]
      %v1040 = vld [vmem:[%s426 + $0xfe0] sm:$0xff]
      %v1041 = vld [vmem:[%s426 + $0xfe8] sm:$0xff]
      %v1042 = vld [vmem:[%s426 + $0xff0] sm:$0xff]
      %v1043 = vld [vmem:[%s426 + $0xff8] sm:$0xff]
      %v1044 = vld [vmem:[%s426 + $0x1000] sm:$0xff]
      %v1045 = vld [vmem:[%s426 + $0x1008] sm:$0xff]
      %v1046 = vld [vmem:[%s426 + $0x1010] sm:$0xff]
      %v1047 = vld [vmem:[%s426 + $0x1018] sm:$0xff]
      %v1048 = vld [vmem:[%s426 + $0x1020] sm:$0xff]
      %v1049 = vld [vmem:[%s426 + $0x1028] sm:$0xff]
      %v1050 = vld [vmem:[%s426 + $0x1030] sm:$0xff]
      %v1051 = vld [vmem:[%s426 + $0x1038] sm:$0xff]
      %v1052 = vld [vmem:[%s426 + $0x1040] sm:$0xff]
      %v1053 = vld [vmem:[%s426 + $0x1048] sm:$0xff]
      %v1054 = vld [vmem:[%s426 + $0x1050] sm:$0xff]
      %v1055 = vld [vmem:[%s426 + $0x1058] sm:$0xff]
      %v1056 = vld [vmem:[%s426 + $0x1060] sm:$0xff]
      %v1057 = vld [vmem:[%s426 + $0x1068] sm:$0xff]
      %v1058 = vld [vmem:[%s426 + $0x1070] sm:$0xff]
      %v1059 = vld [vmem:[%s426 + $0x1078] sm:$0xff]
      %v1060 = vld [vmem:[%s426 + $0x1080] sm:$0xff]
      %v1061 = vld [vmem:[%s426 + $0x1088] sm:$0xff]
      %v1062 = vld [vmem:[%s426 + $0x1090] sm:$0xff]
      %v1063 = vld [vmem:[%s426 + $0x1098] sm:$0xff]
      %v1064 = vld [vmem:[%s426 + $0x10a0] sm:$0xff]
      %v1065 = vld [vmem:[%s426 + $0x10a8] sm:$0xff]
      %v1066 = vld [vmem:[%s426 + $0x10b0] sm:$0xff]
      %v1067 = vld [vmem:[%s426 + $0x10b8] sm:$0xff]
      %v1068 = vld [vmem:[%s426 + $0x10c0] sm:$0xff]
      %v1069 = vld [vmem:[%s426 + $0x10c8] sm:$0xff]
      %v1070 = vld [vmem:[%s426 + $0x10d0] sm:$0xff]
      %v1071 = vld [vmem:[%s426 + $0x10d8] sm:$0xff]
      %v1072 = vld [vmem:[%s426 + $0x10e0] sm:$0xff]
      %v1073 = vld [vmem:[%s426 + $0x10e8] sm:$0xff]
      %v1074 = vld [vmem:[%s426 + $0x10f0] sm:$0xff]
      %v1075 = vld [vmem:[%s426 + $0x10f8] sm:$0xff]
      %v1076 = vld [vmem:[%s426 + $0x1100] sm:$0xff]
      %v1077 = vld [vmem:[%s426 + $0x1108] sm:$0xff]
      %v1078 = vld [vmem:[%s426 + $0x1110] sm:$0xff]
      %v1079 = vld [vmem:[%s426 + $0x1118] sm:$0xff]
      %v1080 = vld [vmem:[%s426 + $0x1120] sm:$0xff]
      %v1081 = vld [vmem:[%s426 + $0x1128] sm:$0xff]
      %v1082 = vld [vmem:[%s426 + $0x1130] sm:$0xff]
      %v1083 = vld [vmem:[%s426 + $0x1138] sm:$0xff]
      %v1084 = vld [vmem:[%s426 + $0x1140] sm:$0xff]
      %v1085 = vld [vmem:[%s426 + $0x1148] sm:$0xff]
      %v1086 = vld [vmem:[%s426 + $0x1150] sm:$0xff]
      %v1087 = vld [vmem:[%s426 + $0x1158] sm:$0xff]
      %v1088 = vld [vmem:[%s426 + $0x1160] sm:$0xff]
      %v1089 = vld [vmem:[%s426 + $0x1168] sm:$0xff]
      %v1090 = vld [vmem:[%s426 + $0x1170] sm:$0xff]
      %v1091 = vld [vmem:[%s426 + $0x1178] sm:$0xff]
      %v1092 = vld [vmem:[%s426 + $0x1180] sm:$0xff]
      %v1093 = vld [vmem:[%s426 + $0x1188] sm:$0xff]
      %v1094 = vld [vmem:[%s426 + $0x1190] sm:$0xff]
      %v1095 = vld [vmem:[%s426 + $0x1198] sm:$0xff]
      %v1096 = vld [vmem:[%s426 + $0x11a0] sm:$0xff]
      %v1097 = vld [vmem:[%s426 + $0x11a8] sm:$0xff]
      %v1098 = vld [vmem:[%s426 + $0x11b0] sm:$0xff]
      %v1099 = vld [vmem:[%s426 + $0x11b8] sm:$0xff]
      %v1100 = vld [vmem:[%s426 + $0x11c0] sm:$0xff]
      %v1101 = vld [vmem:[%s426 + $0x11c8] sm:$0xff]
      %v1102 = vld [vmem:[%s426 + $0x11d0] sm:$0xff]
      %v1103 = vld [vmem:[%s426 + $0x11d8] sm:$0xff]
      %v1104 = vld [vmem:[%s426 + $0x11e0] sm:$0xff]
      %v1105 = vld [vmem:[%s426 + $0x11e8] sm:$0xff]
      %v1106 = vld [vmem:[%s426 + $0x11f0] sm:$0xff]
      %v1107 = vld [vmem:[%s426 + $0x11f8] sm:$0xff]
      %v1108 = vld [vmem:[%s3] sm:$0xff]
      %v1109 = vld [vmem:[%s3 + $0x8] sm:$0xff]
      %v1110 = vld [vmem:[%s3 + $0x10] sm:$0xff]
      %v1111 = vld [vmem:[%s3 + $0x18] sm:$0xff]
      %v1112 = vld [vmem:[%s3 + $0x20] sm:$0xff]
      %v1113 = vld [vmem:[%s3 + $0x28] sm:$0xff]
      %v1114 = vld [vmem:[%s3 + $0x30] sm:$0xff]
      %v1115 = vld [vmem:[%s3 + $0x38] sm:$0xff]
      %1117 = vset.pattern.permute.xlu0 0
      %1118 = vperm.xlu0 %1117, %v1108
      %v1119 = vpop.permute.xlu0 %1118
      %1122 = vset.pattern.permute.xlu0 0
      %1123 = vperm.xlu0 %1122, %v1109
      %v1124 = vpop.permute.xlu0 %1123
      %1127 = vset.pattern.permute.xlu0 0
      %1128 = vperm.xlu0 %1127, %v1110
      %v1129 = vpop.permute.xlu0 %1128
      %1132 = vset.pattern.permute.xlu0 0
      %1133 = vperm.xlu0 %1132, %v1111
      %v1134 = vpop.permute.xlu0 %1133
      %1137 = vset.pattern.permute.xlu0 0
      %1138 = vperm.xlu0 %1137, %v1112
      %v1139 = vpop.permute.xlu0 %1138
      %1142 = vset.pattern.permute.xlu0 0
      %1143 = vperm.xlu0 %1142, %v1113
      %v1144 = vpop.permute.xlu0 %1143
      %1147 = vset.pattern.permute.xlu0 0
      %1148 = vperm.xlu0 %1147, %v1114
      %v1149 = vpop.permute.xlu0 %1148
      %1152 = vset.pattern.permute.xlu0 0
      %1153 = vperm.xlu0 %1152, %v1115
      %v1154 = vpop.permute.xlu0 %1153
      %1156 = vmatprep.subr.mxu0 %v533
      %1157 = vmatpush1.msra.mxu0 %v532
      %1158 = vmatprep.subr.mxu0 %v536
      %1159 = vmatpush1.msra.mxu0 %v535
      %1160 = vmatprep.subr.mxu0 %v539
      %1161 = vmatpush1.msra.mxu0 %v538
      %1162 = vmatprep.subr.mxu0 %v542
      %1163 = vmatpush1.msra.mxu0 %v541
      %1164 = vmatprep.subr.mxu0 %v545
      %1165 = vmatpush1.msra.mxu0 %v544
      %1166 = vmatprep.subr.mxu0 %v548
      %1167 = vmatpush1.msra.mxu0 %v547
      %1168 = vmatprep.subr.mxu0 %v551
      %1169 = vmatpush1.msra.mxu0 %v550
      %1170 = vmatprep.subr.mxu0 %v554
      %1171 = vmatpush1.msra.mxu0 %v553
      %1172 = vmatprep.subr.mxu0 %v557
      %1173 = vmatpush1.msra.mxu0 %v556
      %1174 = vmatprep.subr.mxu0 %v560
      %1175 = vmatpush1.msra.mxu0 %v559
      %1176 = vmatprep.subr.mxu0 %v563
      %1177 = vmatpush1.msra.mxu0 %v562
      %1178 = vmatprep.subr.mxu0 %v566
      %1179 = vmatpush1.msra.mxu0 %v565
      %1180 = vmatprep.subr.mxu0 %v569
      %1181 = vmatpush1.msra.mxu0 %v568
      %1182 = vmatprep.subr.mxu0 %v572
      %1183 = vmatpush1.msra.mxu0 %v571
      %1184 = vmatprep.subr.mxu0 %v575
      %1185 = vmatpush1.msra.mxu0 %v574
      %1186 = vmatprep.subr.mxu0 %v578
      %1187 = vmatpush1.msra.mxu0 %v577
      %1188 = vmatprep.subr.mxu0 %v581
      %1189 = vmatpush1.msra.mxu0 %v580
      %1190 = vmatprep.subr.mxu0 %v584
      %1191 = vmatpush1.msra.mxu0 %v583
      %1192 = vmatprep.subr.mxu0 %v587
      %1193 = vmatpush1.msra.mxu0 %v586
      %1194 = vmatprep.subr.mxu0 %v590
      %1195 = vmatpush1.msra.mxu0 %v589
      %1196 = vmatprep.subr.mxu0 %v593
      %1197 = vmatpush1.msra.mxu0 %v592
      %1198 = vmatprep.subr.mxu0 %v596
      %1199 = vmatpush1.msra.mxu0 %v595
      %1200 = vmatprep.subr.mxu0 %v599
      %1201 = vmatpush1.msra.mxu0 %v598
      %1202 = vmatprep.subr.mxu0 %v602
      %1203 = vmatpush1.msra.mxu0 %v601
      %1204 = vmatprep.subr.mxu0 %v605
      %1205 = vmatpush1.msra.mxu0 %v604
      %1206 = vmatprep.subr.mxu0 %v608
      %1207 = vmatpush1.msra.mxu0 %v607
      %1208 = vmatprep.subr.mxu0 %v611
      %1209 = vmatpush1.msra.mxu0 %v610
      %1210 = vmatprep.subr.mxu0 %v614
      %1211 = vmatpush1.msra.mxu0 %v613
      %1212 = vmatprep.subr.mxu0 %v617
      %1213 = vmatpush1.msra.mxu0 %v616
      %1214 = vmatprep.subr.mxu0 %v620
      %1215 = vmatpush1.msra.mxu0 %v619
      %1216 = vmatprep.subr.mxu0 %v623
      %1217 = vmatpush1.msra.mxu0 %v622
      %1218 = vmatprep.subr.mxu0 %v626
      %1219 = vmatpush1.msra.mxu0 %v625
      %1220 = vmatprep.mubr.f32.mxu0 %v437
      %1221 = vmatmul.mubr.f32.gmra.mrb[0].mxu0 %v436
      %v1222 = vpop.f32.mrb[0].mxu0
      %v1223 = vadd.f32 %v1119, %v1222
      %v1224 = vpop.f32.mrb[0].mxu0
      %v1225 = vadd.f32 %v1119, %v1224
      %1226 = vmatprep.mubr.f32.mxu0 %v449
      %1227 = vmatmul.mubr.f32.gmra.mrb[0].mxu0 %v448
      %v1228 = vpop.f32.mrb[0].mxu0
      %v1229 = vadd.f32 %v1124, %v1228
      %v1230 = vpop.f32.mrb[0].mxu0
      %v1231 = vadd.f32 %v1124, %v1230
      %1232 = vmatprep.mubr.f32.mxu0 %v461
      %1233 = vmatmul.mubr.f32.gmra.mrb[0].mxu0 %v460
      %v1234 = vpop.f32.mrb[0].mxu0
      %v1235 = vadd.f32 %v1129, %v1234
      %v1236 = vpop.f32.mrb[0].mxu0
      %v1237 = vadd.f32 %v1129, %v1236
      %1238 = vmatprep.mubr.f32.mxu0 %v473
      %1239 = vmatmul.mubr.f32.gmra.mrb[0].mxu0 %v472
      %v1240 = vpop.f32.mrb[0].mxu0
      %v1241 = vadd.f32 %v1134, %v1240
      %v1242 = vpop.f32.mrb[0].mxu0
      %v1243 = vadd.f32 %v1134, %v1242
      %1244 = vmatprep.mubr.f32.mxu0 %v485
      %1245 = vmatmul.mubr.f32.gmra.mrb[0].mxu0 %v484
      %v1246 = vpop.f32.mrb[0].mxu0
      %v1247 = vadd.f32 %v1139, %v1246
      %v1248 = vpop.f32.mrb[0].mxu0
      %v1249 = vadd.f32 %v1139, %v1248
      %1250 = vmatprep.mubr.f32.mxu0 %v497
      %1251 = vmatmul.mubr.f32.gmra.mrb[0].mxu0 %v496
      %v1252 = vpop.f32.mrb[0].mxu0
      %v1253 = vadd.f32 %v1144, %v1252
      %v1254 = vpop.f32.mrb[0].mxu0
      %v1255 = vadd.f32 %v1144, %v1254
      %1256 = vmatprep.mubr.f32.mxu0 %v509
      %1257 = vmatmul.mubr.f32.gmra.mrb[0].mxu0 %v508
      %v1258 = vpop.f32.mrb[0].mxu0
      %v1259 = vadd.f32 %v1149, %v1258
      %v1260 = vpop.f32.mrb[0].mxu0
      %v1261 = vadd.f32 %v1149, %v1260
      %1262 = vmatprep.mubr.f32.mxu0 %v521
      %1263 = vmatmul.mubr.f32.gmra.mrb[0].mxu0 %v520
      %v1264 = vpop.f32.mrb[0].mxu0
      %v1265 = vadd.f32 %v1154, %v1264
      %v1266 = vpop.f32.mrb[0].mxu0
      %v1267 = vadd.f32 %v1154, %v1266
      %1268 = vdwg.mxu0
      %1269 = vmatprep.subr.mxu0 %v629
      %1270 = vmatpush1.msra.mxu0 %v628
      %1271 = vmatprep.subr.mxu0 %v632
      %1272 = vmatpush1.msra.mxu0 %v631
      %1273 = vmatprep.subr.mxu0 %v635
      %1274 = vmatpush1.msra.mxu0 %v634
      %1275 = vmatprep.subr.mxu0 %v638
      %1276 = vmatpush1.msra.mxu0 %v637
      %1277 = vmatprep.subr.mxu0 %v641
      %1278 = vmatpush1.msra.mxu0 %v640
      %1279 = vmatprep.subr.mxu0 %v644
      %1280 = vmatpush1.msra.mxu0 %v643
      %1281 = vmatprep.subr.mxu0 %v647
      %1282 = vmatpush1.msra.mxu0 %v646
      %1283 = vmatprep.subr.mxu0 %v650
      %1284 = vmatpush1.msra.mxu0 %v649
      %1285 = vmatprep.subr.mxu0 %v653
      %1286 = vmatpush1.msra.mxu0 %v652
      %1287 = vmatprep.subr.mxu0 %v656
      %1288 = vmatpush1.msra.mxu0 %v655
      %1289 = vmatprep.subr.mxu0 %v659
      %1290 = vmatpush1.msra.mxu0 %v658
      %1291 = vmatprep.subr.mxu0 %v662
      %1292 = vmatpush1.msra.mxu0 %v661
      %1293 = vmatprep.subr.mxu0 %v665
      %1294 = vmatpush1.msra.mxu0 %v664
      %1295 = vmatprep.subr.mxu0 %v668
      %1296 = vmatpush1.msra.mxu0 %v667
      %1297 = vmatprep.subr.mxu0 %v671
      %1298 = vmatpush1.msra.mxu0 %v670
      %1299 = vmatprep.subr.mxu0 %v674
      %1300 = vmatpush1.msra.mxu0 %v673
      %1301 = vmatprep.subr.mxu0 %v677
      %1302 = vmatpush1.msra.mxu0 %v676
      %1303 = vmatprep.subr.mxu0 %v680
      %1304 = vmatpush1.msra.mxu0 %v679
      %1305 = vmatprep.subr.mxu0 %v683
      %1306 = vmatpush1.msra.mxu0 %v682
      %1307 = vmatprep.subr.mxu0 %v686
      %1308 = vmatpush1.msra.mxu0 %v685
      %1309 = vmatprep.subr.mxu0 %v689
      %1310 = vmatpush1.msra.mxu0 %v688
      %1311 = vmatprep.subr.mxu0 %v692
      %1312 = vmatpush1.msra.mxu0 %v691
      %1313 = vmatprep.subr.mxu0 %v695
      %1314 = vmatpush1.msra.mxu0 %v694
      %1315 = vmatprep.subr.mxu0 %v698
      %1316 = vmatpush1.msra.mxu0 %v697
      %1317 = vmatprep.subr.mxu0 %v701
      %1318 = vmatpush1.msra.mxu0 %v700
      %1319 = vmatprep.subr.mxu0 %v704
      %1320 = vmatpush1.msra.mxu0 %v703
      %1321 = vmatprep.subr.mxu0 %v707
      %1322 = vmatpush1.msra.mxu0 %v706
      %1323 = vmatprep.subr.mxu0 %v710
      %1324 = vmatpush1.msra.mxu0 %v709
      %1325 = vmatprep.subr.mxu0 %v713
      %1326 = vmatpush1.msra.mxu0 %v712
      %1327 = vmatprep.subr.mxu0 %v716
      %1328 = vmatpush1.msra.mxu0 %v715
      %1329 = vmatprep.subr.mxu0 %v719
      %1330 = vmatpush1.msra.mxu0 %v718
      %1331 = vmatprep.subr.mxu0 %v722
      %1332 = vmatpush1.msra.mxu0 %v721
      %1333 = vmatprep.mubr.f32.mxu0 %v439
      %1334 = vmatmul.mubr.f32.gmra.mrb[0].mxu0 %v438
      %v1335 = vpop.f32.mrb[0].mxu0
      %v1336 = vadd.f32 %v1223, %v1335
      %v1337 = vpop.f32.mrb[0].mxu0
      %v1338 = vadd.f32 %v1225, %v1337
      %1339 = vmatprep.mubr.f32.mxu0 %v451
      %1340 = vmatmul.mubr.f32.gmra.mrb[0].mxu0 %v450
      %v1341 = vpop.f32.mrb[0].mxu0
      %v1342 = vadd.f32 %v1229, %v1341
      %v1343 = vpop.f32.mrb[0].mxu0
      %v1344 = vadd.f32 %v1231, %v1343
      %1345 = vmatprep.mubr.f32.mxu0 %v463
      %1346 = vmatmul.mubr.f32.gmra.mrb[0].mxu0 %v462
      %v1347 = vpop.f32.mrb[0].mxu0
      %v1348 = vadd.f32 %v1235, %v1347
      %v1349 = vpop.f32.mrb[0].mxu0
      %v1350 = vadd.f32 %v1237, %v1349
      %1351 = vmatprep.mubr.f32.mxu0 %v475
      %1352 = vmatmul.mubr.f32.gmra.mrb[0].mxu0 %v474
      %v1353 = vpop.f32.mrb[0].mxu0
      %v1354 = vadd.f32 %v1241, %v1353
      %v1355 = vpop.f32.mrb[0].mxu0
      %v1356 = vadd.f32 %v1243, %v1355
      %1357 = vmatprep.mubr.f32.mxu0 %v487
      %1358 = vmatmul.mubr.f32.gmra.mrb[0].mxu0 %v486
      %v1359 = vpop.f32.mrb[0].mxu0
      %v1360 = vadd.f32 %v1247, %v1359
      %v1361 = vpop.f32.mrb[0].mxu0
      %v1362 = vadd.f32 %v1249, %v1361
      %1363 = vmatprep.mubr.f32.mxu0 %v499
      %1364 = vmatmul.mubr.f32.gmra.mrb[0].mxu0 %v498
      %v1365 = vpop.f32.mrb[0].mxu0
      %v1366 = vadd.f32 %v1253, %v1365
      %v1367 = vpop.f32.mrb[0].mxu0
      %v1368 = vadd.f32 %v1255, %v1367
      %1369 = vmatprep.mubr.f32.mxu0 %v511
      %1370 = vmatmul.mubr.f32.gmra.mrb[0].mxu0 %v510
      %v1371 = vpop.f32.mrb[0].mxu0
      %v1372 = vadd.f32 %v1259, %v1371
      %v1373 = vpop.f32.mrb[0].mxu0
      %v1374 = vadd.f32 %v1261, %v1373
      %1375 = vmatprep.mubr.f32.mxu0 %v523
      %1376 = vmatmul.mubr.f32.gmra.mrb[0].mxu0 %v522
      %v1377 = vpop.f32.mrb[0].mxu0
      %v1378 = vadd.f32 %v1265, %v1377
      %v1379 = vpop.f32.mrb[0].mxu0
      %v1380 = vadd.f32 %v1267, %v1379
      %1381 = vdwg.mxu0
      %1382 = vmatprep.subr.mxu0 %v725
      %1383 = vmatpush1.msra.mxu0 %v724
      %1384 = vmatprep.subr.mxu0 %v728
      %1385 = vmatpush1.msra.mxu0 %v727
      %1386 = vmatprep.subr.mxu0 %v731
      %1387 = vmatpush1.msra.mxu0 %v730
      %1388 = vmatprep.subr.mxu0 %v734
      %1389 = vmatpush1.msra.mxu0 %v733
      %1390 = vmatprep.subr.mxu0 %v737
      %1391 = vmatpush1.msra.mxu0 %v736
      %1392 = vmatprep.subr.mxu0 %v740
      %1393 = vmatpush1.msra.mxu0 %v739
      %1394 = vmatprep.subr.mxu0 %v743
      %1395 = vmatpush1.msra.mxu0 %v742
      %1396 = vmatprep.subr.mxu0 %v746
      %1397 = vmatpush1.msra.mxu0 %v745
      %1398 = vmatprep.subr.mxu0 %v749
      %1399 = vmatpush1.msra.mxu0 %v748
      %1400 = vmatprep.subr.mxu0 %v752
      %1401 = vmatpush1.msra.mxu0 %v751
      %1402 = vmatprep.subr.mxu0 %v755
      %1403 = vmatpush1.msra.mxu0 %v754
      %1404 = vmatprep.subr.mxu0 %v758
      %1405 = vmatpush1.msra.mxu0 %v757
      %1406 = vmatprep.subr.mxu0 %v761
      %1407 = vmatpush1.msra.mxu0 %v760
      %1408 = vmatprep.subr.mxu0 %v764
      %1409 = vmatpush1.msra.mxu0 %v763
      %1410 = vmatprep.subr.mxu0 %v767
      %1411 = vmatpush1.msra.mxu0 %v766
      %1412 = vmatprep.subr.mxu0 %v770
      %1413 = vmatpush1.msra.mxu0 %v769
      %1414 = vmatprep.subr.mxu0 %v773
      %1415 = vmatpush1.msra.mxu0 %v772
      %1416 = vmatprep.subr.mxu0 %v776
      %1417 = vmatpush1.msra.mxu0 %v775
      %1418 = vmatprep.subr.mxu0 %v779
      %1419 = vmatpush1.msra.mxu0 %v778
      %1420 = vmatprep.subr.mxu0 %v782
      %1421 = vmatpush1.msra.mxu0 %v781
      %1422 = vmatprep.subr.mxu0 %v785
      %1423 = vmatpush1.msra.mxu0 %v784
      %1424 = vmatprep.subr.mxu0 %v788
      %1425 = vmatpush1.msra.mxu0 %v787
      %1426 = vmatprep.subr.mxu0 %v791
      %1427 = vmatpush1.msra.mxu0 %v790
      %1428 = vmatprep.subr.mxu0 %v794
      %1429 = vmatpush1.msra.mxu0 %v793
      %1430 = vmatprep.subr.mxu0 %v797
      %1431 = vmatpush1.msra.mxu0 %v796
      %1432 = vmatprep.subr.mxu0 %v800
      %1433 = vmatpush1.msra.mxu0 %v799
      %1434 = vmatprep.subr.mxu0 %v803
      %1435 = vmatpush1.msra.mxu0 %v802
      %1436 = vmatprep.subr.mxu0 %v806
      %1437 = vmatpush1.msra.mxu0 %v805
      %1438 = vmatprep.subr.mxu0 %v809
      %1439 = vmatpush1.msra.mxu0 %v808
      %1440 = vmatprep.subr.mxu0 %v812
      %1441 = vmatpush1.msra.mxu0 %v811
      %1442 = vmatprep.subr.mxu0 %v815
      %1443 = vmatpush1.msra.mxu0 %v814
      %1444 = vmatprep.subr.mxu0 %v818
      %1445 = vmatpush1.msra.mxu0 %v817
      %1446 = vmatprep.mubr.f32.mxu0 %v441
      %1447 = vmatmul.mubr.f32.gmra.mrb[0].mxu0 %v440
      %v1448 = vpop.f32.mrb[0].mxu0
      %v1449 = vadd.f32 %v1336, %v1448
      %v1450 = vpop.f32.mrb[0].mxu0
      %v1451 = vadd.f32 %v1338, %v1450
      %1452 = vmatprep.mubr.f32.mxu0 %v453
      %1453 = vmatmul.mubr.f32.gmra.mrb[0].mxu0 %v452
      %v1454 = vpop.f32.mrb[0].mxu0
      %v1455 = vadd.f32 %v1342, %v1454
      %v1456 = vpop.f32.mrb[0].mxu0
      %v1457 = vadd.f32 %v1344, %v1456
      %1458 = vmatprep.mubr.f32.mxu0 %v465
      %1459 = vmatmul.mubr.f32.gmra.mrb[0].mxu0 %v464
      %v1460 = vpop.f32.mrb[0].mxu0
      %v1461 = vadd.f32 %v1348, %v1460
      %v1462 = vpop.f32.mrb[0].mxu0
      %v1463 = vadd.f32 %v1350, %v1462
      %1464 = vmatprep.mubr.f32.mxu0 %v477
      %1465 = vmatmul.mubr.f32.gmra.mrb[0].mxu0 %v476
      %v1466 = vpop.f32.mrb[0].mxu0
      %v1467 = vadd.f32 %v1354, %v1466
      %v1468 = vpop.f32.mrb[0].mxu0
      %v1469 = vadd.f32 %v1356, %v1468
      %1470 = vmatprep.mubr.f32.mxu0 %v489
      %1471 = vmatmul.mubr.f32.gmra.mrb[0].mxu0 %v488
      %v1472 = vpop.f32.mrb[0].mxu0
      %v1473 = vadd.f32 %v1360, %v1472
      %v1474 = vpop.f32.mrb[0].mxu0
      %v1475 = vadd.f32 %v1362, %v1474
      %1476 = vmatprep.mubr.f32.mxu0 %v501
      %1477 = vmatmul.mubr.f32.gmra.mrb[0].mxu0 %v500
      %v1478 = vpop.f32.mrb[0].mxu0
      %v1479 = vadd.f32 %v1366, %v1478
      %v1480 = vpop.f32.mrb[0].mxu0
      %v1481 = vadd.f32 %v1368, %v1480
      %1482 = vmatprep.mubr.f32.mxu0 %v513
      %1483 = vmatmul.mubr.f32.gmra.mrb[0].mxu0 %v512
      %v1484 = vpop.f32.mrb[0].mxu0
      %v1485 = vadd.f32 %v1372, %v1484
      %v1486 = vpop.f32.mrb[0].mxu0
      %v1487 = vadd.f32 %v1374, %v1486
      %1488 = vmatprep.mubr.f32.mxu0 %v525
      %1489 = vmatmul.mubr.f32.gmra.mrb[0].mxu0 %v524
      %v1490 = vpop.f32.mrb[0].mxu0
      %v1491 = vadd.f32 %v1378, %v1490
      %v1492 = vpop.f32.mrb[0].mxu0
      %v1493 = vadd.f32 %v1380, %v1492
      %1494 = vdwg.mxu0
      %1495 = vmatprep.subr.mxu0 %v821
      %1496 = vmatpush1.msra.mxu0 %v820
      %1497 = vmatprep.subr.mxu0 %v824
      %1498 = vmatpush1.msra.mxu0 %v823
      %1499 = vmatprep.subr.mxu0 %v827
      %1500 = vmatpush1.msra.mxu0 %v826
      %1501 = vmatprep.subr.mxu0 %v830
      %1502 = vmatpush1.msra.mxu0 %v829
      %1503 = vmatprep.subr.mxu0 %v833
      %1504 = vmatpush1.msra.mxu0 %v832
      %1505 = vmatprep.subr.mxu0 %v836
      %1506 = vmatpush1.msra.mxu0 %v835
      %1507 = vmatprep.subr.mxu0 %v839
      %1508 = vmatpush1.msra.mxu0 %v838
      %1509 = vmatprep.subr.mxu0 %v842
      %1510 = vmatpush1.msra.mxu0 %v841
      %1511 = vmatprep.subr.mxu0 %v845
      %1512 = vmatpush1.msra.mxu0 %v844
      %1513 = vmatprep.subr.mxu0 %v848
      %1514 = vmatpush1.msra.mxu0 %v847
      %1515 = vmatprep.subr.mxu0 %v851
      %1516 = vmatpush1.msra.mxu0 %v850
      %1517 = vmatprep.subr.mxu0 %v854
      %1518 = vmatpush1.msra.mxu0 %v853
      %1519 = vmatprep.subr.mxu0 %v857
      %1520 = vmatpush1.msra.mxu0 %v856
      %1521 = vmatprep.subr.mxu0 %v860
      %1522 = vmatpush1.msra.mxu0 %v859
      %1523 = vmatprep.subr.mxu0 %v863
      %1524 = vmatpush1.msra.mxu0 %v862
      %1525 = vmatprep.subr.mxu0 %v866
      %1526 = vmatpush1.msra.mxu0 %v865
      %1527 = vmatprep.subr.mxu0 %v869
      %1528 = vmatpush1.msra.mxu0 %v868
      %1529 = vmatprep.subr.mxu0 %v872
      %1530 = vmatpush1.msra.mxu0 %v871
      %1531 = vmatprep.subr.mxu0 %v875
      %1532 = vmatpush1.msra.mxu0 %v874
      %1533 = vmatprep.subr.mxu0 %v878
      %1534 = vmatpush1.msra.mxu0 %v877
      %1535 = vmatprep.subr.mxu0 %v881
      %1536 = vmatpush1.msra.mxu0 %v880
      %1537 = vmatprep.subr.mxu0 %v884
      %1538 = vmatpush1.msra.mxu0 %v883
      %1539 = vmatprep.subr.mxu0 %v887
      %1540 = vmatpush1.msra.mxu0 %v886
      %1541 = vmatprep.subr.mxu0 %v890
      %1542 = vmatpush1.msra.mxu0 %v889
      %1543 = vmatprep.subr.mxu0 %v893
      %1544 = vmatpush1.msra.mxu0 %v892
      %1545 = vmatprep.subr.mxu0 %v896
      %1546 = vmatpush1.msra.mxu0 %v895
      %1547 = vmatprep.subr.mxu0 %v899
      %1548 = vmatpush1.msra.mxu0 %v898
      %1549 = vmatprep.subr.mxu0 %v902
      %1550 = vmatpush1.msra.mxu0 %v901
      %1551 = vmatprep.subr.mxu0 %v905
      %1552 = vmatpush1.msra.mxu0 %v904
      %1553 = vmatprep.subr.mxu0 %v908
      %1554 = vmatpush1.msra.mxu0 %v907
      %1555 = vmatprep.subr.mxu0 %v911
      %1556 = vmatpush1.msra.mxu0 %v910
      %1557 = vmatprep.subr.mxu0 %v914
      %1558 = vmatpush1.msra.mxu0 %v913
      %1559 = vmatprep.mubr.f32.mxu0 %v443
      %1560 = vmatmul.mubr.f32.gmra.mrb[0].mxu0 %v442
      %v1561 = vpop.f32.mrb[0].mxu0
      %v1562 = vadd.f32 %v1449, %v1561
      %v1563 = vpop.f32.mrb[0].mxu0
      %v1564 = vadd.f32 %v1451, %v1563
      %1565 = vmatprep.mubr.f32.mxu0 %v455
      %1566 = vmatmul.mubr.f32.gmra.mrb[0].mxu0 %v454
      %v1567 = vpop.f32.mrb[0].mxu0
      %v1568 = vadd.f32 %v1455, %v1567
      %v1569 = vpop.f32.mrb[0].mxu0
      %v1570 = vadd.f32 %v1457, %v1569
      %1571 = vmatprep.mubr.f32.mxu0 %v467
      %1572 = vmatmul.mubr.f32.gmra.mrb[0].mxu0 %v466
      %v1573 = vpop.f32.mrb[0].mxu0
      %v1574 = vadd.f32 %v1461, %v1573
      %v1575 = vpop.f32.mrb[0].mxu0
      %v1576 = vadd.f32 %v1463, %v1575
      %1577 = vmatprep.mubr.f32.mxu0 %v479
      %1578 = vmatmul.mubr.f32.gmra.mrb[0].mxu0 %v478
      %v1579 = vpop.f32.mrb[0].mxu0
      %v1580 = vadd.f32 %v1467, %v1579
      %v1581 = vpop.f32.mrb[0].mxu0
      %v1582 = vadd.f32 %v1469, %v1581
      %1583 = vmatprep.mubr.f32.mxu0 %v491
      %1584 = vmatmul.mubr.f32.gmra.mrb[0].mxu0 %v490
      %v1585 = vpop.f32.mrb[0].mxu0
      %v1586 = vadd.f32 %v1473, %v1585
      %v1587 = vpop.f32.mrb[0].mxu0
      %v1588 = vadd.f32 %v1475, %v1587
      %1589 = vmatprep.mubr.f32.mxu0 %v503
      %1590 = vmatmul.mubr.f32.gmra.mrb[0].mxu0 %v502
      %v1591 = vpop.f32.mrb[0].mxu0
      %v1592 = vadd.f32 %v1479, %v1591
      %v1593 = vpop.f32.mrb[0].mxu0
      %v1594 = vadd.f32 %v1481, %v1593
      %1595 = vmatprep.mubr.f32.mxu0 %v515
      %1596 = vmatmul.mubr.f32.gmra.mrb[0].mxu0 %v514
      %v1597 = vpop.f32.mrb[0].mxu0
      %v1598 = vadd.f32 %v1485, %v1597
      %v1599 = vpop.f32.mrb[0].mxu0
      %v1600 = vadd.f32 %v1487, %v1599
      %1601 = vmatprep.mubr.f32.mxu0 %v527
      %1602 = vmatmul.mubr.f32.gmra.mrb[0].mxu0 %v526
      %v1603 = vpop.f32.mrb[0].mxu0
      %v1604 = vadd.f32 %v1491, %v1603
      %v1605 = vpop.f32.mrb[0].mxu0
      %v1606 = vadd.f32 %v1493, %v1605
      %1607 = vdwg.mxu0
      %1608 = vmatprep.subr.mxu0 %v917
      %1609 = vmatpush1.msra.mxu0 %v916
      %1610 = vmatprep.subr.mxu0 %v920
      %1611 = vmatpush1.msra.mxu0 %v919
      %1612 = vmatprep.subr.mxu0 %v923
      %1613 = vmatpush1.msra.mxu0 %v922
      %1614 = vmatprep.subr.mxu0 %v926
      %1615 = vmatpush1.msra.mxu0 %v925
      %1616 = vmatprep.subr.mxu0 %v929
      %1617 = vmatpush1.msra.mxu0 %v928
      %1618 = vmatprep.subr.mxu0 %v932
      %1619 = vmatpush1.msra.mxu0 %v931
      %1620 = vmatprep.subr.mxu0 %v935
      %1621 = vmatpush1.msra.mxu0 %v934
      %1622 = vmatprep.subr.mxu0 %v938
      %1623 = vmatpush1.msra.mxu0 %v937
      %1624 = vmatprep.subr.mxu0 %v941
      %1625 = vmatpush1.msra.mxu0 %v940
      %1626 = vmatprep.subr.mxu0 %v944
      %1627 = vmatpush1.msra.mxu0 %v943
      %1628 = vmatprep.subr.mxu0 %v947
      %1629 = vmatpush1.msra.mxu0 %v946
      %1630 = vmatprep.subr.mxu0 %v950
      %1631 = vmatpush1.msra.mxu0 %v949
      %1632 = vmatprep.subr.mxu0 %v953
      %1633 = vmatpush1.msra.mxu0 %v952
      %1634 = vmatprep.subr.mxu0 %v956
      %1635 = vmatpush1.msra.mxu0 %v955
      %1636 = vmatprep.subr.mxu0 %v959
      %1637 = vmatpush1.msra.mxu0 %v958
      %1638 = vmatprep.subr.mxu0 %v962
      %1639 = vmatpush1.msra.mxu0 %v961
      %1640 = vmatprep.subr.mxu0 %v965
      %1641 = vmatpush1.msra.mxu0 %v964
      %1642 = vmatprep.subr.mxu0 %v968
      %1643 = vmatpush1.msra.mxu0 %v967
      %1644 = vmatprep.subr.mxu0 %v971
      %1645 = vmatpush1.msra.mxu0 %v970
      %1646 = vmatprep.subr.mxu0 %v974
      %1647 = vmatpush1.msra.mxu0 %v973
      %1648 = vmatprep.subr.mxu0 %v977
      %1649 = vmatpush1.msra.mxu0 %v976
      %1650 = vmatprep.subr.mxu0 %v980
      %1651 = vmatpush1.msra.mxu0 %v979
      %1652 = vmatprep.subr.mxu0 %v983
      %1653 = vmatpush1.msra.mxu0 %v982
      %1654 = vmatprep.subr.mxu0 %v986
      %1655 = vmatpush1.msra.mxu0 %v985
      %1656 = vmatprep.subr.mxu0 %v989
      %1657 = vmatpush1.msra.mxu0 %v988
      %1658 = vmatprep.subr.mxu0 %v992
      %1659 = vmatpush1.msra.mxu0 %v991
      %1660 = vmatprep.subr.mxu0 %v995
      %1661 = vmatpush1.msra.mxu0 %v994
      %1662 = vmatprep.subr.mxu0 %v998
      %1663 = vmatpush1.msra.mxu0 %v997
      %1664 = vmatprep.subr.mxu0 %v1001
      %1665 = vmatpush1.msra.mxu0 %v1000
      %1666 = vmatprep.subr.mxu0 %v1004
      %1667 = vmatpush1.msra.mxu0 %v1003
      %1668 = vmatprep.subr.mxu0 %v1007
      %1669 = vmatpush1.msra.mxu0 %v1006
      %1670 = vmatprep.subr.mxu0 %v1010
      %1671 = vmatpush1.msra.mxu0 %v1009
      %1672 = vmatprep.mubr.f32.mxu0 %v445
      %1673 = vmatmul.mubr.f32.gmra.mrb[0].mxu0 %v444
      %v1674 = vpop.f32.mrb[0].mxu0
      %v1675 = vadd.f32 %v1562, %v1674
      %v1676 = vpop.f32.mrb[0].mxu0
      %v1677 = vadd.f32 %v1564, %v1676
      %1678 = vmatprep.mubr.f32.mxu0 %v457
      %1679 = vmatmul.mubr.f32.gmra.mrb[0].mxu0 %v456
      %v1680 = vpop.f32.mrb[0].mxu0
      %v1681 = vadd.f32 %v1568, %v1680
      %v1682 = vpop.f32.mrb[0].mxu0
      %v1683 = vadd.f32 %v1570, %v1682
      %1684 = vmatprep.mubr.f32.mxu0 %v469
      %1685 = vmatmul.mubr.f32.gmra.mrb[0].mxu0 %v468
      %v1686 = vpop.f32.mrb[0].mxu0
      %v1687 = vadd.f32 %v1574, %v1686
      %v1688 = vpop.f32.mrb[0].mxu0
      %v1689 = vadd.f32 %v1576, %v1688
      %1690 = vmatprep.mubr.f32.mxu0 %v481
      %1691 = vmatmul.mubr.f32.gmra.mrb[0].mxu0 %v480
      %v1692 = vpop.f32.mrb[0].mxu0
      %v1693 = vadd.f32 %v1580, %v1692
      %v1694 = vpop.f32.mrb[0].mxu0
      %v1695 = vadd.f32 %v1582, %v1694
      %1696 = vmatprep.mubr.f32.mxu0 %v493
      %1697 = vmatmul.mubr.f32.gmra.mrb[0].mxu0 %v492
      %v1698 = vpop.f32.mrb[0].mxu0
      %v1699 = vadd.f32 %v1586, %v1698
      %v1700 = vpop.f32.mrb[0].mxu0
      %v1701 = vadd.f32 %v1588, %v1700
      %1702 = vmatprep.mubr.f32.mxu0 %v505
      %1703 = vmatmul.mubr.f32.gmra.mrb[0].mxu0 %v504
      %v1704 = vpop.f32.mrb[0].mxu0
      %v1705 = vadd.f32 %v1592, %v1704
      %v1706 = vpop.f32.mrb[0].mxu0
      %v1707 = vadd.f32 %v1594, %v1706
      %1708 = vmatprep.mubr.f32.mxu0 %v517
      %1709 = vmatmul.mubr.f32.gmra.mrb[0].mxu0 %v516
      %v1710 = vpop.f32.mrb[0].mxu0
      %v1711 = vadd.f32 %v1598, %v1710
      %v1712 = vpop.f32.mrb[0].mxu0
      %v1713 = vadd.f32 %v1600, %v1712
      %1714 = vmatprep.mubr.f32.mxu0 %v529
      %1715 = vmatmul.mubr.f32.gmra.mrb[0].mxu0 %v528
      %v1716 = vpop.f32.mrb[0].mxu0
      %v1717 = vadd.f32 %v1604, %v1716
      %v1718 = vpop.f32.mrb[0].mxu0
      %v1719 = vadd.f32 %v1606, %v1718
      %1720 = vdwg.mxu0
      %1721 = vmatprep.subr.mxu0 %v1013
      %1722 = vmatpush1.msra.mxu0 %v1012
      %1723 = vmatprep.subr.mxu0 %v1016
      %1724 = vmatpush1.msra.mxu0 %v1015
      %1725 = vmatprep.subr.mxu0 %v1019
      %1726 = vmatpush1.msra.mxu0 %v1018
      %1727 = vmatprep.subr.mxu0 %v1022
      %1728 = vmatpush1.msra.mxu0 %v1021
      %1729 = vmatprep.subr.mxu0 %v1025
      %1730 = vmatpush1.msra.mxu0 %v1024
      %1731 = vmatprep.subr.mxu0 %v1028
      %1732 = vmatpush1.msra.mxu0 %v1027
      %1733 = vmatprep.subr.mxu0 %v1031
      %1734 = vmatpush1.msra.mxu0 %v1030
      %1735 = vmatprep.subr.mxu0 %v1034
      %1736 = vmatpush1.msra.mxu0 %v1033
      %1737 = vmatprep.subr.mxu0 %v1037
      %1738 = vmatpush1.msra.mxu0 %v1036
      %1739 = vmatprep.subr.mxu0 %v1040
      %1740 = vmatpush1.msra.mxu0 %v1039
      %1741 = vmatprep.subr.mxu0 %v1043
      %1742 = vmatpush1.msra.mxu0 %v1042
      %1743 = vmatprep.subr.mxu0 %v1046
      %1744 = vmatpush1.msra.mxu0 %v1045
      %1745 = vmatprep.subr.mxu0 %v1049
      %1746 = vmatpush1.msra.mxu0 %v1048
      %1747 = vmatprep.subr.mxu0 %v1052
      %1748 = vmatpush1.msra.mxu0 %v1051
      %1749 = vmatprep.subr.mxu0 %v1055
      %1750 = vmatpush1.msra.mxu0 %v1054
      %1751 = vmatprep.subr.mxu0 %v1058
      %1752 = vmatpush1.msra.mxu0 %v1057
      %1753 = vmatprep.subr.mxu0 %v1061
      %1754 = vmatpush1.msra.mxu0 %v1060
      %1755 = vmatprep.subr.mxu0 %v1064
      %1756 = vmatpush1.msra.mxu0 %v1063
      %1757 = vmatprep.subr.mxu0 %v1067
      %1758 = vmatpush1.msra.mxu0 %v1066
      %1759 = vmatprep.subr.mxu0 %v1070
      %1760 = vmatpush1.msra.mxu0 %v1069
      %1761 = vmatprep.subr.mxu0 %v1073
      %1762 = vmatpush1.msra.mxu0 %v1072
      %1763 = vmatprep.subr.mxu0 %v1076
      %1764 = vmatpush1.msra.mxu0 %v1075
      %1765 = vmatprep.subr.mxu0 %v1079
      %1766 = vmatpush1.msra.mxu0 %v1078
      %1767 = vmatprep.subr.mxu0 %v1082
      %1768 = vmatpush1.msra.mxu0 %v1081
      %1769 = vmatprep.subr.mxu0 %v1085
      %1770 = vmatpush1.msra.mxu0 %v1084
      %1771 = vmatprep.subr.mxu0 %v1088
      %1772 = vmatpush1.msra.mxu0 %v1087
      %1773 = vmatprep.subr.mxu0 %v1091
      %1774 = vmatpush1.msra.mxu0 %v1090
      %1775 = vmatprep.subr.mxu0 %v1094
      %1776 = vmatpush1.msra.mxu0 %v1093
      %1777 = vmatprep.subr.mxu0 %v1097
      %1778 = vmatpush1.msra.mxu0 %v1096
      %1779 = vmatprep.subr.mxu0 %v1100
      %1780 = vmatpush1.msra.mxu0 %v1099
      %1781 = vmatprep.subr.mxu0 %v1103
      %1782 = vmatpush1.msra.mxu0 %v1102
      %1783 = vmatprep.subr.mxu0 %v1106
      %1784 = vmatpush1.msra.mxu0 %v1105
      %1785 = vmatprep.mubr.f32.mxu0 %v447
      %1786 = vmatmul.mubr.f32.gmra.mrb[0].mxu0 %v446
      %v1787 = vpop.f32.mrb[0].mxu0
      %v1788 = vadd.f32 %v1675, %v1787
      %v1789 = vpop.f32.mrb[0].mxu0
      %v1790 = vadd.f32 %v1677, %v1789
      %1791 = vmatprep.mubr.f32.mxu0 %v459
      %1792 = vmatmul.mubr.f32.gmra.mrb[0].mxu0 %v458
      %v1793 = vpop.f32.mrb[0].mxu0
      %v1794 = vadd.f32 %v1681, %v1793
      %v1795 = vpop.f32.mrb[0].mxu0
      %v1796 = vadd.f32 %v1683, %v1795
      %1797 = vmatprep.mubr.f32.mxu0 %v471
      %1798 = vmatmul.mubr.f32.gmra.mrb[0].mxu0 %v470
      %v1799 = vpop.f32.mrb[0].mxu0
      %v1800 = vadd.f32 %v1687, %v1799
      %v1801 = vpop.f32.mrb[0].mxu0
      %v1802 = vadd.f32 %v1689, %v1801
      %1803 = vmatprep.mubr.f32.mxu0 %v483
      %1804 = vmatmul.mubr.f32.gmra.mrb[0].mxu0 %v482
      %v1805 = vpop.f32.mrb[0].mxu0
      %v1806 = vadd.f32 %v1693, %v1805
      %v1807 = vpop.f32.mrb[0].mxu0
      %v1808 = vadd.f32 %v1695, %v1807
      %1809 = vmatprep.mubr.f32.mxu0 %v495
      %1810 = vmatmul.mubr.f32.gmra.mrb[0].mxu0 %v494
      %v1811 = vpop.f32.mrb[0].mxu0
      %v1812 = vadd.f32 %v1699, %v1811
      %v1813 = vpop.f32.mrb[0].mxu0
      %v1814 = vadd.f32 %v1701, %v1813
      %1815 = vmatprep.mubr.f32.mxu0 %v507
      %1816 = vmatmul.mubr.f32.gmra.mrb[0].mxu0 %v506
      %v1817 = vpop.f32.mrb[0].mxu0
      %v1818 = vadd.f32 %v1705, %v1817
      %v1819 = vpop.f32.mrb[0].mxu0
      %v1820 = vadd.f32 %v1707, %v1819
      %1821 = vmatprep.mubr.f32.mxu0 %v519
      %1822 = vmatmul.mubr.f32.gmra.mrb[0].mxu0 %v518
      %v1823 = vpop.f32.mrb[0].mxu0
      %v1824 = vadd.f32 %v1711, %v1823
      %v1825 = vpop.f32.mrb[0].mxu0
      %v1826 = vadd.f32 %v1713, %v1825
      %1827 = vmatprep.mubr.f32.mxu0 %v531
      %1828 = vmatmul.mubr.f32.gmra.mrb[0].mxu0 %v530
      %v1829 = vpop.f32.mrb[0].mxu0
      %v1830 = vadd.f32 %v1717, %v1829
      %v1831 = vpop.f32.mrb[0].mxu0
      %v1832 = vadd.f32 %v1719, %v1831
      %1833 = vdwg.mxu0
      %1834 = vmatprep.subr.mxu0 0.0
      %1835 = vmatpush1.msra.mxu0 %v534
      %1836 = vmatprep.subr.mxu0 0.0
      %1837 = vmatpush1.msra.mxu0 %v537
      %1838 = vmatprep.subr.mxu0 0.0
      %1839 = vmatpush1.msra.mxu0 %v540
      %1840 = vmatprep.subr.mxu0 0.0
      %1841 = vmatpush1.msra.mxu0 %v543
      %1842 = vmatprep.subr.mxu0 0.0
      %1843 = vmatpush1.msra.mxu0 %v546
      %1844 = vmatprep.subr.mxu0 0.0
      %1845 = vmatpush1.msra.mxu0 %v549
      %1846 = vmatprep.subr.mxu0 0.0
      %1847 = vmatpush1.msra.mxu0 %v552
      %1848 = vmatprep.subr.mxu0 0.0
      %1849 = vmatpush1.msra.mxu0 %v555
      %1850 = vmatprep.subr.mxu0 0.0
      %1851 = vmatpush1.msra.mxu0 %v558
      %1852 = vmatprep.subr.mxu0 0.0
      %1853 = vmatpush1.msra.mxu0 %v561
      %1854 = vmatprep.subr.mxu0 0.0
      %1855 = vmatpush1.msra.mxu0 %v564
      %1856 = vmatprep.subr.mxu0 0.0
      %1857 = vmatpush1.msra.mxu0 %v567
      %1858 = vmatprep.subr.mxu0 0.0
      %1859 = vmatpush1.msra.mxu0 %v570
      %1860 = vmatprep.subr.mxu0 0.0
      %1861 = vmatpush1.msra.mxu0 %v573
      %1862 = vmatprep.subr.mxu0 0.0
      %1863 = vmatpush1.msra.mxu0 %v576
      %1864 = vmatprep.subr.mxu0 0.0
      %1865 = vmatpush1.msra.mxu0 %v579
      %1866 = vmatprep.subr.mxu0 0.0
      %1867 = vmatpush1.msra.mxu0 %v582
      %1868 = vmatprep.subr.mxu0 0.0
      %1869 = vmatpush1.msra.mxu0 %v585
      %1870 = vmatprep.subr.mxu0 0.0
      %1871 = vmatpush1.msra.mxu0 %v588
      %1872 = vmatprep.subr.mxu0 0.0
      %1873 = vmatpush1.msra.mxu0 %v591
      %1874 = vmatprep.subr.mxu0 0.0
      %1875 = vmatpush1.msra.mxu0 %v594
      %1876 = vmatprep.subr.mxu0 0.0
      %1877 = vmatpush1.msra.mxu0 %v597
      %1878 = vmatprep.subr.mxu0 0.0
      %1879 = vmatpush1.msra.mxu0 %v600
      %1880 = vmatprep.subr.mxu0 0.0
      %1881 = vmatpush1.msra.mxu0 %v603
      %1882 = vmatprep.subr.mxu0 0.0
      %1883 = vmatpush1.msra.mxu0 %v606
      %1884 = vmatprep.subr.mxu0 0.0
      %1885 = vmatpush1.msra.mxu0 %v609
      %1886 = vmatprep.subr.mxu0 0.0
      %1887 = vmatpush1.msra.mxu0 %v612
      %1888 = vmatprep.subr.mxu0 0.0
      %1889 = vmatpush1.msra.mxu0 %v615
      %1890 = vmatprep.subr.mxu0 0.0
      %1891 = vmatpush1.msra.mxu0 %v618
      %1892 = vmatprep.subr.mxu0 0.0
      %1893 = vmatpush1.msra.mxu0 %v621
      %1894 = vmatprep.subr.mxu0 0.0
      %1895 = vmatpush1.msra.mxu0 %v624
      %1896 = vmatprep.subr.mxu0 0.0
      %1897 = vmatpush1.msra.mxu0 %v627
      %1898 = vmatprep.mubr.f32.mxu0 %v437
      %1899 = vmatmul.mubr.f32.gmra.mrb[0].mxu0 %v436
      %v1900 = vpop.f32.mrb[0].mxu0
      %v1901 = vadd.f32 %v1119, %v1900
      %v1902 = vpop.f32.mrb[0].mxu0
      %1903 = vmatprep.mubr.f32.mxu0 %v449
      %1904 = vmatmul.mubr.f32.gmra.mrb[0].mxu0 %v448
      %v1905 = vpop.f32.mrb[0].mxu0
      %v1906 = vadd.f32 %v1124, %v1905
      %v1907 = vpop.f32.mrb[0].mxu0
      %1908 = vmatprep.mubr.f32.mxu0 %v461
      %1909 = vmatmul.mubr.f32.gmra.mrb[0].mxu0 %v460
      %v1910 = vpop.f32.mrb[0].mxu0
      %v1911 = vadd.f32 %v1129, %v1910
      %v1912 = vpop.f32.mrb[0].mxu0
      %1913 = vmatprep.mubr.f32.mxu0 %v473
      %1914 = vmatmul.mubr.f32.gmra.mrb[0].mxu0 %v472
      %v1915 = vpop.f32.mrb[0].mxu0
      %v1916 = vadd.f32 %v1134, %v1915
      %v1917 = vpop.f32.mrb[0].mxu0
      %1918 = vmatprep.mubr.f32.mxu0 %v485
      %1919 = vmatmul.mubr.f32.gmra.mrb[0].mxu0 %v484
      %v1920 = vpop.f32.mrb[0].mxu0
      %v1921 = vadd.f32 %v1139, %v1920
      %v1922 = vpop.f32.mrb[0].mxu0
      %1923 = vmatprep.mubr.f32.mxu0 %v497
      %1924 = vmatmul.mubr.f32.gmra.mrb[0].mxu0 %v496
      %v1925 = vpop.f32.mrb[0].mxu0
      %v1926 = vadd.f32 %v1144, %v1925
      %v1927 = vpop.f32.mrb[0].mxu0
      %1928 = vmatprep.mubr.f32.mxu0 %v509
      %1929 = vmatmul.mubr.f32.gmra.mrb[0].mxu0 %v508
      %v1930 = vpop.f32.mrb[0].mxu0
      %v1931 = vadd.f32 %v1149, %v1930
      %v1932 = vpop.f32.mrb[0].mxu0
      %1933 = vmatprep.mubr.f32.mxu0 %v521
      %1934 = vmatmul.mubr.f32.gmra.mrb[0].mxu0 %v520
      %v1935 = vpop.f32.mrb[0].mxu0
      %v1936 = vadd.f32 %v1154, %v1935
      %v1937 = vpop.f32.mrb[0].mxu0
      %1938 = vdwg.mxu0
      %1939 = vmatprep.subr.mxu0 0.0
      %1940 = vmatpush1.msra.mxu0 %v630
      %1941 = vmatprep.subr.mxu0 0.0
      %1942 = vmatpush1.msra.mxu0 %v633
      %1943 = vmatprep.subr.mxu0 0.0
      %1944 = vmatpush1.msra.mxu0 %v636
      %1945 = vmatprep.subr.mxu0 0.0
      %1946 = vmatpush1.msra.mxu0 %v639
      %1947 = vmatprep.subr.mxu0 0.0
      %1948 = vmatpush1.msra.mxu0 %v642
      %1949 = vmatprep.subr.mxu0 0.0
      %1950 = vmatpush1.msra.mxu0 %v645
      %1951 = vmatprep.subr.mxu0 0.0
      %1952 = vmatpush1.msra.mxu0 %v648
      %1953 = vmatprep.subr.mxu0 0.0
      %1954 = vmatpush1.msra.mxu0 %v651
      %1955 = vmatprep.subr.mxu0 0.0
      %1956 = vmatpush1.msra.mxu0 %v654
      %1957 = vmatprep.subr.mxu0 0.0
      %1958 = vmatpush1.msra.mxu0 %v657
      %1959 = vmatprep.subr.mxu0 0.0
      %1960 = vmatpush1.msra.mxu0 %v660
      %1961 = vmatprep.subr.mxu0 0.0
      %1962 = vmatpush1.msra.mxu0 %v663
      %1963 = vmatprep.subr.mxu0 0.0
      %1964 = vmatpush1.msra.mxu0 %v666
      %1965 = vmatprep.subr.mxu0 0.0
      %1966 = vmatpush1.msra.mxu0 %v669
      %1967 = vmatprep.subr.mxu0 0.0
      %1968 = vmatpush1.msra.mxu0 %v672
      %1969 = vmatprep.subr.mxu0 0.0
      %1970 = vmatpush1.msra.mxu0 %v675
      %1971 = vmatprep.subr.mxu0 0.0
      %1972 = vmatpush1.msra.mxu0 %v678
      %1973 = vmatprep.subr.mxu0 0.0
      %1974 = vmatpush1.msra.mxu0 %v681
      %1975 = vmatprep.subr.mxu0 0.0
      %1976 = vmatpush1.msra.mxu0 %v684
      %1977 = vmatprep.subr.mxu0 0.0
      %1978 = vmatpush1.msra.mxu0 %v687
      %1979 = vmatprep.subr.mxu0 0.0
      %1980 = vmatpush1.msra.mxu0 %v690
      %1981 = vmatprep.subr.mxu0 0.0
      %1982 = vmatpush1.msra.mxu0 %v693
      %1983 = vmatprep.subr.mxu0 0.0
      %1984 = vmatpush1.msra.mxu0 %v696
      %1985 = vmatprep.subr.mxu0 0.0
      %1986 = vmatpush1.msra.mxu0 %v699
      %1987 = vmatprep.subr.mxu0 0.0
      %1988 = vmatpush1.msra.mxu0 %v702
      %1989 = vmatprep.subr.mxu0 0.0
      %1990 = vmatpush1.msra.mxu0 %v705
      %1991 = vmatprep.subr.mxu0 0.0
      %1992 = vmatpush1.msra.mxu0 %v708
      %1993 = vmatprep.subr.mxu0 0.0
      %1994 = vmatpush1.msra.mxu0 %v711
      %1995 = vmatprep.subr.mxu0 0.0
      %1996 = vmatpush1.msra.mxu0 %v714
      %1997 = vmatprep.subr.mxu0 0.0
      %1998 = vmatpush1.msra.mxu0 %v717
      %1999 = vmatprep.subr.mxu0 0.0
      %2000 = vmatpush1.msra.mxu0 %v720
      %2001 = vmatprep.subr.mxu0 0.0
      %2002 = vmatpush1.msra.mxu0 %v723
      %2003 = vmatprep.mubr.f32.mxu0 %v439
      %2004 = vmatmul.mubr.f32.gmra.mrb[0].mxu0 %v438
      %v2005 = vpop.f32.mrb[0].mxu0
      %v2006 = vadd.f32 %v1901, %v2005
      %v2007 = vpop.f32.mrb[0].mxu0
      %2008 = vmatprep.mubr.f32.mxu0 %v451
      %2009 = vmatmul.mubr.f32.gmra.mrb[0].mxu0 %v450
      %v2010 = vpop.f32.mrb[0].mxu0
      %v2011 = vadd.f32 %v1906, %v2010
      %v2012 = vpop.f32.mrb[0].mxu0
      %2013 = vmatprep.mubr.f32.mxu0 %v463
      %2014 = vmatmul.mubr.f32.gmra.mrb[0].mxu0 %v462
      %v2015 = vpop.f32.mrb[0].mxu0
      %v2016 = vadd.f32 %v1911, %v2015
      %v2017 = vpop.f32.mrb[0].mxu0
      %2018 = vmatprep.mubr.f32.mxu0 %v475
      %2019 = vmatmul.mubr.f32.gmra.mrb[0].mxu0 %v474
      %v2020 = vpop.f32.mrb[0].mxu0
      %v2021 = vadd.f32 %v1916, %v2020
      %v2022 = vpop.f32.mrb[0].mxu0
      %2023 = vmatprep.mubr.f32.mxu0 %v487
      %2024 = vmatmul.mubr.f32.gmra.mrb[0].mxu0 %v486
      %v2025 = vpop.f32.mrb[0].mxu0
      %v2026 = vadd.f32 %v1921, %v2025
      %v2027 = vpop.f32.mrb[0].mxu0
      %2028 = vmatprep.mubr.f32.mxu0 %v499
      %2029 = vmatmul.mubr.f32.gmra.mrb[0].mxu0 %v498
      %v2030 = vpop.f32.mrb[0].mxu0
      %v2031 = vadd.f32 %v1926, %v2030
      %v2032 = vpop.f32.mrb[0].mxu0
      %2033 = vmatprep.mubr.f32.mxu0 %v511
      %2034 = vmatmul.mubr.f32.gmra.mrb[0].mxu0 %v510
      %v2035 = vpop.f32.mrb[0].mxu0
      %v2036 = vadd.f32 %v1931, %v2035
      %v2037 = vpop.f32.mrb[0].mxu0
      %2038 = vmatprep.mubr.f32.mxu0 %v523
      %2039 = vmatmul.mubr.f32.gmra.mrb[0].mxu0 %v522
      %v2040 = vpop.f32.mrb[0].mxu0
      %v2041 = vadd.f32 %v1936, %v2040
      %v2042 = vpop.f32.mrb[0].mxu0
      %2043 = vdwg.mxu0
      %2044 = vmatprep.subr.mxu0 0.0
      %2045 = vmatpush1.msra.mxu0 %v726
      %2046 = vmatprep.subr.mxu0 0.0
      %2047 = vmatpush1.msra.mxu0 %v729
      %2048 = vmatprep.subr.mxu0 0.0
      %2049 = vmatpush1.msra.mxu0 %v732
      %2050 = vmatprep.subr.mxu0 0.0
      %2051 = vmatpush1.msra.mxu0 %v735
      %2052 = vmatprep.subr.mxu0 0.0
      %2053 = vmatpush1.msra.mxu0 %v738
      %2054 = vmatprep.subr.mxu0 0.0
      %2055 = vmatpush1.msra.mxu0 %v741
      %2056 = vmatprep.subr.mxu0 0.0
      %2057 = vmatpush1.msra.mxu0 %v744
      %2058 = vmatprep.subr.mxu0 0.0
      %2059 = vmatpush1.msra.mxu0 %v747
      %2060 = vmatprep.subr.mxu0 0.0
      %2061 = vmatpush1.msra.mxu0 %v750
      %2062 = vmatprep.subr.mxu0 0.0
      %2063 = vmatpush1.msra.mxu0 %v753
      %2064 = vmatprep.subr.mxu0 0.0
      %2065 = vmatpush1.msra.mxu0 %v756
      %2066 = vmatprep.subr.mxu0 0.0
      %2067 = vmatpush1.msra.mxu0 %v759
      %2068 = vmatprep.subr.mxu0 0.0
      %2069 = vmatpush1.msra.mxu0 %v762
      %2070 = vmatprep.subr.mxu0 0.0
      %2071 = vmatpush1.msra.mxu0 %v765
      %2072 = vmatprep.subr.mxu0 0.0
      %2073 = vmatpush1.msra.mxu0 %v768
      %2074 = vmatprep.subr.mxu0 0.0
      %2075 = vmatpush1.msra.mxu0 %v771
      %2076 = vmatprep.subr.mxu0 0.0
      %2077 = vmatpush1.msra.mxu0 %v774
      %2078 = vmatprep.subr.mxu0 0.0
      %2079 = vmatpush1.msra.mxu0 %v777
      %2080 = vmatprep.subr.mxu0 0.0
      %2081 = vmatpush1.msra.mxu0 %v780
      %2082 = vmatprep.subr.mxu0 0.0
      %2083 = vmatpush1.msra.mxu0 %v783
      %2084 = vmatprep.subr.mxu0 0.0
      %2085 = vmatpush1.msra.mxu0 %v786
      %2086 = vmatprep.subr.mxu0 0.0
      %2087 = vmatpush1.msra.mxu0 %v789
      %2088 = vmatprep.subr.mxu0 0.0
      %2089 = vmatpush1.msra.mxu0 %v792
      %2090 = vmatprep.subr.mxu0 0.0
      %2091 = vmatpush1.msra.mxu0 %v795
      %2092 = vmatprep.subr.mxu0 0.0
      %2093 = vmatpush1.msra.mxu0 %v798
      %2094 = vmatprep.subr.mxu0 0.0
      %2095 = vmatpush1.msra.mxu0 %v801
      %2096 = vmatprep.subr.mxu0 0.0
      %2097 = vmatpush1.msra.mxu0 %v804
      %2098 = vmatprep.subr.mxu0 0.0
      %2099 = vmatpush1.msra.mxu0 %v807
      %2100 = vmatprep.subr.mxu0 0.0
      %2101 = vmatpush1.msra.mxu0 %v810
      %2102 = vmatprep.subr.mxu0 0.0
      %2103 = vmatpush1.msra.mxu0 %v813
      %2104 = vmatprep.subr.mxu0 0.0
      %2105 = vmatpush1.msra.mxu0 %v816
      %2106 = vmatprep.subr.mxu0 0.0
      %2107 = vmatpush1.msra.mxu0 %v819
      %2108 = vmatprep.mubr.f32.mxu0 %v441
      %2109 = vmatmul.mubr.f32.gmra.mrb[0].mxu0 %v440
      %v2110 = vpop.f32.mrb[0].mxu0
      %v2111 = vadd.f32 %v2006, %v2110
      %v2112 = vpop.f32.mrb[0].mxu0
      %2113 = vmatprep.mubr.f32.mxu0 %v453
      %2114 = vmatmul.mubr.f32.gmra.mrb[0].mxu0 %v452
      %v2115 = vpop.f32.mrb[0].mxu0
      %v2116 = vadd.f32 %v2011, %v2115
      %v2117 = vpop.f32.mrb[0].mxu0
      %2118 = vmatprep.mubr.f32.mxu0 %v465
      %2119 = vmatmul.mubr.f32.gmra.mrb[0].mxu0 %v464
      %v2120 = vpop.f32.mrb[0].mxu0
      %v2121 = vadd.f32 %v2016, %v2120
      %v2122 = vpop.f32.mrb[0].mxu0
      %2123 = vmatprep.mubr.f32.mxu0 %v477
      %2124 = vmatmul.mubr.f32.gmra.mrb[0].mxu0 %v476
      %v2125 = vpop.f32.mrb[0].mxu0
      %v2126 = vadd.f32 %v2021, %v2125
      %v2127 = vpop.f32.mrb[0].mxu0
      %2128 = vmatprep.mubr.f32.mxu0 %v489
      %2129 = vmatmul.mubr.f32.gmra.mrb[0].mxu0 %v488
      %v2130 = vpop.f32.mrb[0].mxu0
      %v2131 = vadd.f32 %v2026, %v2130
      %v2132 = vpop.f32.mrb[0].mxu0
      %2133 = vmatprep.mubr.f32.mxu0 %v501
      %2134 = vmatmul.mubr.f32.gmra.mrb[0].mxu0 %v500
      %v2135 = vpop.f32.mrb[0].mxu0
      %v2136 = vadd.f32 %v2031, %v2135
      %v2137 = vpop.f32.mrb[0].mxu0
      %2138 = vmatprep.mubr.f32.mxu0 %v513
      %2139 = vmatmul.mubr.f32.gmra.mrb[0].mxu0 %v512
      %v2140 = vpop.f32.mrb[0].mxu0
      %v2141 = vadd.f32 %v2036, %v2140
      %v2142 = vpop.f32.mrb[0].mxu0
      %2143 = vmatprep.mubr.f32.mxu0 %v525
      %2144 = vmatmul.mubr.f32.gmra.mrb[0].mxu0 %v524
      %v2145 = vpop.f32.mrb[0].mxu0
      %v2146 = vadd.f32 %v2041, %v2145
      %v2147 = vpop.f32.mrb[0].mxu0
      %2148 = vdwg.mxu0
      %2149 = vmatprep.subr.mxu0 0.0
      %2150 = vmatpush1.msra.mxu0 %v822
      %2151 = vmatprep.subr.mxu0 0.0
      %2152 = vmatpush1.msra.mxu0 %v825
      %2153 = vmatprep.subr.mxu0 0.0
      %2154 = vmatpush1.msra.mxu0 %v828
      %2155 = vmatprep.subr.mxu0 0.0
      %2156 = vmatpush1.msra.mxu0 %v831
      %2157 = vmatprep.subr.mxu0 0.0
      %2158 = vmatpush1.msra.mxu0 %v834
      %2159 = vmatprep.subr.mxu0 0.0
      %2160 = vmatpush1.msra.mxu0 %v837
      %2161 = vmatprep.subr.mxu0 0.0
      %2162 = vmatpush1.msra.mxu0 %v840
      %2163 = vmatprep.subr.mxu0 0.0
      %2164 = vmatpush1.msra.mxu0 %v843
      %2165 = vmatprep.subr.mxu0 0.0
      %2166 = vmatpush1.msra.mxu0 %v846
      %2167 = vmatprep.subr.mxu0 0.0
      %2168 = vmatpush1.msra.mxu0 %v849
      %2169 = vmatprep.subr.mxu0 0.0
      %2170 = vmatpush1.msra.mxu0 %v852
      %2171 = vmatprep.subr.mxu0 0.0
      %2172 = vmatpush1.msra.mxu0 %v855
      %2173 = vmatprep.subr.mxu0 0.0
      %2174 = vmatpush1.msra.mxu0 %v858
      %2175 = vmatprep.subr.mxu0 0.0
      %2176 = vmatpush1.msra.mxu0 %v861
      %2177 = vmatprep.subr.mxu0 0.0
      %2178 = vmatpush1.msra.mxu0 %v864
      %2179 = vmatprep.subr.mxu0 0.0
      %2180 = vmatpush1.msra.mxu0 %v867
      %2181 = vmatprep.subr.mxu0 0.0
      %2182 = vmatpush1.msra.mxu0 %v870
      %2183 = vmatprep.subr.mxu0 0.0
      %2184 = vmatpush1.msra.mxu0 %v873
      %2185 = vmatprep.subr.mxu0 0.0
      %2186 = vmatpush1.msra.mxu0 %v876
      %2187 = vmatprep.subr.mxu0 0.0
      %2188 = vmatpush1.msra.mxu0 %v879
      %2189 = vmatprep.subr.mxu0 0.0
      %2190 = vmatpush1.msra.mxu0 %v882
      %2191 = vmatprep.subr.mxu0 0.0
      %2192 = vmatpush1.msra.mxu0 %v885
      %2193 = vmatprep.subr.mxu0 0.0
      %2194 = vmatpush1.msra.mxu0 %v888
      %2195 = vmatprep.subr.mxu0 0.0
      %2196 = vmatpush1.msra.mxu0 %v891
      %2197 = vmatprep.subr.mxu0 0.0
      %2198 = vmatpush1.msra.mxu0 %v894
      %2199 = vmatprep.subr.mxu0 0.0
      %2200 = vmatpush1.msra.mxu0 %v897
      %2201 = vmatprep.subr.mxu0 0.0
      %2202 = vmatpush1.msra.mxu0 %v900
      %2203 = vmatprep.subr.mxu0 0.0
      %2204 = vmatpush1.msra.mxu0 %v903
      %2205 = vmatprep.subr.mxu0 0.0
      %2206 = vmatpush1.msra.mxu0 %v906
      %2207 = vmatprep.subr.mxu0 0.0
      %2208 = vmatpush1.msra.mxu0 %v909
      %2209 = vmatprep.subr.mxu0 0.0
      %2210 = vmatpush1.msra.mxu0 %v912
      %2211 = vmatprep.subr.mxu0 0.0
      %2212 = vmatpush1.msra.mxu0 %v915
      %2213 = vmatprep.mubr.f32.mxu0 %v443
      %2214 = vmatmul.mubr.f32.gmra.mrb[0].mxu0 %v442
      %v2215 = vpop.f32.mrb[0].mxu0
      %v2216 = vadd.f32 %v2111, %v2215
      %v2217 = vpop.f32.mrb[0].mxu0
      %2218 = vmatprep.mubr.f32.mxu0 %v455
      %2219 = vmatmul.mubr.f32.gmra.mrb[0].mxu0 %v454
      %v2220 = vpop.f32.mrb[0].mxu0
      %v2221 = vadd.f32 %v2116, %v2220
      %v2222 = vpop.f32.mrb[0].mxu0
      %2223 = vmatprep.mubr.f32.mxu0 %v467
      %2224 = vmatmul.mubr.f32.gmra.mrb[0].mxu0 %v466
      %v2225 = vpop.f32.mrb[0].mxu0
      %v2226 = vadd.f32 %v2121, %v2225
      %v2227 = vpop.f32.mrb[0].mxu0
      %2228 = vmatprep.mubr.f32.mxu0 %v479
      %2229 = vmatmul.mubr.f32.gmra.mrb[0].mxu0 %v478
      %v2230 = vpop.f32.mrb[0].mxu0
      %v2231 = vadd.f32 %v2126, %v2230
      %v2232 = vpop.f32.mrb[0].mxu0
      %2233 = vmatprep.mubr.f32.mxu0 %v491
      %2234 = vmatmul.mubr.f32.gmra.mrb[0].mxu0 %v490
      %v2235 = vpop.f32.mrb[0].mxu0
      %v2236 = vadd.f32 %v2131, %v2235
      %v2237 = vpop.f32.mrb[0].mxu0
      %2238 = vmatprep.mubr.f32.mxu0 %v503
      %2239 = vmatmul.mubr.f32.gmra.mrb[0].mxu0 %v502
      %v2240 = vpop.f32.mrb[0].mxu0
      %v2241 = vadd.f32 %v2136, %v2240
      %v2242 = vpop.f32.mrb[0].mxu0
      %2243 = vmatprep.mubr.f32.mxu0 %v515
      %2244 = vmatmul.mubr.f32.gmra.mrb[0].mxu0 %v514
      %v2245 = vpop.f32.mrb[0].mxu0
      %v2246 = vadd.f32 %v2141, %v2245
      %v2247 = vpop.f32.mrb[0].mxu0
      %2248 = vmatprep.mubr.f32.mxu0 %v527
      %2249 = vmatmul.mubr.f32.gmra.mrb[0].mxu0 %v526
      %v2250 = vpop.f32.mrb[0].mxu0
      %v2251 = vadd.f32 %v2146, %v2250
      %v2252 = vpop.f32.mrb[0].mxu0
      %2253 = vdwg.mxu0
      %2254 = vmatprep.subr.mxu0 0.0
      %2255 = vmatpush1.msra.mxu0 %v918
      %2256 = vmatprep.subr.mxu0 0.0
      %2257 = vmatpush1.msra.mxu0 %v921
      %2258 = vmatprep.subr.mxu0 0.0
      %2259 = vmatpush1.msra.mxu0 %v924
      %2260 = vmatprep.subr.mxu0 0.0
      %2261 = vmatpush1.msra.mxu0 %v927
      %2262 = vmatprep.subr.mxu0 0.0
      %2263 = vmatpush1.msra.mxu0 %v930
      %2264 = vmatprep.subr.mxu0 0.0
      %2265 = vmatpush1.msra.mxu0 %v933
      %2266 = vmatprep.subr.mxu0 0.0
      %2267 = vmatpush1.msra.mxu0 %v936
      %2268 = vmatprep.subr.mxu0 0.0
      %2269 = vmatpush1.msra.mxu0 %v939
      %2270 = vmatprep.subr.mxu0 0.0
      %2271 = vmatpush1.msra.mxu0 %v942
      %2272 = vmatprep.subr.mxu0 0.0
      %2273 = vmatpush1.msra.mxu0 %v945
      %2274 = vmatprep.subr.mxu0 0.0
      %2275 = vmatpush1.msra.mxu0 %v948
      %2276 = vmatprep.subr.mxu0 0.0
      %2277 = vmatpush1.msra.mxu0 %v951
      %2278 = vmatprep.subr.mxu0 0.0
      %2279 = vmatpush1.msra.mxu0 %v954
      %2280 = vmatprep.subr.mxu0 0.0
      %2281 = vmatpush1.msra.mxu0 %v957
      %2282 = vmatprep.subr.mxu0 0.0
      %2283 = vmatpush1.msra.mxu0 %v960
      %2284 = vmatprep.subr.mxu0 0.0
      %2285 = vmatpush1.msra.mxu0 %v963
      %2286 = vmatprep.subr.mxu0 0.0
      %2287 = vmatpush1.msra.mxu0 %v966
      %2288 = vmatprep.subr.mxu0 0.0
      %2289 = vmatpush1.msra.mxu0 %v969
      %2290 = vmatprep.subr.mxu0 0.0
      %2291 = vmatpush1.msra.mxu0 %v972
      %2292 = vmatprep.subr.mxu0 0.0
      %2293 = vmatpush1.msra.mxu0 %v975
      %2294 = vmatprep.subr.mxu0 0.0
      %2295 = vmatpush1.msra.mxu0 %v978
      %2296 = vmatprep.subr.mxu0 0.0
      %2297 = vmatpush1.msra.mxu0 %v981
      %2298 = vmatprep.subr.mxu0 0.0
      %2299 = vmatpush1.msra.mxu0 %v984
      %2300 = vmatprep.subr.mxu0 0.0
      %2301 = vmatpush1.msra.mxu0 %v987
      %2302 = vmatprep.subr.mxu0 0.0
      %2303 = vmatpush1.msra.mxu0 %v990
      %2304 = vmatprep.subr.mxu0 0.0
      %2305 = vmatpush1.msra.mxu0 %v993
      %2306 = vmatprep.subr.mxu0 0.0
      %2307 = vmatpush1.msra.mxu0 %v996
      %2308 = vmatprep.subr.mxu0 0.0
      %2309 = vmatpush1.msra.mxu0 %v999
      %2310 = vmatprep.subr.mxu0 0.0
      %2311 = vmatpush1.msra.mxu0 %v1002
      %2312 = vmatprep.subr.mxu0 0.0
      %2313 = vmatpush1.msra.mxu0 %v1005
      %2314 = vmatprep.subr.mxu0 0.0
      %2315 = vmatpush1.msra.mxu0 %v1008
      %2316 = vmatprep.subr.mxu0 0.0
      %2317 = vmatpush1.msra.mxu0 %v1011
      %2318 = vmatprep.mubr.f32.mxu0 %v445
      %2319 = vmatmul.mubr.f32.gmra.mrb[0].mxu0 %v444
      %v2320 = vpop.f32.mrb[0].mxu0
      %v2321 = vadd.f32 %v2216, %v2320
      %v2322 = vpop.f32.mrb[0].mxu0
      %2323 = vmatprep.mubr.f32.mxu0 %v457
      %2324 = vmatmul.mubr.f32.gmra.mrb[0].mxu0 %v456
      %v2325 = vpop.f32.mrb[0].mxu0
      %v2326 = vadd.f32 %v2221, %v2325
      %v2327 = vpop.f32.mrb[0].mxu0
      %2328 = vmatprep.mubr.f32.mxu0 %v469
      %2329 = vmatmul.mubr.f32.gmra.mrb[0].mxu0 %v468
      %v2330 = vpop.f32.mrb[0].mxu0
      %v2331 = vadd.f32 %v2226, %v2330
      %v2332 = vpop.f32.mrb[0].mxu0
      %2333 = vmatprep.mubr.f32.mxu0 %v481
      %2334 = vmatmul.mubr.f32.gmra.mrb[0].mxu0 %v480
      %v2335 = vpop.f32.mrb[0].mxu0
      %v2336 = vadd.f32 %v2231, %v2335
      %v2337 = vpop.f32.mrb[0].mxu0
      %2338 = vmatprep.mubr.f32.mxu0 %v493
      %2339 = vmatmul.mubr.f32.gmra.mrb[0].mxu0 %v492
      %v2340 = vpop.f32.mrb[0].mxu0
      %v2341 = vadd.f32 %v2236, %v2340
      %v2342 = vpop.f32.mrb[0].mxu0
      %2343 = vmatprep.mubr.f32.mxu0 %v505
      %2344 = vmatmul.mubr.f32.gmra.mrb[0].mxu0 %v504
      %v2345 = vpop.f32.mrb[0].mxu0
      %v2346 = vadd.f32 %v2241, %v2345
      %v2347 = vpop.f32.mrb[0].mxu0
      %2348 = vmatprep.mubr.f32.mxu0 %v517
      %2349 = vmatmul.mubr.f32.gmra.mrb[0].mxu0 %v516
      %v2350 = vpop.f32.mrb[0].mxu0
      %v2351 = vadd.f32 %v2246, %v2350
      %v2352 = vpop.f32.mrb[0].mxu0
      %2353 = vmatprep.mubr.f32.mxu0 %v529
      %2354 = vmatmul.mubr.f32.gmra.mrb[0].mxu0 %v528
      %v2355 = vpop.f32.mrb[0].mxu0
      %v2356 = vadd.f32 %v2251, %v2355
      %v2357 = vpop.f32.mrb[0].mxu0
      %2358 = vdwg.mxu0
      %2359 = vmatprep.subr.mxu0 0.0
      %2360 = vmatpush1.msra.mxu0 %v1014
      %2361 = vmatprep.subr.mxu0 0.0
      %2362 = vmatpush1.msra.mxu0 %v1017
      %2363 = vmatprep.subr.mxu0 0.0
      %2364 = vmatpush1.msra.mxu0 %v1020
      %2365 = vmatprep.subr.mxu0 0.0
      %2366 = vmatpush1.msra.mxu0 %v1023
      %2367 = vmatprep.subr.mxu0 0.0
      %2368 = vmatpush1.msra.mxu0 %v1026
      %2369 = vmatprep.subr.mxu0 0.0
      %2370 = vmatpush1.msra.mxu0 %v1029
      %2371 = vmatprep.subr.mxu0 0.0
      %2372 = vmatpush1.msra.mxu0 %v1032
      %2373 = vmatprep.subr.mxu0 0.0
      %2374 = vmatpush1.msra.mxu0 %v1035
      %2375 = vmatprep.subr.mxu0 0.0
      %2376 = vmatpush1.msra.mxu0 %v1038
      %2377 = vmatprep.subr.mxu0 0.0
      %2378 = vmatpush1.msra.mxu0 %v1041
      %2379 = vmatprep.subr.mxu0 0.0
      %2380 = vmatpush1.msra.mxu0 %v1044
      %2381 = vmatprep.subr.mxu0 0.0
      %2382 = vmatpush1.msra.mxu0 %v1047
      %2383 = vmatprep.subr.mxu0 0.0
      %2384 = vmatpush1.msra.mxu0 %v1050
      %2385 = vmatprep.subr.mxu0 0.0
      %2386 = vmatpush1.msra.mxu0 %v1053
      %2387 = vmatprep.subr.mxu0 0.0
      %2388 = vmatpush1.msra.mxu0 %v1056
      %2389 = vmatprep.subr.mxu0 0.0
      %2390 = vmatpush1.msra.mxu0 %v1059
      %2391 = vmatprep.subr.mxu0 0.0
      %2392 = vmatpush1.msra.mxu0 %v1062
      %2393 = vmatprep.subr.mxu0 0.0
      %2394 = vmatpush1.msra.mxu0 %v1065
      %2395 = vmatprep.subr.mxu0 0.0
      %2396 = vmatpush1.msra.mxu0 %v1068
      %2397 = vmatprep.subr.mxu0 0.0
      %2398 = vmatpush1.msra.mxu0 %v1071
      %2399 = vmatprep.subr.mxu0 0.0
      %2400 = vmatpush1.msra.mxu0 %v1074
      %2401 = vmatprep.subr.mxu0 0.0
      %2402 = vmatpush1.msra.mxu0 %v1077
      %2403 = vmatprep.subr.mxu0 0.0
      %2404 = vmatpush1.msra.mxu0 %v1080
      %2405 = vmatprep.subr.mxu0 0.0
      %2406 = vmatpush1.msra.mxu0 %v1083
      %2407 = vmatprep.subr.mxu0 0.0
      %2408 = vmatpush1.msra.mxu0 %v1086
      %2409 = vmatprep.subr.mxu0 0.0
      %2410 = vmatpush1.msra.mxu0 %v1089
      %2411 = vmatprep.subr.mxu0 0.0
      %2412 = vmatpush1.msra.mxu0 %v1092
      %2413 = vmatprep.subr.mxu0 0.0
      %2414 = vmatpush1.msra.mxu0 %v1095
      %2415 = vmatprep.subr.mxu0 0.0
      %2416 = vmatpush1.msra.mxu0 %v1098
      %2417 = vmatprep.subr.mxu0 0.0
      %2418 = vmatpush1.msra.mxu0 %v1101
      %2419 = vmatprep.subr.mxu0 0.0
      %2420 = vmatpush1.msra.mxu0 %v1104
      %2421 = vmatprep.subr.mxu0 0.0
      %2422 = vmatpush1.msra.mxu0 %v1107
      %2423 = vmatprep.mubr.f32.mxu0 %v447
      %2424 = vmatmul.mubr.f32.gmra.mrb[0].mxu0 %v446
      %v2425 = vpop.f32.mrb[0].mxu0
      %v2426 = vadd.f32 %v2321, %v2425
      %v2427 = vpop.f32.mrb[0].mxu0
      %2428 = vmatprep.mubr.f32.mxu0 %v459
      %2429 = vmatmul.mubr.f32.gmra.mrb[0].mxu0 %v458
      %v2430 = vpop.f32.mrb[0].mxu0
      %v2431 = vadd.f32 %v2326, %v2430
      %v2432 = vpop.f32.mrb[0].mxu0
      %2433 = vmatprep.mubr.f32.mxu0 %v471
      %2434 = vmatmul.mubr.f32.gmra.mrb[0].mxu0 %v470
      %v2435 = vpop.f32.mrb[0].mxu0
      %v2436 = vadd.f32 %v2331, %v2435
      %v2437 = vpop.f32.mrb[0].mxu0
      %2438 = vmatprep.mubr.f32.mxu0 %v483
      %2439 = vmatmul.mubr.f32.gmra.mrb[0].mxu0 %v482
      %v2440 = vpop.f32.mrb[0].mxu0
      %v2441 = vadd.f32 %v2336, %v2440
      %v2442 = vpop.f32.mrb[0].mxu0
      %2443 = vmatprep.mubr.f32.mxu0 %v495
      %2444 = vmatmul.mubr.f32.gmra.mrb[0].mxu0 %v494
      %v2445 = vpop.f32.mrb[0].mxu0
      %v2446 = vadd.f32 %v2341, %v2445
      %v2447 = vpop.f32.mrb[0].mxu0
      %2448 = vmatprep.mubr.f32.mxu0 %v507
      %2449 = vmatmul.mubr.f32.gmra.mrb[0].mxu0 %v506
      %v2450 = vpop.f32.mrb[0].mxu0
      %v2451 = vadd.f32 %v2346, %v2450
      %v2452 = vpop.f32.mrb[0].mxu0
      %2453 = vmatprep.mubr.f32.mxu0 %v519
      %2454 = vmatmul.mubr.f32.gmra.mrb[0].mxu0 %v518
      %v2455 = vpop.f32.mrb[0].mxu0
      %v2456 = vadd.f32 %v2351, %v2455
      %v2457 = vpop.f32.mrb[0].mxu0
      %2458 = vmatprep.mubr.f32.mxu0 %v531
      %2459 = vmatmul.mubr.f32.gmra.mrb[0].mxu0 %v530
      %v2460 = vpop.f32.mrb[0].mxu0
      %v2461 = vadd.f32 %v2356, %v2460
      %v2462 = vpop.f32.mrb[0].mxu0
      %2463 = vdwg.mxu0
      %v2464 = vmax.f32 %v1788, 0.0
      %v2465 = vmax.f32 %v1790, 0.0
      %v2466 = vmax.f32 %v2426, 0.0
      %v2467 = vmax.f32 %v1794, 0.0
      %v2468 = vmax.f32 %v1796, 0.0
      %v2469 = vmax.f32 %v2431, 0.0
      %v2470 = vmax.f32 %v1800, 0.0
      %v2471 = vmax.f32 %v1802, 0.0
      %v2472 = vmax.f32 %v2436, 0.0
      %v2473 = vmax.f32 %v1806, 0.0
      %v2474 = vmax.f32 %v1808, 0.0
      %v2475 = vmax.f32 %v2441, 0.0
      %v2476 = vmax.f32 %v1812, 0.0
      %v2477 = vmax.f32 %v1814, 0.0
      %v2478 = vmax.f32 %v2446, 0.0
      %v2479 = vmax.f32 %v1818, 0.0
      %v2480 = vmax.f32 %v1820, 0.0
      %v2481 = vmax.f32 %v2451, 0.0
      %v2482 = vmax.f32 %v1824, 0.0
      %v2483 = vmax.f32 %v1826, 0.0
      %v2484 = vmax.f32 %v2456, 0.0
      %v2485 = vmax.f32 %v1830, 0.0
      %v2486 = vmax.f32 %v1832, 0.0
      %v2487 = vmax.f32 %v2461, 0.0
      %v2488 = vld [vmem:[%s4] sm:$0xff]
      %v2489 = vld [vmem:[%s4 + $0x8] sm:$0xff]
      %v2490 = vld [vmem:[%s4 + $0x10] sm:$0xff]
      %v2491 = vld [vmem:[%s4 + $0x18] sm:$0xff]
      %v2492 = vld [vmem:[%s4 + $0x20] sm:$0xff]
      %v2493 = vld [vmem:[%s4 + $0x28] sm:$0xff]
      %v2494 = vld [vmem:[%s4 + $0x30] sm:$0xff]
      %v2495 = vld [vmem:[%s4 + $0x38] sm:$0xff]
      %2497 = vset.pattern.permute.xlu0 0
      %2498 = vperm.xlu0 %2497, %v2488
      %v2499 = vpop.permute.xlu0 %2498
      %2502 = vset.pattern.permute.xlu0 0
      %2503 = vperm.xlu0 %2502, %v2489
      %v2504 = vpop.permute.xlu0 %2503
      %2507 = vset.pattern.permute.xlu0 0
      %2508 = vperm.xlu0 %2507, %v2490
      %v2509 = vpop.permute.xlu0 %2508
      %2512 = vset.pattern.permute.xlu0 0
      %2513 = vperm.xlu0 %2512, %v2491
      %v2514 = vpop.permute.xlu0 %2513
      %2517 = vset.pattern.permute.xlu0 0
      %2518 = vperm.xlu0 %2517, %v2492
      %v2519 = vpop.permute.xlu0 %2518
      %2522 = vset.pattern.permute.xlu0 0
      %2523 = vperm.xlu0 %2522, %v2493
      %v2524 = vpop.permute.xlu0 %2523
      %2527 = vset.pattern.permute.xlu0 0
      %2528 = vperm.xlu0 %2527, %v2494
      %v2529 = vpop.permute.xlu0 %2528
      %2532 = vset.pattern.permute.xlu0 0
      %2533 = vperm.xlu0 %2532, %v2495
      %v2534 = vpop.permute.xlu0 %2533
      %v2536 = vmul.f32 %v2464, %v2499
      %v2537 = vmul.f32 %v2467, %v2504
      %v2538 = vmul.f32 %v2470, %v2509
      %v2539 = vmul.f32 %v2473, %v2514
      %v2540 = vmul.f32 %v2476, %v2519
      %v2541 = vmul.f32 %v2479, %v2524
      %v2542 = vmul.f32 %v2482, %v2529
      %v2543 = vmul.f32 %v2485, %v2534
      %2544 = vset.pattern.permute.xlu0 1
      %2545 = vperm.xlu0 %2544, %v2488
      %v2546 = vpop.permute.xlu0 %2545
      %2548 = vset.pattern.permute.xlu0 1
      %2549 = vperm.xlu0 %2548, %v2489
      %v2550 = vpop.permute.xlu0 %2549
      %2552 = vset.pattern.permute.xlu0 1
      %2553 = vperm.xlu0 %2552, %v2490
      %v2554 = vpop.permute.xlu0 %2553
      %2556 = vset.pattern.permute.xlu0 1
      %2557 = vperm.xlu0 %2556, %v2491
      %v2558 = vpop.permute.xlu0 %2557
      %2560 = vset.pattern.permute.xlu0 1
      %2561 = vperm.xlu0 %2560, %v2492
      %v2562 = vpop.permute.xlu0 %2561
      %2564 = vset.pattern.permute.xlu0 1
      %2565 = vperm.xlu0 %2564, %v2493
      %v2566 = vpop.permute.xlu0 %2565
      %2568 = vset.pattern.permute.xlu0 1
      %2569 = vperm.xlu0 %2568, %v2494
      %v2570 = vpop.permute.xlu0 %2569
      %2572 = vset.pattern.permute.xlu0 1
      %2573 = vperm.xlu0 %2572, %v2495
      %v2574 = vpop.permute.xlu0 %2573
      %v2576 = vmul.f32 %v2464, %v2546
      %v2577 = vmul.f32 %v2465, %v2546
      %v2578 = vmul.f32 %v2467, %v2550
      %v2579 = vmul.f32 %v2468, %v2550
      %v2580 = vmul.f32 %v2470, %v2554
      %v2581 = vmul.f32 %v2471, %v2554
      %v2582 = vmul.f32 %v2473, %v2558
      %v2583 = vmul.f32 %v2474, %v2558
      %v2584 = vmul.f32 %v2476, %v2562
      %v2585 = vmul.f32 %v2477, %v2562
      %v2586 = vmul.f32 %v2479, %v2566
      %v2587 = vmul.f32 %v2480, %v2566
      %v2588 = vmul.f32 %v2482, %v2570
      %v2589 = vmul.f32 %v2483, %v2570
      %v2590 = vmul.f32 %v2485, %v2574
      %v2591 = vmul.f32 %v2486, %v2574
      %2608 = vrot.lane.b32.xlu0 %v2576, 47
      %v2609 = vpop.permute.xlu0 %2608
      %2610 = vrot.lane.b32.xlu0 %v2577, 47
      %v2611 = vpop.permute.xlu0 %2610
      %2612 = vrot.lane.b32.xlu0 %v2578, 47
      %v2613 = vpop.permute.xlu0 %2612
      %2614 = vrot.lane.b32.xlu0 %v2579, 47
      %v2615 = vpop.permute.xlu0 %2614
      %2616 = vrot.lane.b32.xlu0 %v2580, 47
      %v2617 = vpop.permute.xlu0 %2616
      %2618 = vrot.lane.b32.xlu0 %v2581, 47
      %v2619 = vpop.permute.xlu0 %2618
      %2620 = vrot.lane.b32.xlu0 %v2582, 47
      %v2621 = vpop.permute.xlu0 %2620
      %2622 = vrot.lane.b32.xlu0 %v2583, 47
      %v2623 = vpop.permute.xlu0 %2622
      %2624 = vrot.lane.b32.xlu0 %v2584, 47
      %v2625 = vpop.permute.xlu0 %2624
      %2626 = vrot.lane.b32.xlu0 %v2585, 47
      %v2627 = vpop.permute.xlu0 %2626
      %2628 = vrot.lane.b32.xlu0 %v2586, 47
      %v2629 = vpop.permute.xlu0 %2628
      %2630 = vrot.lane.b32.xlu0 %v2587, 47
      %v2631 = vpop.permute.xlu0 %2630
      %2632 = vrot.lane.b32.xlu0 %v2588, 47
      %v2633 = vpop.permute.xlu0 %2632
      %2634 = vrot.lane.b32.xlu0 %v2589, 47
      %v2635 = vpop.permute.xlu0 %2634
      %2636 = vrot.lane.b32.xlu0 %v2590, 47
      %v2637 = vpop.permute.xlu0 %2636
      %2638 = vrot.lane.b32.xlu0 %v2591, 47
      %v2639 = vpop.permute.xlu0 %2638
      %vm2640 = vcmask 384000
      %v2641 = vsel %vm2640, %v2609, %v2611
      %v2642 = vsel %vm2640, %v2613, %v2615
      %v2643 = vsel %vm2640, %v2617, %v2619
      %v2644 = vsel %vm2640, %v2621, %v2623
      %v2645 = vsel %vm2640, %v2625, %v2627
      %v2646 = vsel %vm2640, %v2629, %v2631
      %v2647 = vsel %vm2640, %v2633, %v2635
      %v2648 = vsel %vm2640, %v2637, %v2639
      %v2657 = vadd.f32 %v2536, %v2641
      %v2658 = vadd.f32 %v2537, %v2642
      %v2659 = vadd.f32 %v2538, %v2643
      %v2660 = vadd.f32 %v2539, %v2644
      %v2661 = vadd.f32 %v2540, %v2645
      %v2662 = vadd.f32 %v2541, %v2646
      %v2663 = vadd.f32 %v2542, %v2647
      %v2664 = vadd.f32 %v2543, %v2648
      %2665 = vset.pattern.permute.xlu0 2
      %2666 = vperm.xlu0 %2665, %v2488
      %v2667 = vpop.permute.xlu0 %2666
      %2669 = vset.pattern.permute.xlu0 2
      %2670 = vperm.xlu0 %2669, %v2489
      %v2671 = vpop.permute.xlu0 %2670
      %2673 = vset.pattern.permute.xlu0 2
      %2674 = vperm.xlu0 %2673, %v2490
      %v2675 = vpop.permute.xlu0 %2674
      %2677 = vset.pattern.permute.xlu0 2
      %2678 = vperm.xlu0 %2677, %v2491
      %v2679 = vpop.permute.xlu0 %2678
      %2681 = vset.pattern.permute.xlu0 2
      %2682 = vperm.xlu0 %2681, %v2492
      %v2683 = vpop.permute.xlu0 %2682
      %2685 = vset.pattern.permute.xlu0 2
      %2686 = vperm.xlu0 %2685, %v2493
      %v2687 = vpop.permute.xlu0 %2686
      %2689 = vset.pattern.permute.xlu0 2
      %2690 = vperm.xlu0 %2689, %v2494
      %v2691 = vpop.permute.xlu0 %2690
      %2693 = vset.pattern.permute.xlu0 2
      %2694 = vperm.xlu0 %2693, %v2495
      %v2695 = vpop.permute.xlu0 %2694
      %v2697 = vmul.f32 %v2464, %v2667
      %v2698 = vmul.f32 %v2467, %v2671
      %v2699 = vmul.f32 %v2470, %v2675
      %v2700 = vmul.f32 %v2473, %v2679
      %v2701 = vmul.f32 %v2476, %v2683
      %v2702 = vmul.f32 %v2479, %v2687
      %v2703 = vmul.f32 %v2482, %v2691
      %v2704 = vmul.f32 %v2485, %v2695
      %2713 = vrot.lane.b32.xlu0 %v2697, 127
      %v2714 = vpop.permute.xlu0 %2713
      %2715 = vrot.lane.b32.xlu0 %v2698, 127
      %v2716 = vpop.permute.xlu0 %2715
      %2717 = vrot.lane.b32.xlu0 %v2699, 127
      %v2718 = vpop.permute.xlu0 %2717
      %2719 = vrot.lane.b32.xlu0 %v2700, 127
      %v2720 = vpop.permute.xlu0 %2719
      %2721 = vrot.lane.b32.xlu0 %v2701, 127
      %v2722 = vpop.permute.xlu0 %2721
      %2723 = vrot.lane.b32.xlu0 %v2702, 127
      %v2724 = vpop.permute.xlu0 %2723
      %2725 = vrot.lane.b32.xlu0 %v2703, 127
      %v2726 = vpop.permute.xlu0 %2725
      %2727 = vrot.lane.b32.xlu0 %v2704, 127
      %v2728 = vpop.permute.xlu0 %2727
      %v2737 = vadd.f32 %v2657, %v2714
      %v2738 = vadd.f32 %v2658, %v2716
      %v2739 = vadd.f32 %v2659, %v2718
      %v2740 = vadd.f32 %v2660, %v2720
      %v2741 = vadd.f32 %v2661, %v2722
      %v2742 = vadd.f32 %v2662, %v2724
      %v2743 = vadd.f32 %v2663, %v2726
      %v2744 = vadd.f32 %v2664, %v2728
      %2745 = vset.pattern.permute.xlu0 3
      %2746 = vperm.xlu0 %2745, %v2488
      %v2747 = vpop.permute.xlu0 %2746
      %2749 = vset.pattern.permute.xlu0 3
      %2750 = vperm.xlu0 %2749, %v2489
      %v2751 = vpop.permute.xlu0 %2750
      %2753 = vset.pattern.permute.xlu0 3
      %2754 = vperm.xlu0 %2753, %v2490
      %v2755 = vpop.permute.xlu0 %2754
      %2757 = vset.pattern.permute.xlu0 3
      %2758 = vperm.xlu0 %2757, %v2491
      %v2759 = vpop.permute.xlu0 %2758
      %2761 = vset.pattern.permute.xlu0 3
      %2762 = vperm.xlu0 %2761, %v2492
      %v2763 = vpop.permute.xlu0 %2762
      %2765 = vset.pattern.permute.xlu0 3
      %2766 = vperm.xlu0 %2765, %v2493
      %v2767 = vpop.permute.xlu0 %2766
      %2769 = vset.pattern.permute.xlu0 3
      %2770 = vperm.xlu0 %2769, %v2494
      %v2771 = vpop.permute.xlu0 %2770
      %2773 = vset.pattern.permute.xlu0 3
      %2774 = vperm.xlu0 %2773, %v2495
      %v2775 = vpop.permute.xlu0 %2774
      %v2777 = vmul.f32 %v2464, %v2747
      %v2778 = vmul.f32 %v2465, %v2747
      %v2779 = vmul.f32 %v2467, %v2751
      %v2780 = vmul.f32 %v2468, %v2751
      %v2781 = vmul.f32 %v2470, %v2755
      %v2782 = vmul.f32 %v2471, %v2755
      %v2783 = vmul.f32 %v2473, %v2759
      %v2784 = vmul.f32 %v2474, %v2759
      %v2785 = vmul.f32 %v2476, %v2763
      %v2786 = vmul.f32 %v2477, %v2763
      %v2787 = vmul.f32 %v2479, %v2767
      %v2788 = vmul.f32 %v2480, %v2767
      %v2789 = vmul.f32 %v2482, %v2771
      %v2790 = vmul.f32 %v2483, %v2771
      %v2791 = vmul.f32 %v2485, %v2775
      %v2792 = vmul.f32 %v2486, %v2775
      %2809 = vrot.lane.b32.xlu0 %v2777, 46
      %v2810 = vpop.permute.xlu0 %2809
      %2811 = vrot.lane.b32.xlu0 %v2778, 46
      %v2812 = vpop.permute.xlu0 %2811
      %2813 = vrot.lane.b32.xlu0 %v2779, 46
      %v2814 = vpop.permute.xlu0 %2813
      %2815 = vrot.lane.b32.xlu0 %v2780, 46
      %v2816 = vpop.permute.xlu0 %2815
      %2817 = vrot.lane.b32.xlu0 %v2781, 46
      %v2818 = vpop.permute.xlu0 %2817
      %2819 = vrot.lane.b32.xlu0 %v2782, 46
      %v2820 = vpop.permute.xlu0 %2819
      %2821 = vrot.lane.b32.xlu0 %v2783, 46
      %v2822 = vpop.permute.xlu0 %2821
      %2823 = vrot.lane.b32.xlu0 %v2784, 46
      %v2824 = vpop.permute.xlu0 %2823
      %2825 = vrot.lane.b32.xlu0 %v2785, 46
      %v2826 = vpop.permute.xlu0 %2825
      %2827 = vrot.lane.b32.xlu0 %v2786, 46
      %v2828 = vpop.permute.xlu0 %2827
      %2829 = vrot.lane.b32.xlu0 %v2787, 46
      %v2830 = vpop.permute.xlu0 %2829
      %2831 = vrot.lane.b32.xlu0 %v2788, 46
      %v2832 = vpop.permute.xlu0 %2831
      %2833 = vrot.lane.b32.xlu0 %v2789, 46
      %v2834 = vpop.permute.xlu0 %2833
      %2835 = vrot.lane.b32.xlu0 %v2790, 46
      %v2836 = vpop.permute.xlu0 %2835
      %2837 = vrot.lane.b32.xlu0 %v2791, 46
      %v2838 = vpop.permute.xlu0 %2837
      %2839 = vrot.lane.b32.xlu0 %v2792, 46
      %v2840 = vpop.permute.xlu0 %2839
      %vm2841 = vcmask 375808
      %v2842 = vsel %vm2841, %v2810, %v2812
      %v2843 = vsel %vm2841, %v2814, %v2816
      %v2844 = vsel %vm2841, %v2818, %v2820
      %v2845 = vsel %vm2841, %v2822, %v2824
      %v2846 = vsel %vm2841, %v2826, %v2828
      %v2847 = vsel %vm2841, %v2830, %v2832
      %v2848 = vsel %vm2841, %v2834, %v2836
      %v2849 = vsel %vm2841, %v2838, %v2840
      %v2858 = vadd.f32 %v2737, %v2842
      %v2859 = vadd.f32 %v2738, %v2843
      %v2860 = vadd.f32 %v2739, %v2844
      %v2861 = vadd.f32 %v2740, %v2845
      %v2862 = vadd.f32 %v2741, %v2846
      %v2863 = vadd.f32 %v2742, %v2847
      %v2864 = vadd.f32 %v2743, %v2848
      %v2865 = vadd.f32 %v2744, %v2849
      %2866 = vset.pattern.permute.xlu0 4
      %2867 = vperm.xlu0 %2866, %v2488
      %v2868 = vpop.permute.xlu0 %2867
      %2870 = vset.pattern.permute.xlu0 4
      %2871 = vperm.xlu0 %2870, %v2489
      %v2872 = vpop.permute.xlu0 %2871
      %2874 = vset.pattern.permute.xlu0 4
      %2875 = vperm.xlu0 %2874, %v2490
      %v2876 = vpop.permute.xlu0 %2875
      %2878 = vset.pattern.permute.xlu0 4
      %2879 = vperm.xlu0 %2878, %v2491
      %v2880 = vpop.permute.xlu0 %2879
      %2882 = vset.pattern.permute.xlu0 4
      %2883 = vperm.xlu0 %2882, %v2492
      %v2884 = vpop.permute.xlu0 %2883
      %2886 = vset.pattern.permute.xlu0 4
      %2887 = vperm.xlu0 %2886, %v2493
      %v2888 = vpop.permute.xlu0 %2887
      %2890 = vset.pattern.permute.xlu0 4
      %2891 = vperm.xlu0 %2890, %v2494
      %v2892 = vpop.permute.xlu0 %2891
      %2894 = vset.pattern.permute.xlu0 4
      %2895 = vperm.xlu0 %2894, %v2495
      %v2896 = vpop.permute.xlu0 %2895
      %v2898 = vmul.f32 %v2465, %v2868
      %v2899 = vmul.f32 %v2468, %v2872
      %v2900 = vmul.f32 %v2471, %v2876
      %v2901 = vmul.f32 %v2474, %v2880
      %v2902 = vmul.f32 %v2477, %v2884
      %v2903 = vmul.f32 %v2480, %v2888
      %v2904 = vmul.f32 %v2483, %v2892
      %v2905 = vmul.f32 %v2486, %v2896
      %2914 = vrot.lane.b32.xlu0 %v2898, 94
      %v2915 = vpop.permute.xlu0 %2914
      %2916 = vrot.lane.b32.xlu0 %v2899, 94
      %v2917 = vpop.permute.xlu0 %2916
      %2918 = vrot.lane.b32.xlu0 %v2900, 94
      %v2919 = vpop.permute.xlu0 %2918
      %2920 = vrot.lane.b32.xlu0 %v2901, 94
      %v2921 = vpop.permute.xlu0 %2920
      %2922 = vrot.lane.b32.xlu0 %v2902, 94
      %v2923 = vpop.permute.xlu0 %2922
      %2924 = vrot.lane.b32.xlu0 %v2903, 94
      %v2925 = vpop.permute.xlu0 %2924
      %2926 = vrot.lane.b32.xlu0 %v2904, 94
      %v2927 = vpop.permute.xlu0 %2926
      %2928 = vrot.lane.b32.xlu0 %v2905, 94
      %v2929 = vpop.permute.xlu0 %2928
      %v2938 = vadd.f32 %v2858, %v2915
      %v2939 = vadd.f32 %v2859, %v2917
      %v2940 = vadd.f32 %v2860, %v2919
      %v2941 = vadd.f32 %v2861, %v2921
      %v2942 = vadd.f32 %v2862, %v2923
      %v2943 = vadd.f32 %v2863, %v2925
      %v2944 = vadd.f32 %v2864, %v2927
      %v2945 = vadd.f32 %v2865, %v2929
      %2946 = vset.pattern.permute.xlu0 5
      %2947 = vperm.xlu0 %2946, %v2488
      %v2948 = vpop.permute.xlu0 %2947
      %2950 = vset.pattern.permute.xlu0 5
      %2951 = vperm.xlu0 %2950, %v2489
      %v2952 = vpop.permute.xlu0 %2951
      %2954 = vset.pattern.permute.xlu0 5
      %2955 = vperm.xlu0 %2954, %v2490
      %v2956 = vpop.permute.xlu0 %2955
      %2958 = vset.pattern.permute.xlu0 5
      %2959 = vperm.xlu0 %2958, %v2491
      %v2960 = vpop.permute.xlu0 %2959
      %2962 = vset.pattern.permute.xlu0 5
      %2963 = vperm.xlu0 %2962, %v2492
      %v2964 = vpop.permute.xlu0 %2963
      %2966 = vset.pattern.permute.xlu0 5
      %2967 = vperm.xlu0 %2966, %v2493
      %v2968 = vpop.permute.xlu0 %2967
      %2970 = vset.pattern.permute.xlu0 5
      %2971 = vperm.xlu0 %2970, %v2494
      %v2972 = vpop.permute.xlu0 %2971
      %2974 = vset.pattern.permute.xlu0 5
      %2975 = vperm.xlu0 %2974, %v2495
      %v2976 = vpop.permute.xlu0 %2975
      %v2978 = vmul.f32 %v2465, %v2948
      %v2979 = vmul.f32 %v2466, %v2948
      %v2980 = vmul.f32 %v2468, %v2952
      %v2981 = vmul.f32 %v2469, %v2952
      %v2982 = vmul.f32 %v2471, %v2956
      %v2983 = vmul.f32 %v2472, %v2956
      %v2984 = vmul.f32 %v2474, %v2960
      %v2985 = vmul.f32 %v2475, %v2960
      %v2986 = vmul.f32 %v2477, %v2964
      %v2987 = vmul.f32 %v2478, %v2964
      %v2988 = vmul.f32 %v2480, %v2968
      %v2989 = vmul.f32 %v2481, %v2968
      %v2990 = vmul.f32 %v2483, %v2972
      %v2991 = vmul.f32 %v2484, %v2972
      %v2992 = vmul.f32 %v2486, %v2976
      %v2993 = vmul.f32 %v2487, %v2976
      %3010 = vrot.lane.b32.xlu0 %v2978, 13
      %v3011 = vpop.permute.xlu0 %3010
      %3012 = vrot.lane.b32.xlu0 %v2979, 13
      %v3013 = vpop.permute.xlu0 %3012
      %3014 = vrot.lane.b32.xlu0 %v2980, 13
      %v3015 = vpop.permute.xlu0 %3014
      %3016 = vrot.lane.b32.xlu0 %v2981, 13
      %v3017 = vpop.permute.xlu0 %3016
      %3018 = vrot.lane.b32.xlu0 %v2982, 13
      %v3019 = vpop.permute.xlu0 %3018
      %3020 = vrot.lane.b32.xlu0 %v2983, 13
      %v3021 = vpop.permute.xlu0 %3020
      %3022 = vrot.lane.b32.xlu0 %v2984, 13
      %v3023 = vpop.permute.xlu0 %3022
      %3024 = vrot.lane.b32.xlu0 %v2985, 13
      %v3025 = vpop.permute.xlu0 %3024
      %3026 = vrot.lane.b32.xlu0 %v2986, 13
      %v3027 = vpop.permute.xlu0 %3026
      %3028 = vrot.lane.b32.xlu0 %v2987, 13
      %v3029 = vpop.permute.xlu0 %3028
      %3030 = vrot.lane.b32.xlu0 %v2988, 13
      %v3031 = vpop.permute.xlu0 %3030
      %3032 = vrot.lane.b32.xlu0 %v2989, 13
      %v3033 = vpop.permute.xlu0 %3032
      %3034 = vrot.lane.b32.xlu0 %v2990, 13
      %v3035 = vpop.permute.xlu0 %3034
      %3036 = vrot.lane.b32.xlu0 %v2991, 13
      %v3037 = vpop.permute.xlu0 %3036
      %3038 = vrot.lane.b32.xlu0 %v2992, 13
      %v3039 = vpop.permute.xlu0 %3038
      %3040 = vrot.lane.b32.xlu0 %v2993, 13
      %v3041 = vpop.permute.xlu0 %3040
      %vm3042 = vcmask 105472
      %v3043 = vsel %vm3042, %v3011, %v3013
      %v3044 = vsel %vm3042, %v3015, %v3017
      %v3045 = vsel %vm3042, %v3019, %v3021
      %v3046 = vsel %vm3042, %v3023, %v3025
      %v3047 = vsel %vm3042, %v3027, %v3029
      %v3048 = vsel %vm3042, %v3031, %v3033
      %v3049 = vsel %vm3042, %v3035, %v3037
      %v3050 = vsel %vm3042, %v3039, %v3041
      %v3059 = vadd.f32 %v2938, %v3043
      %v3060 = vadd.f32 %v2939, %v3044
      %v3061 = vadd.f32 %v2940, %v3045
      %v3062 = vadd.f32 %v2941, %v3046
      %v3063 = vadd.f32 %v2942, %v3047
      %v3064 = vadd.f32 %v2943, %v3048
      %v3065 = vadd.f32 %v2944, %v3049
      %v3066 = vadd.f32 %v2945, %v3050
      %3067 = vset.pattern.permute.xlu0 6
      %3068 = vperm.xlu0 %3067, %v2488
      %v3069 = vpop.permute.xlu0 %3068
      %3071 = vset.pattern.permute.xlu0 6
      %3072 = vperm.xlu0 %3071, %v2489
      %v3073 = vpop.permute.xlu0 %3072
      %3075 = vset.pattern.permute.xlu0 6
      %3076 = vperm.xlu0 %3075, %v2490
      %v3077 = vpop.permute.xlu0 %3076
      %3079 = vset.pattern.permute.xlu0 6
      %3080 = vperm.xlu0 %3079, %v2491
      %v3081 = vpop.permute.xlu0 %3080
      %3083 = vset.pattern.permute.xlu0 6
      %3084 = vperm.xlu0 %3083, %v2492
      %v3085 = vpop.permute.xlu0 %3084
      %3087 = vset.pattern.permute.xlu0 6
      %3088 = vperm.xlu0 %3087, %v2493
      %v3089 = vpop.permute.xlu0 %3088
      %3091 = vset.pattern.permute.xlu0 6
      %3092 = vperm.xlu0 %3091, %v2494
      %v3093 = vpop.permute.xlu0 %3092
      %3095 = vset.pattern.permute.xlu0 6
      %3096 = vperm.xlu0 %3095, %v2495
      %v3097 = vpop.permute.xlu0 %3096
      %v3099 = vmul.f32 %v2465, %v3069
      %v3100 = vmul.f32 %v2468, %v3073
      %v3101 = vmul.f32 %v2471, %v3077
      %v3102 = vmul.f32 %v2474, %v3081
      %v3103 = vmul.f32 %v2477, %v3085
      %v3104 = vmul.f32 %v2480, %v3089
      %v3105 = vmul.f32 %v2483, %v3093
      %v3106 = vmul.f32 %v2486, %v3097
      %3115 = vrot.lane.b32.xlu0 %v3099, 93
      %v3116 = vpop.permute.xlu0 %3115
      %3117 = vrot.lane.b32.xlu0 %v3100, 93
      %v3118 = vpop.permute.xlu0 %3117
      %3119 = vrot.lane.b32.xlu0 %v3101, 93
      %v3120 = vpop.permute.xlu0 %3119
      %3121 = vrot.lane.b32.xlu0 %v3102, 93
      %v3122 = vpop.permute.xlu0 %3121
      %3123 = vrot.lane.b32.xlu0 %v3103, 93
      %v3124 = vpop.permute.xlu0 %3123
      %3125 = vrot.lane.b32.xlu0 %v3104, 93
      %v3126 = vpop.permute.xlu0 %3125
      %3127 = vrot.lane.b32.xlu0 %v3105, 93
      %v3128 = vpop.permute.xlu0 %3127
      %3129 = vrot.lane.b32.xlu0 %v3106, 93
      %v3130 = vpop.permute.xlu0 %3129
      %v3139 = vadd.f32 %v3059, %v3116
      %v3140 = vadd.f32 %v3060, %v3118
      %v3141 = vadd.f32 %v3061, %v3120
      %v3142 = vadd.f32 %v3062, %v3122
      %v3143 = vadd.f32 %v3063, %v3124
      %v3144 = vadd.f32 %v3064, %v3126
      %v3145 = vadd.f32 %v3065, %v3128
      %v3146 = vadd.f32 %v3066, %v3130
      %3147 = vset.pattern.permute.xlu0 7
      %3148 = vperm.xlu0 %3147, %v2488
      %v3149 = vpop.permute.xlu0 %3148
      %3151 = vset.pattern.permute.xlu0 7
      %3152 = vperm.xlu0 %3151, %v2489
      %v3153 = vpop.permute.xlu0 %3152
      %3155 = vset.pattern.permute.xlu0 7
      %3156 = vperm.xlu0 %3155, %v2490
      %v3157 = vpop.permute.xlu0 %3156
      %3159 = vset.pattern.permute.xlu0 7
      %3160 = vperm.xlu0 %3159, %v2491
      %v3161 = vpop.permute.xlu0 %3160
      %3163 = vset.pattern.permute.xlu0 7
      %3164 = vperm.xlu0 %3163, %v2492
      %v3165 = vpop.permute.xlu0 %3164
      %3167 = vset.pattern.permute.xlu0 7
      %3168 = vperm.xlu0 %3167, %v2493
      %v3169 = vpop.permute.xlu0 %3168
      %3171 = vset.pattern.permute.xlu0 7
      %3172 = vperm.xlu0 %3171, %v2494
      %v3173 = vpop.permute.xlu0 %3172
      %3175 = vset.pattern.permute.xlu0 7
      %3176 = vperm.xlu0 %3175, %v2495
      %v3177 = vpop.permute.xlu0 %3176
      %v3179 = vmul.f32 %v2465, %v3149
      %v3180 = vmul.f32 %v2466, %v3149
      %v3181 = vmul.f32 %v2468, %v3153
      %v3182 = vmul.f32 %v2469, %v3153
      %v3183 = vmul.f32 %v2471, %v3157
      %v3184 = vmul.f32 %v2472, %v3157
      %v3185 = vmul.f32 %v2474, %v3161
      %v3186 = vmul.f32 %v2475, %v3161
      %v3187 = vmul.f32 %v2477, %v3165
      %v3188 = vmul.f32 %v2478, %v3165
      %v3189 = vmul.f32 %v2480, %v3169
      %v3190 = vmul.f32 %v2481, %v3169
      %v3191 = vmul.f32 %v2483, %v3173
      %v3192 = vmul.f32 %v2484, %v3173
      %v3193 = vmul.f32 %v2486, %v3177
      %v3194 = vmul.f32 %v2487, %v3177
      %3211 = vrot.lane.b32.xlu0 %v3179, 12
      %v3212 = vpop.permute.xlu0 %3211
      %3213 = vrot.lane.b32.xlu0 %v3180, 12
      %v3214 = vpop.permute.xlu0 %3213
      %3215 = vrot.lane.b32.xlu0 %v3181, 12
      %v3216 = vpop.permute.xlu0 %3215
      %3217 = vrot.lane.b32.xlu0 %v3182, 12
      %v3218 = vpop.permute.xlu0 %3217
      %3219 = vrot.lane.b32.xlu0 %v3183, 12
      %v3220 = vpop.permute.xlu0 %3219
      %3221 = vrot.lane.b32.xlu0 %v3184, 12
      %v3222 = vpop.permute.xlu0 %3221
      %3223 = vrot.lane.b32.xlu0 %v3185, 12
      %v3224 = vpop.permute.xlu0 %3223
      %3225 = vrot.lane.b32.xlu0 %v3186, 12
      %v3226 = vpop.permute.xlu0 %3225
      %3227 = vrot.lane.b32.xlu0 %v3187, 12
      %v3228 = vpop.permute.xlu0 %3227
      %3229 = vrot.lane.b32.xlu0 %v3188, 12
      %v3230 = vpop.permute.xlu0 %3229
      %3231 = vrot.lane.b32.xlu0 %v3189, 12
      %v3232 = vpop.permute.xlu0 %3231
      %3233 = vrot.lane.b32.xlu0 %v3190, 12
      %v3234 = vpop.permute.xlu0 %3233
      %3235 = vrot.lane.b32.xlu0 %v3191, 12
      %v3236 = vpop.permute.xlu0 %3235
      %3237 = vrot.lane.b32.xlu0 %v3192, 12
      %v3238 = vpop.permute.xlu0 %3237
      %3239 = vrot.lane.b32.xlu0 %v3193, 12
      %v3240 = vpop.permute.xlu0 %3239
      %3241 = vrot.lane.b32.xlu0 %v3194, 12
      %v3242 = vpop.permute.xlu0 %3241
      %vm3243 = vcmask 97280
      %v3244 = vsel %vm3243, %v3212, %v3214
      %v3245 = vsel %vm3243, %v3216, %v3218
      %v3246 = vsel %vm3243, %v3220, %v3222
      %v3247 = vsel %vm3243, %v3224, %v3226
      %v3248 = vsel %vm3243, %v3228, %v3230
      %v3249 = vsel %vm3243, %v3232, %v3234
      %v3250 = vsel %vm3243, %v3236, %v3238
      %v3251 = vsel %vm3243, %v3240, %v3242
      %v3260 = vadd.f32 %v3139, %v3244
      %v3261 = vadd.f32 %v3140, %v3245
      %v3262 = vadd.f32 %v3141, %v3246
      %v3263 = vadd.f32 %v3142, %v3247
      %v3264 = vadd.f32 %v3143, %v3248
      %v3265 = vadd.f32 %v3144, %v3249
      %v3266 = vadd.f32 %v3145, %v3250
      %v3267 = vadd.f32 %v3146, %v3251
      %3268 = vset.pattern.permute.xlu0 8
      %3269 = vperm.xlu0 %3268, %v2488
      %v3270 = vpop.permute.xlu0 %3269
      %3272 = vset.pattern.permute.xlu0 8
      %3273 = vperm.xlu0 %3272, %v2489
      %v3274 = vpop.permute.xlu0 %3273
      %3276 = vset.pattern.permute.xlu0 8
      %3277 = vperm.xlu0 %3276, %v2490
      %v3278 = vpop.permute.xlu0 %3277
      %3280 = vset.pattern.permute.xlu0 8
      %3281 = vperm.xlu0 %3280, %v2491
      %v3282 = vpop.permute.xlu0 %3281
      %3284 = vset.pattern.permute.xlu0 8
      %3285 = vperm.xlu0 %3284, %v2492
      %v3286 = vpop.permute.xlu0 %3285
      %3288 = vset.pattern.permute.xlu0 8
      %3289 = vperm.xlu0 %3288, %v2493
      %v3290 = vpop.permute.xlu0 %3289
      %3292 = vset.pattern.permute.xlu0 8
      %3293 = vperm.xlu0 %3292, %v2494
      %v3294 = vpop.permute.xlu0 %3293
      %3296 = vset.pattern.permute.xlu0 8
      %3297 = vperm.xlu0 %3296, %v2495
      %v3298 = vpop.permute.xlu0 %3297
      %v3300 = vmul.f32 %v2464, %v3270
      %v3301 = vmul.f32 %v2467, %v3274
      %v3302 = vmul.f32 %v2470, %v3278
      %v3303 = vmul.f32 %v2473, %v3282
      %v3304 = vmul.f32 %v2476, %v3286
      %v3305 = vmul.f32 %v2479, %v3290
      %v3306 = vmul.f32 %v2482, %v3294
      %v3307 = vmul.f32 %v2485, %v3298
      %3316 = vrot.lane.b32.xlu0 %v3300, 119
      %v3317 = vpop.permute.xlu0 %3316
      %3318 = vrot.lane.b32.xlu0 %v3301, 119
      %v3319 = vpop.permute.xlu0 %3318
      %3320 = vrot.lane.b32.xlu0 %v3302, 119
      %v3321 = vpop.permute.xlu0 %3320
      %3322 = vrot.lane.b32.xlu0 %v3303, 119
      %v3323 = vpop.permute.xlu0 %3322
      %3324 = vrot.lane.b32.xlu0 %v3304, 119
      %v3325 = vpop.permute.xlu0 %3324
      %3326 = vrot.lane.b32.xlu0 %v3305, 119
      %v3327 = vpop.permute.xlu0 %3326
      %3328 = vrot.lane.b32.xlu0 %v3306, 119
      %v3329 = vpop.permute.xlu0 %3328
      %3330 = vrot.lane.b32.xlu0 %v3307, 119
      %v3331 = vpop.permute.xlu0 %3330
      %v3340 = vadd.f32 %v3260, %v3317
      %v3341 = vadd.f32 %v3261, %v3319
      %v3342 = vadd.f32 %v3262, %v3321
      %v3343 = vadd.f32 %v3263, %v3323
      %v3344 = vadd.f32 %v3264, %v3325
      %v3345 = vadd.f32 %v3265, %v3327
      %v3346 = vadd.f32 %v3266, %v3329
      %v3347 = vadd.f32 %v3267, %v3331
      %3348 = vset.pattern.permute.xlu0 9
      %3349 = vperm.xlu0 %3348, %v2488
      %v3350 = vpop.permute.xlu0 %3349
      %3352 = vset.pattern.permute.xlu0 9
      %3353 = vperm.xlu0 %3352, %v2489
      %v3354 = vpop.permute.xlu0 %3353
      %3356 = vset.pattern.permute.xlu0 9
      %3357 = vperm.xlu0 %3356, %v2490
      %v3358 = vpop.permute.xlu0 %3357
      %3360 = vset.pattern.permute.xlu0 9
      %3361 = vperm.xlu0 %3360, %v2491
      %v3362 = vpop.permute.xlu0 %3361
      %3364 = vset.pattern.permute.xlu0 9
      %3365 = vperm.xlu0 %3364, %v2492
      %v3366 = vpop.permute.xlu0 %3365
      %3368 = vset.pattern.permute.xlu0 9
      %3369 = vperm.xlu0 %3368, %v2493
      %v3370 = vpop.permute.xlu0 %3369
      %3372 = vset.pattern.permute.xlu0 9
      %3373 = vperm.xlu0 %3372, %v2494
      %v3374 = vpop.permute.xlu0 %3373
      %3376 = vset.pattern.permute.xlu0 9
      %3377 = vperm.xlu0 %3376, %v2495
      %v3378 = vpop.permute.xlu0 %3377
      %v3380 = vmul.f32 %v2464, %v3350
      %v3381 = vmul.f32 %v2465, %v3350
      %v3382 = vmul.f32 %v2467, %v3354
      %v3383 = vmul.f32 %v2468, %v3354
      %v3384 = vmul.f32 %v2470, %v3358
      %v3385 = vmul.f32 %v2471, %v3358
      %v3386 = vmul.f32 %v2473, %v3362
      %v3387 = vmul.f32 %v2474, %v3362
      %v3388 = vmul.f32 %v2476, %v3366
      %v3389 = vmul.f32 %v2477, %v3366
      %v3390 = vmul.f32 %v2479, %v3370
      %v3391 = vmul.f32 %v2480, %v3370
      %v3392 = vmul.f32 %v2482, %v3374
      %v3393 = vmul.f32 %v2483, %v3374
      %v3394 = vmul.f32 %v2485, %v3378
      %v3395 = vmul.f32 %v2486, %v3378
      %3412 = vrot.lane.b32.xlu0 %v3380, 38
      %v3413 = vpop.permute.xlu0 %3412
      %3414 = vrot.lane.b32.xlu0 %v3381, 38
      %v3415 = vpop.permute.xlu0 %3414
      %3416 = vrot.lane.b32.xlu0 %v3382, 38
      %v3417 = vpop.permute.xlu0 %3416
      %3418 = vrot.lane.b32.xlu0 %v3383, 38
      %v3419 = vpop.permute.xlu0 %3418
      %3420 = vrot.lane.b32.xlu0 %v3384, 38
      %v3421 = vpop.permute.xlu0 %3420
      %3422 = vrot.lane.b32.xlu0 %v3385, 38
      %v3423 = vpop.permute.xlu0 %3422
      %3424 = vrot.lane.b32.xlu0 %v3386, 38
      %v3425 = vpop.permute.xlu0 %3424
      %3426 = vrot.lane.b32.xlu0 %v3387, 38
      %v3427 = vpop.permute.xlu0 %3426
      %3428 = vrot.lane.b32.xlu0 %v3388, 38
      %v3429 = vpop.permute.xlu0 %3428
      %3430 = vrot.lane.b32.xlu0 %v3389, 38
      %v3431 = vpop.permute.xlu0 %3430
      %3432 = vrot.lane.b32.xlu0 %v3390, 38
      %v3433 = vpop.permute.xlu0 %3432
      %3434 = vrot.lane.b32.xlu0 %v3391, 38
      %v3435 = vpop.permute.xlu0 %3434
      %3436 = vrot.lane.b32.xlu0 %v3392, 38
      %v3437 = vpop.permute.xlu0 %3436
      %3438 = vrot.lane.b32.xlu0 %v3393, 38
      %v3439 = vpop.permute.xlu0 %3438
      %3440 = vrot.lane.b32.xlu0 %v3394, 38
      %v3441 = vpop.permute.xlu0 %3440
      %3442 = vrot.lane.b32.xlu0 %v3395, 38
      %v3443 = vpop.permute.xlu0 %3442
      %vm3444 = vcmask 310272
      %v3445 = vsel %vm3444, %v3413, %v3415
      %v3446 = vsel %vm3444, %v3417, %v3419
      %v3447 = vsel %vm3444, %v3421, %v3423
      %v3448 = vsel %vm3444, %v3425, %v3427
      %v3449 = vsel %vm3444, %v3429, %v3431
      %v3450 = vsel %vm3444, %v3433, %v3435
      %v3451 = vsel %vm3444, %v3437, %v3439
      %v3452 = vsel %vm3444, %v3441, %v3443
      %v3461 = vadd.f32 %v3340, %v3445
      %v3462 = vadd.f32 %v3341, %v3446
      %v3463 = vadd.f32 %v3342, %v3447
      %v3464 = vadd.f32 %v3343, %v3448
      %v3465 = vadd.f32 %v3344, %v3449
      %v3466 = vadd.f32 %v3345, %v3450
      %v3467 = vadd.f32 %v3346, %v3451
      %v3468 = vadd.f32 %v3347, %v3452
      %3469 = vset.pattern.permute.xlu0 10
      %3470 = vperm.xlu0 %3469, %v2488
      %v3471 = vpop.permute.xlu0 %3470
      %3473 = vset.pattern.permute.xlu0 10
      %3474 = vperm.xlu0 %3473, %v2489
      %v3475 = vpop.permute.xlu0 %3474
      %3477 = vset.pattern.permute.xlu0 10
      %3478 = vperm.xlu0 %3477, %v2490
      %v3479 = vpop.permute.xlu0 %3478
      %3481 = vset.pattern.permute.xlu0 10
      %3482 = vperm.xlu0 %3481, %v2491
      %v3483 = vpop.permute.xlu0 %3482
      %3485 = vset.pattern.permute.xlu0 10
      %3486 = vperm.xlu0 %3485, %v2492
      %v3487 = vpop.permute.xlu0 %3486
      %3489 = vset.pattern.permute.xlu0 10
      %3490 = vperm.xlu0 %3489, %v2493
      %v3491 = vpop.permute.xlu0 %3490
      %3493 = vset.pattern.permute.xlu0 10
      %3494 = vperm.xlu0 %3493, %v2494
      %v3495 = vpop.permute.xlu0 %3494
      %3497 = vset.pattern.permute.xlu0 10
      %3498 = vperm.xlu0 %3497, %v2495
      %v3499 = vpop.permute.xlu0 %3498
      %v3501 = vmul.f32 %v2464, %v3471
      %v3502 = vmul.f32 %v2467, %v3475
      %v3503 = vmul.f32 %v2470, %v3479
      %v3504 = vmul.f32 %v2473, %v3483
      %v3505 = vmul.f32 %v2476, %v3487
      %v3506 = vmul.f32 %v2479, %v3491
      %v3507 = vmul.f32 %v2482, %v3495
      %v3508 = vmul.f32 %v2485, %v3499
      %3517 = vrot.lane.b32.xlu0 %v3501, 118
      %v3518 = vpop.permute.xlu0 %3517
      %3519 = vrot.lane.b32.xlu0 %v3502, 118
      %v3520 = vpop.permute.xlu0 %3519
      %3521 = vrot.lane.b32.xlu0 %v3503, 118
      %v3522 = vpop.permute.xlu0 %3521
      %3523 = vrot.lane.b32.xlu0 %v3504, 118
      %v3524 = vpop.permute.xlu0 %3523
      %3525 = vrot.lane.b32.xlu0 %v3505, 118
      %v3526 = vpop.permute.xlu0 %3525
      %3527 = vrot.lane.b32.xlu0 %v3506, 118
      %v3528 = vpop.permute.xlu0 %3527
      %3529 = vrot.lane.b32.xlu0 %v3507, 118
      %v3530 = vpop.permute.xlu0 %3529
      %3531 = vrot.lane.b32.xlu0 %v3508, 118
      %v3532 = vpop.permute.xlu0 %3531
      %v3541 = vadd.f32 %v3461, %v3518
      %v3542 = vadd.f32 %v3462, %v3520
      %v3543 = vadd.f32 %v3463, %v3522
      %v3544 = vadd.f32 %v3464, %v3524
      %v3545 = vadd.f32 %v3465, %v3526
      %v3546 = vadd.f32 %v3466, %v3528
      %v3547 = vadd.f32 %v3467, %v3530
      %v3548 = vadd.f32 %v3468, %v3532
      %3549 = vset.pattern.permute.xlu0 11
      %3550 = vperm.xlu0 %3549, %v2488
      %v3551 = vpop.permute.xlu0 %3550
      %3553 = vset.pattern.permute.xlu0 11
      %3554 = vperm.xlu0 %3553, %v2489
      %v3555 = vpop.permute.xlu0 %3554
      %3557 = vset.pattern.permute.xlu0 11
      %3558 = vperm.xlu0 %3557, %v2490
      %v3559 = vpop.permute.xlu0 %3558
      %3561 = vset.pattern.permute.xlu0 11
      %3562 = vperm.xlu0 %3561, %v2491
      %v3563 = vpop.permute.xlu0 %3562
      %3565 = vset.pattern.permute.xlu0 11
      %3566 = vperm.xlu0 %3565, %v2492
      %v3567 = vpop.permute.xlu0 %3566
      %3569 = vset.pattern.permute.xlu0 11
      %3570 = vperm.xlu0 %3569, %v2493
      %v3571 = vpop.permute.xlu0 %3570
      %3573 = vset.pattern.permute.xlu0 11
      %3574 = vperm.xlu0 %3573, %v2494
      %v3575 = vpop.permute.xlu0 %3574
      %3577 = vset.pattern.permute.xlu0 11
      %3578 = vperm.xlu0 %3577, %v2495
      %v3579 = vpop.permute.xlu0 %3578
      %v3581 = vmul.f32 %v2464, %v3551
      %v3582 = vmul.f32 %v2465, %v3551
      %v3583 = vmul.f32 %v2467, %v3555
      %v3584 = vmul.f32 %v2468, %v3555
      %v3585 = vmul.f32 %v2470, %v3559
      %v3586 = vmul.f32 %v2471, %v3559
      %v3587 = vmul.f32 %v2473, %v3563
      %v3588 = vmul.f32 %v2474, %v3563
      %v3589 = vmul.f32 %v2476, %v3567
      %v3590 = vmul.f32 %v2477, %v3567
      %v3591 = vmul.f32 %v2479, %v3571
      %v3592 = vmul.f32 %v2480, %v3571
      %v3593 = vmul.f32 %v2482, %v3575
      %v3594 = vmul.f32 %v2483, %v3575
      %v3595 = vmul.f32 %v2485, %v3579
      %v3596 = vmul.f32 %v2486, %v3579
      %3613 = vrot.lane.b32.xlu0 %v3581, 37
      %v3614 = vpop.permute.xlu0 %3613
      %3615 = vrot.lane.b32.xlu0 %v3582, 37
      %v3616 = vpop.permute.xlu0 %3615
      %3617 = vrot.lane.b32.xlu0 %v3583, 37
      %v3618 = vpop.permute.xlu0 %3617
      %3619 = vrot.lane.b32.xlu0 %v3584, 37
      %v3620 = vpop.permute.xlu0 %3619
      %3621 = vrot.lane.b32.xlu0 %v3585, 37
      %v3622 = vpop.permute.xlu0 %3621
      %3623 = vrot.lane.b32.xlu0 %v3586, 37
      %v3624 = vpop.permute.xlu0 %3623
      %3625 = vrot.lane.b32.xlu0 %v3587, 37
      %v3626 = vpop.permute.xlu0 %3625
      %3627 = vrot.lane.b32.xlu0 %v3588, 37
      %v3628 = vpop.permute.xlu0 %3627
      %3629 = vrot.lane.b32.xlu0 %v3589, 37
      %v3630 = vpop.permute.xlu0 %3629
      %3631 = vrot.lane.b32.xlu0 %v3590, 37
      %v3632 = vpop.permute.xlu0 %3631
      %3633 = vrot.lane.b32.xlu0 %v3591, 37
      %v3634 = vpop.permute.xlu0 %3633
      %3635 = vrot.lane.b32.xlu0 %v3592, 37
      %v3636 = vpop.permute.xlu0 %3635
      %3637 = vrot.lane.b32.xlu0 %v3593, 37
      %v3638 = vpop.permute.xlu0 %3637
      %3639 = vrot.lane.b32.xlu0 %v3594, 37
      %v3640 = vpop.permute.xlu0 %3639
      %3641 = vrot.lane.b32.xlu0 %v3595, 37
      %v3642 = vpop.permute.xlu0 %3641
      %3643 = vrot.lane.b32.xlu0 %v3596, 37
      %v3644 = vpop.permute.xlu0 %3643
      %vm3645 = vcmask 302080
      %v3646 = vsel %vm3645, %v3614, %v3616
      %v3647 = vsel %vm3645, %v3618, %v3620
      %v3648 = vsel %vm3645, %v3622, %v3624
      %v3649 = vsel %vm3645, %v3626, %v3628
      %v3650 = vsel %vm3645, %v3630, %v3632
      %v3651 = vsel %vm3645, %v3634, %v3636
      %v3652 = vsel %vm3645, %v3638, %v3640
      %v3653 = vsel %vm3645, %v3642, %v3644
      %v3662 = vadd.f32 %v3541, %v3646
      %v3663 = vadd.f32 %v3542, %v3647
      %v3664 = vadd.f32 %v3543, %v3648
      %v3665 = vadd.f32 %v3544, %v3649
      %v3666 = vadd.f32 %v3545, %v3650
      %v3667 = vadd.f32 %v3546, %v3651
      %v3668 = vadd.f32 %v3547, %v3652
      %v3669 = vadd.f32 %v3548, %v3653
      %3670 = vset.pattern.permute.xlu0 12
      %3671 = vperm.xlu0 %3670, %v2488
      %v3672 = vpop.permute.xlu0 %3671
      %3674 = vset.pattern.permute.xlu0 12
      %3675 = vperm.xlu0 %3674, %v2489
      %v3676 = vpop.permute.xlu0 %3675
      %3678 = vset.pattern.permute.xlu0 12
      %3679 = vperm.xlu0 %3678, %v2490
      %v3680 = vpop.permute.xlu0 %3679
      %3682 = vset.pattern.permute.xlu0 12
      %3683 = vperm.xlu0 %3682, %v2491
      %v3684 = vpop.permute.xlu0 %3683
      %3686 = vset.pattern.permute.xlu0 12
      %3687 = vperm.xlu0 %3686, %v2492
      %v3688 = vpop.permute.xlu0 %3687
      %3690 = vset.pattern.permute.xlu0 12
      %3691 = vperm.xlu0 %3690, %v2493
      %v3692 = vpop.permute.xlu0 %3691
      %3694 = vset.pattern.permute.xlu0 12
      %3695 = vperm.xlu0 %3694, %v2494
      %v3696 = vpop.permute.xlu0 %3695
      %3698 = vset.pattern.permute.xlu0 12
      %3699 = vperm.xlu0 %3698, %v2495
      %v3700 = vpop.permute.xlu0 %3699
      %v3702 = vmul.f32 %v2465, %v3672
      %v3703 = vmul.f32 %v2468, %v3676
      %v3704 = vmul.f32 %v2471, %v3680
      %v3705 = vmul.f32 %v2474, %v3684
      %v3706 = vmul.f32 %v2477, %v3688
      %v3707 = vmul.f32 %v2480, %v3692
      %v3708 = vmul.f32 %v2483, %v3696
      %v3709 = vmul.f32 %v2486, %v3700
      %3718 = vrot.lane.b32.xlu0 %v3702, 85
      %v3719 = vpop.permute.xlu0 %3718
      %3720 = vrot.lane.b32.xlu0 %v3703, 85
      %v3721 = vpop.permute.xlu0 %3720
      %3722 = vrot.lane.b32.xlu0 %v3704, 85
      %v3723 = vpop.permute.xlu0 %3722
      %3724 = vrot.lane.b32.xlu0 %v3705, 85
      %v3725 = vpop.permute.xlu0 %3724
      %3726 = vrot.lane.b32.xlu0 %v3706, 85
      %v3727 = vpop.permute.xlu0 %3726
      %3728 = vrot.lane.b32.xlu0 %v3707, 85
      %v3729 = vpop.permute.xlu0 %3728
      %3730 = vrot.lane.b32.xlu0 %v3708, 85
      %v3731 = vpop.permute.xlu0 %3730
      %3732 = vrot.lane.b32.xlu0 %v3709, 85
      %v3733 = vpop.permute.xlu0 %3732
      %v3742 = vadd.f32 %v3662, %v3719
      %v3743 = vadd.f32 %v3663, %v3721
      %v3744 = vadd.f32 %v3664, %v3723
      %v3745 = vadd.f32 %v3665, %v3725
      %v3746 = vadd.f32 %v3666, %v3727
      %v3747 = vadd.f32 %v3667, %v3729
      %v3748 = vadd.f32 %v3668, %v3731
      %v3749 = vadd.f32 %v3669, %v3733
      %3750 = vset.pattern.permute.xlu0 13
      %3751 = vperm.xlu0 %3750, %v2488
      %v3752 = vpop.permute.xlu0 %3751
      %3754 = vset.pattern.permute.xlu0 13
      %3755 = vperm.xlu0 %3754, %v2489
      %v3756 = vpop.permute.xlu0 %3755
      %3758 = vset.pattern.permute.xlu0 13
      %3759 = vperm.xlu0 %3758, %v2490
      %v3760 = vpop.permute.xlu0 %3759
      %3762 = vset.pattern.permute.xlu0 13
      %3763 = vperm.xlu0 %3762, %v2491
      %v3764 = vpop.permute.xlu0 %3763
      %3766 = vset.pattern.permute.xlu0 13
      %3767 = vperm.xlu0 %3766, %v2492
      %v3768 = vpop.permute.xlu0 %3767
      %3770 = vset.pattern.permute.xlu0 13
      %3771 = vperm.xlu0 %3770, %v2493
      %v3772 = vpop.permute.xlu0 %3771
      %3774 = vset.pattern.permute.xlu0 13
      %3775 = vperm.xlu0 %3774, %v2494
      %v3776 = vpop.permute.xlu0 %3775
      %3778 = vset.pattern.permute.xlu0 13
      %3779 = vperm.xlu0 %3778, %v2495
      %v3780 = vpop.permute.xlu0 %3779
      %v3782 = vmul.f32 %v2465, %v3752
      %v3783 = vmul.f32 %v2466, %v3752
      %v3784 = vmul.f32 %v2468, %v3756
      %v3785 = vmul.f32 %v2469, %v3756
      %v3786 = vmul.f32 %v2471, %v3760
      %v3787 = vmul.f32 %v2472, %v3760
      %v3788 = vmul.f32 %v2474, %v3764
      %v3789 = vmul.f32 %v2475, %v3764
      %v3790 = vmul.f32 %v2477, %v3768
      %v3791 = vmul.f32 %v2478, %v3768
      %v3792 = vmul.f32 %v2480, %v3772
      %v3793 = vmul.f32 %v2481, %v3772
      %v3794 = vmul.f32 %v2483, %v3776
      %v3795 = vmul.f32 %v2484, %v3776
      %v3796 = vmul.f32 %v2486, %v3780
      %v3797 = vmul.f32 %v2487, %v3780
      %3814 = vrot.lane.b32.xlu0 %v3782, 4
      %v3815 = vpop.permute.xlu0 %3814
      %3816 = vrot.lane.b32.xlu0 %v3783, 4
      %v3817 = vpop.permute.xlu0 %3816
      %3818 = vrot.lane.b32.xlu0 %v3784, 4
      %v3819 = vpop.permute.xlu0 %3818
      %3820 = vrot.lane.b32.xlu0 %v3785, 4
      %v3821 = vpop.permute.xlu0 %3820
      %3822 = vrot.lane.b32.xlu0 %v3786, 4
      %v3823 = vpop.permute.xlu0 %3822
      %3824 = vrot.lane.b32.xlu0 %v3787, 4
      %v3825 = vpop.permute.xlu0 %3824
      %3826 = vrot.lane.b32.xlu0 %v3788, 4
      %v3827 = vpop.permute.xlu0 %3826
      %3828 = vrot.lane.b32.xlu0 %v3789, 4
      %v3829 = vpop.permute.xlu0 %3828
      %3830 = vrot.lane.b32.xlu0 %v3790, 4
      %v3831 = vpop.permute.xlu0 %3830
      %3832 = vrot.lane.b32.xlu0 %v3791, 4
      %v3833 = vpop.permute.xlu0 %3832
      %3834 = vrot.lane.b32.xlu0 %v3792, 4
      %v3835 = vpop.permute.xlu0 %3834
      %3836 = vrot.lane.b32.xlu0 %v3793, 4
      %v3837 = vpop.permute.xlu0 %3836
      %3838 = vrot.lane.b32.xlu0 %v3794, 4
      %v3839 = vpop.permute.xlu0 %3838
      %3840 = vrot.lane.b32.xlu0 %v3795, 4
      %v3841 = vpop.permute.xlu0 %3840
      %3842 = vrot.lane.b32.xlu0 %v3796, 4
      %v3843 = vpop.permute.xlu0 %3842
      %3844 = vrot.lane.b32.xlu0 %v3797, 4
      %v3845 = vpop.permute.xlu0 %3844
      %vm3846 = vcmask 31744
      %v3847 = vsel %vm3846, %v3815, %v3817
      %v3848 = vsel %vm3846, %v3819, %v3821
      %v3849 = vsel %vm3846, %v3823, %v3825
      %v3850 = vsel %vm3846, %v3827, %v3829
      %v3851 = vsel %vm3846, %v3831, %v3833
      %v3852 = vsel %vm3846, %v3835, %v3837
      %v3853 = vsel %vm3846, %v3839, %v3841
      %v3854 = vsel %vm3846, %v3843, %v3845
      %v3863 = vadd.f32 %v3742, %v3847
      %v3864 = vadd.f32 %v3743, %v3848
      %v3865 = vadd.f32 %v3744, %v3849
      %v3866 = vadd.f32 %v3745, %v3850
      %v3867 = vadd.f32 %v3746, %v3851
      %v3868 = vadd.f32 %v3747, %v3852
      %v3869 = vadd.f32 %v3748, %v3853
      %v3870 = vadd.f32 %v3749, %v3854
      %3871 = vset.pattern.permute.xlu0 14
      %3872 = vperm.xlu0 %3871, %v2488
      %v3873 = vpop.permute.xlu0 %3872
      %3875 = vset.pattern.permute.xlu0 14
      %3876 = vperm.xlu0 %3875, %v2489
      %v3877 = vpop.permute.xlu0 %3876
      %3879 = vset.pattern.permute.xlu0 14
      %3880 = vperm.xlu0 %3879, %v2490
      %v3881 = vpop.permute.xlu0 %3880
      %3883 = vset.pattern.permute.xlu0 14
      %3884 = vperm.xlu0 %3883, %v2491
      %v3885 = vpop.permute.xlu0 %3884
      %3887 = vset.pattern.permute.xlu0 14
      %3888 = vperm.xlu0 %3887, %v2492
      %v3889 = vpop.permute.xlu0 %3888
      %3891 = vset.pattern.permute.xlu0 14
      %3892 = vperm.xlu0 %3891, %v2493
      %v3893 = vpop.permute.xlu0 %3892
      %3895 = vset.pattern.permute.xlu0 14
      %3896 = vperm.xlu0 %3895, %v2494
      %v3897 = vpop.permute.xlu0 %3896
      %3899 = vset.pattern.permute.xlu0 14
      %3900 = vperm.xlu0 %3899, %v2495
      %v3901 = vpop.permute.xlu0 %3900
      %v3903 = vmul.f32 %v2465, %v3873
      %v3904 = vmul.f32 %v2468, %v3877
      %v3905 = vmul.f32 %v2471, %v3881
      %v3906 = vmul.f32 %v2474, %v3885
      %v3907 = vmul.f32 %v2477, %v3889
      %v3908 = vmul.f32 %v2480, %v3893
      %v3909 = vmul.f32 %v2483, %v3897
      %v3910 = vmul.f32 %v2486, %v3901
      %3919 = vrot.lane.b32.xlu0 %v3903, 84
      %v3920 = vpop.permute.xlu0 %3919
      %3921 = vrot.lane.b32.xlu0 %v3904, 84
      %v3922 = vpop.permute.xlu0 %3921
      %3923 = vrot.lane.b32.xlu0 %v3905, 84
      %v3924 = vpop.permute.xlu0 %3923
      %3925 = vrot.lane.b32.xlu0 %v3906, 84
      %v3926 = vpop.permute.xlu0 %3925
      %3927 = vrot.lane.b32.xlu0 %v3907, 84
      %v3928 = vpop.permute.xlu0 %3927
      %3929 = vrot.lane.b32.xlu0 %v3908, 84
      %v3930 = vpop.permute.xlu0 %3929
      %3931 = vrot.lane.b32.xlu0 %v3909, 84
      %v3932 = vpop.permute.xlu0 %3931
      %3933 = vrot.lane.b32.xlu0 %v3910, 84
      %v3934 = vpop.permute.xlu0 %3933
      %v3943 = vadd.f32 %v3863, %v3920
      %v3944 = vadd.f32 %v3864, %v3922
      %v3945 = vadd.f32 %v3865, %v3924
      %v3946 = vadd.f32 %v3866, %v3926
      %v3947 = vadd.f32 %v3867, %v3928
      %v3948 = vadd.f32 %v3868, %v3930
      %v3949 = vadd.f32 %v3869, %v3932
      %v3950 = vadd.f32 %v3870, %v3934
      %3951 = vset.pattern.permute.xlu0 15
      %3952 = vperm.xlu0 %3951, %v2488
      %v3953 = vpop.permute.xlu0 %3952
      %3955 = vset.pattern.permute.xlu0 15
      %3956 = vperm.xlu0 %3955, %v2489
      %v3957 = vpop.permute.xlu0 %3956
      %3959 = vset.pattern.permute.xlu0 15
      %3960 = vperm.xlu0 %3959, %v2490
      %v3961 = vpop.permute.xlu0 %3960
      %3963 = vset.pattern.permute.xlu0 15
      %3964 = vperm.xlu0 %3963, %v2491
      %v3965 = vpop.permute.xlu0 %3964
      %3967 = vset.pattern.permute.xlu0 15
      %3968 = vperm.xlu0 %3967, %v2492
      %v3969 = vpop.permute.xlu0 %3968
      %3971 = vset.pattern.permute.xlu0 15
      %3972 = vperm.xlu0 %3971, %v2493
      %v3973 = vpop.permute.xlu0 %3972
      %3975 = vset.pattern.permute.xlu0 15
      %3976 = vperm.xlu0 %3975, %v2494
      %v3977 = vpop.permute.xlu0 %3976
      %3979 = vset.pattern.permute.xlu0 15
      %3980 = vperm.xlu0 %3979, %v2495
      %v3981 = vpop.permute.xlu0 %3980
      %v3983 = vmul.f32 %v2465, %v3953
      %v3984 = vmul.f32 %v2466, %v3953
      %v3985 = vmul.f32 %v2468, %v3957
      %v3986 = vmul.f32 %v2469, %v3957
      %v3987 = vmul.f32 %v2471, %v3961
      %v3988 = vmul.f32 %v2472, %v3961
      %v3989 = vmul.f32 %v2474, %v3965
      %v3990 = vmul.f32 %v2475, %v3965
      %v3991 = vmul.f32 %v2477, %v3969
      %v3992 = vmul.f32 %v2478, %v3969
      %v3993 = vmul.f32 %v2480, %v3973
      %v3994 = vmul.f32 %v2481, %v3973
      %v3995 = vmul.f32 %v2483, %v3977
      %v3996 = vmul.f32 %v2484, %v3977
      %v3997 = vmul.f32 %v2486, %v3981
      %v3998 = vmul.f32 %v2487, %v3981
      %4015 = vrot.lane.b32.xlu0 %v3983, 3
      %v4016 = vpop.permute.xlu0 %4015
      %4017 = vrot.lane.b32.xlu0 %v3984, 3
      %v4018 = vpop.permute.xlu0 %4017
      %4019 = vrot.lane.b32.xlu0 %v3985, 3
      %v4020 = vpop.permute.xlu0 %4019
      %4021 = vrot.lane.b32.xlu0 %v3986, 3
      %v4022 = vpop.permute.xlu0 %4021
      %4023 = vrot.lane.b32.xlu0 %v3987, 3
      %v4024 = vpop.permute.xlu0 %4023
      %4025 = vrot.lane.b32.xlu0 %v3988, 3
      %v4026 = vpop.permute.xlu0 %4025
      %4027 = vrot.lane.b32.xlu0 %v3989, 3
      %v4028 = vpop.permute.xlu0 %4027
      %4029 = vrot.lane.b32.xlu0 %v3990, 3
      %v4030 = vpop.permute.xlu0 %4029
      %4031 = vrot.lane.b32.xlu0 %v3991, 3
      %v4032 = vpop.permute.xlu0 %4031
      %4033 = vrot.lane.b32.xlu0 %v3992, 3
      %v4034 = vpop.permute.xlu0 %4033
      %4035 = vrot.lane.b32.xlu0 %v3993, 3
      %v4036 = vpop.permute.xlu0 %4035
      %4037 = vrot.lane.b32.xlu0 %v3994, 3
      %v4038 = vpop.permute.xlu0 %4037
      %4039 = vrot.lane.b32.xlu0 %v3995, 3
      %v4040 = vpop.permute.xlu0 %4039
      %4041 = vrot.lane.b32.xlu0 %v3996, 3
      %v4042 = vpop.permute.xlu0 %4041
      %4043 = vrot.lane.b32.xlu0 %v3997, 3
      %v4044 = vpop.permute.xlu0 %4043
      %4045 = vrot.lane.b32.xlu0 %v3998, 3
      %v4046 = vpop.permute.xlu0 %4045
      %vm4047 = vcmask 23552
      %v4048 = vsel %vm4047, %v4016, %v4018
      %v4049 = vsel %vm4047, %v4020, %v4022
      %v4050 = vsel %vm4047, %v4024, %v4026
      %v4051 = vsel %vm4047, %v4028, %v4030
      %v4052 = vsel %vm4047, %v4032, %v4034
      %v4053 = vsel %vm4047, %v4036, %v4038
      %v4054 = vsel %vm4047, %v4040, %v4042
      %v4055 = vsel %vm4047, %v4044, %v4046
      %v4064 = vadd.f32 %v3943, %v4048
      %v4065 = vadd.f32 %v3944, %v4049
      %v4066 = vadd.f32 %v3945, %v4050
      %v4067 = vadd.f32 %v3946, %v4051
      %v4068 = vadd.f32 %v3947, %v4052
      %v4069 = vadd.f32 %v3948, %v4053
      %v4070 = vadd.f32 %v3949, %v4054
      %v4071 = vadd.f32 %v3950, %v4055
      %v4072 = vadd.f32 %v4064, %v4068
      %v4073 = vadd.f32 %v4065, %v4069
      %v4074 = vadd.f32 %v4066, %v4070
      %v4075 = vadd.f32 %v4067, %v4071
      %v4076 = vld [vmem:[%s5] sm:$0xff]
      %v4077 = vld [vmem:[%s5 + $0x8] sm:$0xff]
      %v4078 = vld [vmem:[%s5 + $0x10] sm:$0xff]
      %v4079 = vld [vmem:[%s5 + $0x18] sm:$0xff]
      %4081 = vset.pattern.permute.xlu0 0
      %4082 = vperm.xlu0 %4081, %v4076
      %v4083 = vpop.permute.xlu0 %4082
      %4086 = vset.pattern.permute.xlu0 0
      %4087 = vperm.xlu0 %4086, %v4077
      %v4088 = vpop.permute.xlu0 %4087
      %4091 = vset.pattern.permute.xlu0 0
      %4092 = vperm.xlu0 %4091, %v4078
      %v4093 = vpop.permute.xlu0 %4092
      %4096 = vset.pattern.permute.xlu0 0
      %4097 = vperm.xlu0 %4096, %v4079
      %v4098 = vpop.permute.xlu0 %4097
      %v4100 = vadd.f32 %v4072, %v4083
      %v4101 = vadd.f32 %v4073, %v4088
      %v4102 = vadd.f32 %v4074, %v4093
      %v4103 = vadd.f32 %v4075, %v4098
      %v4104 = vmax.f32 %v4100, 0.0
      %v4105 = vmax.f32 %v4101, 0.0
      %v4106 = vmax.f32 %v4102, 0.0
      %v4107 = vmax.f32 %v4103, 0.0
      %v4108 = vld [vmem:[%s431] sm:$0xff]
      %4110 = vrot.lane.b32.xlu0 %v4105, 81
      %v4111 = vpop.permute.xlu0 %4110
      %4114 = vrot.lane.b32.xlu0 %v4106, 34
      %v4115 = vpop.permute.xlu0 %4114
      %4118 = vrot.lane.b32.xlu0 %v4107, 115
      %v4119 = vpop.permute.xlu0 %4118
      %4122 = vrot.lane.b32.xlu0 %v4108, 68
      %v4123 = vpop.permute.xlu0 %4122
      %vm4125 = vcmask 662528
      %v4126 = vsel %vm4125, %v4104, %v4111
      %vm4127 = vcmask 277504
      %v4128 = vsel %vm4127, %v4111, %v4115
      %vm4129 = vcmask 941056
      %v4130 = vsel %vm4129, %v4128, %v4119
      %vm4131 = vcmask 556032
      %v4132 = vsel %vm4131, %v4119, %v4123
      %v4133 = vld [vmem:[%s6] sm:$0xff]
      %v4134 = vld [vmem:[%s6 + $0x8] sm:$0xff]
      %v4135 = vld [vmem:[%s6 + $0x10] sm:$0xff]
      %v4136 = vld [vmem:[%s6 + $0x18] sm:$0xff]
      %v4137 = vld [vmem:[%s6 + $0x20] sm:$0xff]
      %v4138 = vld [vmem:[%s6 + $0x28] sm:$0xff]
      %v4139 = vld [vmem:[%s6 + $0x30] sm:$0xff]
      %v4140 = vld [vmem:[%s6 + $0x38] sm:$0xff]
      %v4141 = vld [vmem:[%s6 + $0x40] sm:$0xff]
      %v4142 = vld [vmem:[%s6 + $0x48] sm:$0xff]
      %v4143 = vld [vmem:[%s6 + $0x50] sm:$0xff]
      %v4144 = vld [vmem:[%s6 + $0x58] sm:$0xff]
      %v4145 = vld [vmem:[%s6 + $0x60] sm:$0xff]
      %v4146 = vld [vmem:[%s6 + $0x68] sm:$0xff]
      %v4147 = vld [vmem:[%s6 + $0x70] sm:$0xff]
      %v4148 = vld [vmem:[%s6 + $0x78] sm:$0xff]
      %v4149 = vld [vmem:[%s6 + $0x80] sm:$0xff]
      %v4150 = vld [vmem:[%s6 + $0x88] sm:$0xff]
      %v4151 = vld [vmem:[%s6 + $0x90] sm:$0xff]
      %v4152 = vld [vmem:[%s6 + $0x98] sm:$0xff]
      %v4153 = vld [vmem:[%s6 + $0xa0] sm:$0xff]
      %v4154 = vld [vmem:[%s6 + $0xa8] sm:$0xff]
      %v4155 = vld [vmem:[%s6 + $0xb0] sm:$0xff]
      %v4156 = vld [vmem:[%s6 + $0xb8] sm:$0xff]
      %v4157 = vld [vmem:[%s6 + $0xc0] sm:$0xff]
      %v4158 = vld [vmem:[%s6 + $0xc8] sm:$0xff]
      %v4159 = vld [vmem:[%s6 + $0xd0] sm:$0xff]
      %v4160 = vld [vmem:[%s6 + $0xd8] sm:$0xff]
      %v4161 = vld [vmem:[%s6 + $0xe0] sm:$0xff]
      %v4162 = vld [vmem:[%s6 + $0xe8] sm:$0xff]
      %v4163 = vld [vmem:[%s6 + $0xf0] sm:$0xff]
      %v4164 = vld [vmem:[%s6 + $0xf8] sm:$0xff]
      %v4165 = vld [vmem:[%s6 + $0x100] sm:$0xff]
      %v4166 = vld [vmem:[%s6 + $0x108] sm:$0xff]
      %v4167 = vld [vmem:[%s6 + $0x110] sm:$0xff]
      %v4168 = vld [vmem:[%s6 + $0x118] sm:$0xff]
      %v4169 = vld [vmem:[%s6 + $0x120] sm:$0xff]
      %v4170 = vld [vmem:[%s6 + $0x128] sm:$0xff]
      %v4171 = vld [vmem:[%s6 + $0x130] sm:$0xff]
      %v4172 = vld [vmem:[%s6 + $0x138] sm:$0xff]
      %v4173 = vld [vmem:[%s6 + $0x140] sm:$0xff]
      %v4174 = vld [vmem:[%s6 + $0x148] sm:$0xff]
      %v4175 = vld [vmem:[%s6 + $0x150] sm:$0xff]
      %v4176 = vld [vmem:[%s6 + $0x158] sm:$0xff]
      %v4177 = vld [vmem:[%s6 + $0x160] sm:$0xff]
      %v4178 = vld [vmem:[%s6 + $0x168] sm:$0xff]
      %v4179 = vld [vmem:[%s6 + $0x170] sm:$0xff]
      %v4180 = vld [vmem:[%s6 + $0x178] sm:$0xff]
      %v4181 = vld [vmem:[%s6 + $0x180] sm:$0xff]
      %v4182 = vld [vmem:[%s6 + $0x188] sm:$0xff]
      %v4183 = vld [vmem:[%s6 + $0x190] sm:$0xff]
      %v4184 = vld [vmem:[%s6 + $0x198] sm:$0xff]
      %v4185 = vld [vmem:[%s6 + $0x1a0] sm:$0xff]
      %v4186 = vld [vmem:[%s6 + $0x1a8] sm:$0xff]
      %v4187 = vld [vmem:[%s6 + $0x1b0] sm:$0xff]
      %v4188 = vld [vmem:[%s6 + $0x1b8] sm:$0xff]
      %v4189 = vld [vmem:[%s6 + $0x1c0] sm:$0xff]
      %v4190 = vld [vmem:[%s6 + $0x1c8] sm:$0xff]
      %v4191 = vld [vmem:[%s6 + $0x1d0] sm:$0xff]
      %v4192 = vld [vmem:[%s6 + $0x1d8] sm:$0xff]
      %v4193 = vld [vmem:[%s6 + $0x1e0] sm:$0xff]
      %v4194 = vld [vmem:[%s6 + $0x1e8] sm:$0xff]
      %v4195 = vld [vmem:[%s6 + $0x1f0] sm:$0xff]
      %v4196 = vld [vmem:[%s6 + $0x1f8] sm:$0xff]
      %v4197 = vld [vmem:[%s6 + $0x200] sm:$0xff]
      %v4198 = vld [vmem:[%s6 + $0x208] sm:$0xff]
      %v4199 = vld [vmem:[%s6 + $0x210] sm:$0xff]
      %v4200 = vld [vmem:[%s6 + $0x218] sm:$0xff]
      %v4201 = vld [vmem:[%s6 + $0x220] sm:$0xff]
      %v4202 = vld [vmem:[%s6 + $0x228] sm:$0xff]
      %v4203 = vld [vmem:[%s6 + $0x230] sm:$0xff]
      %v4204 = vld [vmem:[%s6 + $0x238] sm:$0xff]
      %v4205 = vld [vmem:[%s6 + $0x240] sm:$0xff]
      %v4206 = vld [vmem:[%s6 + $0x248] sm:$0xff]
      %v4207 = vld [vmem:[%s6 + $0x250] sm:$0xff]
      %v4208 = vld [vmem:[%s6 + $0x258] sm:$0xff]
      %v4209 = vld [vmem:[%s6 + $0x260] sm:$0xff]
      %v4210 = vld [vmem:[%s6 + $0x268] sm:$0xff]
      %v4211 = vld [vmem:[%s6 + $0x270] sm:$0xff]
      %v4212 = vld [vmem:[%s6 + $0x278] sm:$0xff]
      %v4213 = vld [vmem:[%s6 + $0x280] sm:$0xff]
      %v4214 = vld [vmem:[%s6 + $0x288] sm:$0xff]
      %v4215 = vld [vmem:[%s6 + $0x290] sm:$0xff]
      %v4216 = vld [vmem:[%s6 + $0x298] sm:$0xff]
      %v4217 = vld [vmem:[%s6 + $0x2a0] sm:$0xff]
      %v4218 = vld [vmem:[%s6 + $0x2a8] sm:$0xff]
      %v4219 = vld [vmem:[%s6 + $0x2b0] sm:$0xff]
      %v4220 = vld [vmem:[%s6 + $0x2b8] sm:$0xff]
      %v4221 = vld [vmem:[%s6 + $0x2c0] sm:$0xff]
      %v4222 = vld [vmem:[%s6 + $0x2c8] sm:$0xff]
      %v4223 = vld [vmem:[%s6 + $0x2d0] sm:$0xff]
      %v4224 = vld [vmem:[%s6 + $0x2d8] sm:$0xff]
      %v4225 = vld [vmem:[%s6 + $0x2e0] sm:$0xff]
      %v4226 = vld [vmem:[%s6 + $0x2e8] sm:$0xff]
      %v4227 = vld [vmem:[%s6 + $0x2f0] sm:$0xff]
      %v4228 = vld [vmem:[%s6 + $0x2f8] sm:$0xff]
      %v4229 = vld [vmem:[%s6 + $0x300] sm:$0xff]
      %v4230 = vld [vmem:[%s6 + $0x308] sm:$0xff]
      %v4231 = vld [vmem:[%s6 + $0x310] sm:$0xff]
      %v4232 = vld [vmem:[%s6 + $0x318] sm:$0xff]
      %v4233 = vld [vmem:[%s6 + $0x320] sm:$0xff]
      %v4234 = vld [vmem:[%s6 + $0x328] sm:$0xff]
      %v4235 = vld [vmem:[%s6 + $0x330] sm:$0xff]
      %v4236 = vld [vmem:[%s6 + $0x338] sm:$0xff]
      %v4237 = vld [vmem:[%s6 + $0x340] sm:$0xff]
      %v4238 = vld [vmem:[%s6 + $0x348] sm:$0xff]
      %v4239 = vld [vmem:[%s6 + $0x350] sm:$0xff]
      %v4240 = vld [vmem:[%s6 + $0x358] sm:$0xff]
      %v4241 = vld [vmem:[%s6 + $0x360] sm:$0xff]
      %v4242 = vld [vmem:[%s6 + $0x368] sm:$0xff]
      %v4243 = vld [vmem:[%s6 + $0x370] sm:$0xff]
      %v4244 = vld [vmem:[%s6 + $0x378] sm:$0xff]
      %v4245 = vld [vmem:[%s6 + $0x380] sm:$0xff]
      %v4246 = vld [vmem:[%s6 + $0x388] sm:$0xff]
      %v4247 = vld [vmem:[%s6 + $0x390] sm:$0xff]
      %v4248 = vld [vmem:[%s6 + $0x398] sm:$0xff]
      %v4249 = vld [vmem:[%s6 + $0x3a0] sm:$0xff]
      %v4250 = vld [vmem:[%s6 + $0x3a8] sm:$0xff]
      %v4251 = vld [vmem:[%s6 + $0x3b0] sm:$0xff]
      %v4252 = vld [vmem:[%s6 + $0x3b8] sm:$0xff]
      %v4253 = vld [vmem:[%s6 + $0x3c0] sm:$0xff]
      %v4254 = vld [vmem:[%s6 + $0x3c8] sm:$0xff]
      %v4255 = vld [vmem:[%s6 + $0x3d0] sm:$0xff]
      %v4256 = vld [vmem:[%s6 + $0x3d8] sm:$0xff]
      %v4257 = vld [vmem:[%s6 + $0x3e0] sm:$0xff]
      %v4258 = vld [vmem:[%s6 + $0x3e8] sm:$0xff]
      %v4259 = vld [vmem:[%s6 + $0x3f0] sm:$0xff]
      %v4260 = vld [vmem:[%s6 + $0x3f8] sm:$0xff]
      %v4261 = vld [vmem:[%s6 + $0x400] sm:$0xff]
      %v4262 = vld [vmem:[%s6 + $0x408] sm:$0xff]
      %v4263 = vld [vmem:[%s6 + $0x410] sm:$0xff]
      %v4264 = vld [vmem:[%s6 + $0x418] sm:$0xff]
      %v4265 = vld [vmem:[%s6 + $0x420] sm:$0xff]
      %v4266 = vld [vmem:[%s6 + $0x428] sm:$0xff]
      %v4267 = vld [vmem:[%s6 + $0x430] sm:$0xff]
      %v4268 = vld [vmem:[%s6 + $0x438] sm:$0xff]
      %v4269 = vld [vmem:[%s6 + $0x440] sm:$0xff]
      %v4270 = vld [vmem:[%s6 + $0x448] sm:$0xff]
      %v4271 = vld [vmem:[%s6 + $0x450] sm:$0xff]
      %v4272 = vld [vmem:[%s6 + $0x458] sm:$0xff]
      %v4273 = vld [vmem:[%s6 + $0x460] sm:$0xff]
      %v4274 = vld [vmem:[%s6 + $0x468] sm:$0xff]
      %v4275 = vld [vmem:[%s6 + $0x470] sm:$0xff]
      %v4276 = vld [vmem:[%s6 + $0x478] sm:$0xff]
      %v4277 = vld [vmem:[%s6 + $0x480] sm:$0xff]
      %v4278 = vld [vmem:[%s6 + $0x488] sm:$0xff]
      %v4279 = vld [vmem:[%s6 + $0x490] sm:$0xff]
      %v4280 = vld [vmem:[%s6 + $0x498] sm:$0xff]
      %v4281 = vld [vmem:[%s6 + $0x4a0] sm:$0xff]
      %v4282 = vld [vmem:[%s6 + $0x4a8] sm:$0xff]
      %v4283 = vld [vmem:[%s6 + $0x4b0] sm:$0xff]
      %v4284 = vld [vmem:[%s6 + $0x4b8] sm:$0xff]
      %v4285 = vld [vmem:[%s6 + $0x4c0] sm:$0xff]
      %v4286 = vld [vmem:[%s6 + $0x4c8] sm:$0xff]
      %v4287 = vld [vmem:[%s6 + $0x4d0] sm:$0xff]
      %v4288 = vld [vmem:[%s6 + $0x4d8] sm:$0xff]
      %v4289 = vld [vmem:[%s6 + $0x4e0] sm:$0xff]
      %v4290 = vld [vmem:[%s6 + $0x4e8] sm:$0xff]
      %v4291 = vld [vmem:[%s6 + $0x4f0] sm:$0xff]
      %v4292 = vld [vmem:[%s6 + $0x4f8] sm:$0xff]
      %v4293 = vld [vmem:[%s6 + $0x500] sm:$0xff]
      %v4294 = vld [vmem:[%s6 + $0x508] sm:$0xff]
      %v4295 = vld [vmem:[%s6 + $0x510] sm:$0xff]
      %v4296 = vld [vmem:[%s6 + $0x518] sm:$0xff]
      %v4297 = vld [vmem:[%s6 + $0x520] sm:$0x1]
      %v4298 = vld [vmem:[%s6 + $0x528] sm:$0x1]
      %v4299 = vld [vmem:[%s6 + $0x530] sm:$0x1]
      %v4300 = vld [vmem:[%s6 + $0x538] sm:$0x1]
      %v4301 = vld [vmem:[%s7] sm:$0xf]
      %v4303 = vlaneseq
      %v4304 = vshrl.u32 %v4303, 7
      %v4305 = vsub.s32 0, %v4304
      %v4306 = vrot.slane %v4301, %v4305
      %v4307 = vlaneseq
      %v4308 = vshrl.u32 %v4307, 7
      %v4309 = vsub.s32 1, %v4308
      %v4310 = vrot.slane %v4301, %v4309
      %v4311 = vlaneseq
      %v4312 = vshrl.u32 %v4311, 7
      %v4313 = vsub.s32 2, %v4312
      %v4314 = vrot.slane %v4301, %v4313
      %v4315 = vlaneseq
      %v4316 = vshrl.u32 %v4315, 7
      %v4317 = vsub.s32 3, %v4316
      %v4318 = vrot.slane %v4301, %v4317
      %vm4323 = vcmask 596992
      %v4325 = vsel %vm4323, %v4132, 0
      %vm4327 = vcmask 1040384
      %v4329 = vsel %vm4327, %v4297, 0
      %v4332 = vsel %vm4327, %v4298, 0
      %v4335 = vsel %vm4327, %v4299, 0
      %v4338 = vsel %vm4327, %v4300, 0
      %4340 = vmatprep.subr.mxu0 %v4134
      %4341 = vmatpush1.msra.mxu0 %v4133
      %4342 = vmatprep.subr.mxu0 %v4138
      %4343 = vmatpush1.msra.mxu0 %v4137
      %4344 = vmatprep.subr.mxu0 %v4142
      %4345 = vmatpush1.msra.mxu0 %v4141
      %4346 = vmatprep.subr.mxu0 %v4146
      %4347 = vmatpush1.msra.mxu0 %v4145
      %4348 = vmatprep.subr.mxu0 %v4150
      %4349 = vmatpush1.msra.mxu0 %v4149
      %4350 = vmatprep.subr.mxu0 %v4154
      %4351 = vmatpush1.msra.mxu0 %v4153
      %4352 = vmatprep.subr.mxu0 %v4158
      %4353 = vmatpush1.msra.mxu0 %v4157
      %4354 = vmatprep.subr.mxu0 %v4162
      %4355 = vmatpush1.msra.mxu0 %v4161
      %4356 = vmatprep.subr.mxu0 %v4166
      %4357 = vmatpush1.msra.mxu0 %v4165
      %4358 = vmatprep.subr.mxu0 %v4170
      %4359 = vmatpush1.msra.mxu0 %v4169
      %4360 = vmatprep.subr.mxu0 %v4174
      %4361 = vmatpush1.msra.mxu0 %v4173
      %4362 = vmatprep.subr.mxu0 %v4178
      %4363 = vmatpush1.msra.mxu0 %v4177
      %4364 = vmatprep.subr.mxu0 %v4182
      %4365 = vmatpush1.msra.mxu0 %v4181
      %4366 = vmatprep.subr.mxu0 %v4186
      %4367 = vmatpush1.msra.mxu0 %v4185
      %4368 = vmatprep.subr.mxu0 %v4190
      %4369 = vmatpush1.msra.mxu0 %v4189
      %4370 = vmatprep.subr.mxu0 %v4194
      %4371 = vmatpush1.msra.mxu0 %v4193
      %4372 = vmatprep.subr.mxu0 %v4198
      %4373 = vmatpush1.msra.mxu0 %v4197
      %4374 = vmatprep.subr.mxu0 %v4202
      %4375 = vmatpush1.msra.mxu0 %v4201
      %4376 = vmatprep.subr.mxu0 %v4206
      %4377 = vmatpush1.msra.mxu0 %v4205
      %4378 = vmatprep.subr.mxu0 %v4210
      %4379 = vmatpush1.msra.mxu0 %v4209
      %4380 = vmatprep.subr.mxu0 %v4214
      %4381 = vmatpush1.msra.mxu0 %v4213
      %4382 = vmatprep.subr.mxu0 %v4218
      %4383 = vmatpush1.msra.mxu0 %v4217
      %4384 = vmatprep.subr.mxu0 %v4222
      %4385 = vmatpush1.msra.mxu0 %v4221
      %4386 = vmatprep.subr.mxu0 %v4226
      %4387 = vmatpush1.msra.mxu0 %v4225
      %4388 = vmatprep.subr.mxu0 %v4230
      %4389 = vmatpush1.msra.mxu0 %v4229
      %4390 = vmatprep.subr.mxu0 %v4234
      %4391 = vmatpush1.msra.mxu0 %v4233
      %4392 = vmatprep.subr.mxu0 %v4238
      %4393 = vmatpush1.msra.mxu0 %v4237
      %4394 = vmatprep.subr.mxu0 %v4242
      %4395 = vmatpush1.msra.mxu0 %v4241
      %4396 = vmatprep.subr.mxu0 %v4246
      %4397 = vmatpush1.msra.mxu0 %v4245
      %4398 = vmatprep.subr.mxu0 %v4250
      %4399 = vmatpush1.msra.mxu0 %v4249
      %4400 = vmatprep.subr.mxu0 %v4254
      %4401 = vmatpush1.msra.mxu0 %v4253
      %4402 = vmatprep.subr.mxu0 %v4258
      %4403 = vmatpush1.msra.mxu0 %v4257
      %4404 = vmatprep.mubr.f32.mxu0 %v4130
      %4405 = vmatmul.mubr.f32.gmra.mrb[0].mxu0 %v4126
      %v4406 = vpop.f32.mrb[0].mxu0
      %v4407 = vadd.f32 %v4306, %v4406
      %v4408 = vpop.f32.mrb[0].mxu0
      %v4409 = vadd.f32 %v4310, %v4408
      %4410 = vdwg.mxu0
      %4411 = vmatprep.subr.mxu0 %v4262
      %4412 = vmatpush1.msra.mxu0 %v4261
      %4413 = vmatprep.subr.mxu0 %v4266
      %4414 = vmatpush1.msra.mxu0 %v4265
      %4415 = vmatprep.subr.mxu0 %v4270
      %4416 = vmatpush1.msra.mxu0 %v4269
      %4417 = vmatprep.subr.mxu0 %v4274
      %4418 = vmatpush1.msra.mxu0 %v4273
      %4419 = vmatprep.subr.mxu0 %v4278
      %4420 = vmatpush1.msra.mxu0 %v4277
      %4421 = vmatprep.subr.mxu0 %v4282
      %4422 = vmatpush1.msra.mxu0 %v4281
      %4423 = vmatprep.subr.mxu0 %v4286
      %4424 = vmatpush1.msra.mxu0 %v4285
      %4425 = vmatprep.subr.mxu0 %v4290
      %4426 = vmatpush1.msra.mxu0 %v4289
      %4427 = vmatprep.subr.mxu0 %v4294
      %4428 = vmatpush1.msra.mxu0 %v4293
      %4429 = vmatprep.subr.mxu0 %v4332
      %4430 = vmatpush1.msra.mxu0 %v4329
      %4431 = vmatprep.subr.mxu0 0.0
      %4432 = vmatpush1.msra.mxu0 0.0
      %4433 = vmatprep.subr.mxu0 0.0
      %4434 = vmatpush1.msra.mxu0 0.0
      %4435 = vmatprep.subr.mxu0 0.0
      %4436 = vmatpush1.msra.mxu0 0.0
      %4437 = vmatprep.subr.mxu0 0.0
      %4438 = vmatpush1.msra.mxu0 0.0
      %4439 = vmatprep.subr.mxu0 0.0
      %4440 = vmatpush1.msra.mxu0 0.0
      %4441 = vmatprep.subr.mxu0 0.0
      %4442 = vmatpush1.msra.mxu0 0.0
      %4443 = vmatprep.subr.mxu0 0.0
      %4444 = vmatpush1.msra.mxu0 0.0
      %4445 = vmatprep.subr.mxu0 0.0
      %4446 = vmatpush1.msra.mxu0 0.0
      %4447 = vmatprep.subr.mxu0 0.0
      %4448 = vmatpush1.msra.mxu0 0.0
      %4449 = vmatprep.subr.mxu0 0.0
      %4450 = vmatpush1.msra.mxu0 0.0
      %4451 = vmatprep.subr.mxu0 0.0
      %4452 = vmatpush1.msra.mxu0 0.0
      %4453 = vmatprep.subr.mxu0 0.0
      %4454 = vmatpush1.msra.mxu0 0.0
      %4455 = vmatprep.subr.mxu0 0.0
      %4456 = vmatpush1.msra.mxu0 0.0
      %4457 = vmatprep.subr.mxu0 0.0
      %4458 = vmatpush1.msra.mxu0 0.0
      %4459 = vmatprep.subr.mxu0 0.0
      %4460 = vmatpush1.msra.mxu0 0.0
      %4461 = vmatprep.subr.mxu0 0.0
      %4462 = vmatpush1.msra.mxu0 0.0
      %4463 = vmatprep.subr.mxu0 0.0
      %4464 = vmatpush1.msra.mxu0 0.0
      %4465 = vmatprep.subr.mxu0 0.0
      %4466 = vmatpush1.msra.mxu0 0.0
      %4467 = vmatprep.subr.mxu0 0.0
      %4468 = vmatpush1.msra.mxu0 0.0
      %4469 = vmatprep.subr.mxu0 0.0
      %4470 = vmatpush1.msra.mxu0 0.0
      %4471 = vmatprep.subr.mxu0 0.0
      %4472 = vmatpush1.msra.mxu0 0.0
      %4473 = vmatprep.subr.mxu0 0.0
      %4474 = vmatpush1.msra.mxu0 0.0
      %4475 = vmatprep.mubr.f32.mxu0 0.0
      %4476 = vmatmul.mubr.f32.gmra.mrb[0].mxu0 %v4325
      %v4477 = vpop.f32.mrb[0].mxu0
      %v4478 = vadd.f32 %v4407, %v4477
      %v4479 = vpop.f32.mrb[0].mxu0
      %v4480 = vadd.f32 %v4409, %v4479
      %4481 = vdwg.mxu0
      %4482 = vmatprep.subr.mxu0 %v4136
      %4483 = vmatpush1.msra.mxu0 %v4135
      %4484 = vmatprep.subr.mxu0 %v4140
      %4485 = vmatpush1.msra.mxu0 %v4139
      %4486 = vmatprep.subr.mxu0 %v4144
      %4487 = vmatpush1.msra.mxu0 %v4143
      %4488 = vmatprep.subr.mxu0 %v4148
      %4489 = vmatpush1.msra.mxu0 %v4147
      %4490 = vmatprep.subr.mxu0 %v4152
      %4491 = vmatpush1.msra.mxu0 %v4151
      %4492 = vmatprep.subr.mxu0 %v4156
      %4493 = vmatpush1.msra.mxu0 %v4155
      %4494 = vmatprep.subr.mxu0 %v4160
      %4495 = vmatpush1.msra.mxu0 %v4159
      %4496 = vmatprep.subr.mxu0 %v4164
      %4497 = vmatpush1.msra.mxu0 %v4163
      %4498 = vmatprep.subr.mxu0 %v4168
      %4499 = vmatpush1.msra.mxu0 %v4167
      %4500 = vmatprep.subr.mxu0 %v4172
      %4501 = vmatpush1.msra.mxu0 %v4171
      %4502 = vmatprep.subr.mxu0 %v4176
      %4503 = vmatpush1.msra.mxu0 %v4175
      %4504 = vmatprep.subr.mxu0 %v4180
      %4505 = vmatpush1.msra.mxu0 %v4179
      %4506 = vmatprep.subr.mxu0 %v4184
      %4507 = vmatpush1.msra.mxu0 %v4183
      %4508 = vmatprep.subr.mxu0 %v4188
      %4509 = vmatpush1.msra.mxu0 %v4187
      %4510 = vmatprep.subr.mxu0 %v4192
      %4511 = vmatpush1.msra.mxu0 %v4191
      %4512 = vmatprep.subr.mxu0 %v4196
      %4513 = vmatpush1.msra.mxu0 %v4195
      %4514 = vmatprep.subr.mxu0 %v4200
      %4515 = vmatpush1.msra.mxu0 %v4199
      %4516 = vmatprep.subr.mxu0 %v4204
      %4517 = vmatpush1.msra.mxu0 %v4203
      %4518 = vmatprep.subr.mxu0 %v4208
      %4519 = vmatpush1.msra.mxu0 %v4207
      %4520 = vmatprep.subr.mxu0 %v4212
      %4521 = vmatpush1.msra.mxu0 %v4211
      %4522 = vmatprep.subr.mxu0 %v4216
      %4523 = vmatpush1.msra.mxu0 %v4215
      %4524 = vmatprep.subr.mxu0 %v4220
      %4525 = vmatpush1.msra.mxu0 %v4219
      %4526 = vmatprep.subr.mxu0 %v4224
      %4527 = vmatpush1.msra.mxu0 %v4223
      %4528 = vmatprep.subr.mxu0 %v4228
      %4529 = vmatpush1.msra.mxu0 %v4227
      %4530 = vmatprep.subr.mxu0 %v4232
      %4531 = vmatpush1.msra.mxu0 %v4231
      %4532 = vmatprep.subr.mxu0 %v4236
      %4533 = vmatpush1.msra.mxu0 %v4235
      %4534 = vmatprep.subr.mxu0 %v4240
      %4535 = vmatpush1.msra.mxu0 %v4239
      %4536 = vmatprep.subr.mxu0 %v4244
      %4537 = vmatpush1.msra.mxu0 %v4243
      %4538 = vmatprep.subr.mxu0 %v4248
      %4539 = vmatpush1.msra.mxu0 %v4247
      %4540 = vmatprep.subr.mxu0 %v4252
      %4541 = vmatpush1.msra.mxu0 %v4251
      %4542 = vmatprep.subr.mxu0 %v4256
      %4543 = vmatpush1.msra.mxu0 %v4255
      %4544 = vmatprep.subr.mxu0 %v4260
      %4545 = vmatpush1.msra.mxu0 %v4259
      %4546 = vmatprep.mubr.f32.mxu0 %v4130
      %4547 = vmatmul.mubr.f32.gmra.mrb[0].mxu0 %v4126
      %v4548 = vpop.f32.mrb[0].mxu0
      %v4549 = vadd.f32 %v4314, %v4548
      %v4550 = vpop.f32.mrb[0].mxu0
      %v4551 = vadd.f32 %v4318, %v4550
      %4552 = vdwg.mxu0
      %4553 = vmatprep.subr.mxu0 %v4264
      %4554 = vmatpush1.msra.mxu0 %v4263
      %4555 = vmatprep.subr.mxu0 %v4268
      %4556 = vmatpush1.msra.mxu0 %v4267
      %4557 = vmatprep.subr.mxu0 %v4272
      %4558 = vmatpush1.msra.mxu0 %v4271
      %4559 = vmatprep.subr.mxu0 %v4276
      %4560 = vmatpush1.msra.mxu0 %v4275
      %4561 = vmatprep.subr.mxu0 %v4280
      %4562 = vmatpush1.msra.mxu0 %v4279
      %4563 = vmatprep.subr.mxu0 %v4284
      %4564 = vmatpush1.msra.mxu0 %v4283
      %4565 = vmatprep.subr.mxu0 %v4288
      %4566 = vmatpush1.msra.mxu0 %v4287
      %4567 = vmatprep.subr.mxu0 %v4292
      %4568 = vmatpush1.msra.mxu0 %v4291
      %4569 = vmatprep.subr.mxu0 %v4296
      %4570 = vmatpush1.msra.mxu0 %v4295
      %4571 = vmatprep.subr.mxu0 %v4338
      %4572 = vmatpush1.msra.mxu0 %v4335
      %4573 = vmatprep.subr.mxu0 0.0
      %4574 = vmatpush1.msra.mxu0 0.0
      %4575 = vmatprep.subr.mxu0 0.0
      %4576 = vmatpush1.msra.mxu0 0.0
      %4577 = vmatprep.subr.mxu0 0.0
      %4578 = vmatpush1.msra.mxu0 0.0
      %4579 = vmatprep.subr.mxu0 0.0
      %4580 = vmatpush1.msra.mxu0 0.0
      %4581 = vmatprep.subr.mxu0 0.0
      %4582 = vmatpush1.msra.mxu0 0.0
      %4583 = vmatprep.subr.mxu0 0.0
      %4584 = vmatpush1.msra.mxu0 0.0
      %4585 = vmatprep.subr.mxu0 0.0
      %4586 = vmatpush1.msra.mxu0 0.0
      %4587 = vmatprep.subr.mxu0 0.0
      %4588 = vmatpush1.msra.mxu0 0.0
      %4589 = vmatprep.subr.mxu0 0.0
      %4590 = vmatpush1.msra.mxu0 0.0
      %4591 = vmatprep.subr.mxu0 0.0
      %4592 = vmatpush1.msra.mxu0 0.0
      %4593 = vmatprep.subr.mxu0 0.0
      %4594 = vmatpush1.msra.mxu0 0.0
      %4595 = vmatprep.subr.mxu0 0.0
      %4596 = vmatpush1.msra.mxu0 0.0
      %4597 = vmatprep.subr.mxu0 0.0
      %4598 = vmatpush1.msra.mxu0 0.0
      %4599 = vmatprep.subr.mxu0 0.0
      %4600 = vmatpush1.msra.mxu0 0.0
      %4601 = vmatprep.subr.mxu0 0.0
      %4602 = vmatpush1.msra.mxu0 0.0
      %4603 = vmatprep.subr.mxu0 0.0
      %4604 = vmatpush1.msra.mxu0 0.0
      %4605 = vmatprep.subr.mxu0 0.0
      %4606 = vmatpush1.msra.mxu0 0.0
      %4607 = vmatprep.subr.mxu0 0.0
      %4608 = vmatpush1.msra.mxu0 0.0
      %4609 = vmatprep.subr.mxu0 0.0
      %4610 = vmatpush1.msra.mxu0 0.0
      %4611 = vmatprep.subr.mxu0 0.0
      %4612 = vmatpush1.msra.mxu0 0.0
      %4613 = vmatprep.subr.mxu0 0.0
      %4614 = vmatpush1.msra.mxu0 0.0
      %4615 = vmatprep.subr.mxu0 0.0
      %4616 = vmatpush1.msra.mxu0 0.0
      %4617 = vmatprep.mubr.f32.mxu0 0.0
      %4618 = vmatmul.mubr.f32.gmra.mrb[0].mxu0 %v4325
      %v4619 = vpop.f32.mrb[0].mxu0
      %v4620 = vadd.f32 %v4549, %v4619
      %v4621 = vpop.f32.mrb[0].mxu0
      %v4622 = vadd.f32 %v4551, %v4621
      %4623 = vdwg.mxu0
      %v4624 = vmax.f32 %v4478, 0.0
      %v4625 = vmax.f32 %v4480, 0.0
      %v4626 = vmax.f32 %v4620, 0.0
      %v4627 = vmax.f32 %v4622, 0.0
      %v4628 = vld [vmem:[%s8] sm:$0xff]
      %v4629 = vld [vmem:[%s8 + $0x8] sm:$0xff]
      %v4630 = vld [vmem:[%s8 + $0x10] sm:$0xff]
      %v4631 = vld [vmem:[%s8 + $0x18] sm:$0xff]
      %v4632 = vld [vmem:[%s8 + $0x20] sm:$0xff]
      %v4633 = vld [vmem:[%s8 + $0x28] sm:$0xff]
      %v4634 = vld [vmem:[%s8 + $0x30] sm:$0xff]
      %v4635 = vld [vmem:[%s8 + $0x38] sm:$0xff]
      %v4636 = vld [vmem:[%s8 + $0x40] sm:$0xff]
      %v4637 = vld [vmem:[%s8 + $0x48] sm:$0xff]
      %v4638 = vld [vmem:[%s8 + $0x50] sm:$0xff]
      %v4639 = vld [vmem:[%s8 + $0x58] sm:$0xff]
      %v4640 = vld [vmem:[%s8 + $0x60] sm:$0xff]
      %v4641 = vld [vmem:[%s8 + $0x68] sm:$0xff]
      %v4642 = vld [vmem:[%s8 + $0x70] sm:$0xff]
      %v4643 = vld [vmem:[%s8 + $0x78] sm:$0xff]
      %v4644 = vld [vmem:[%s8 + $0x80] sm:$0xff]
      %v4645 = vld [vmem:[%s8 + $0x88] sm:$0xff]
      %v4646 = vld [vmem:[%s8 + $0x90] sm:$0xff]
      %v4647 = vld [vmem:[%s8 + $0x98] sm:$0xff]
      %v4648 = vld [vmem:[%s8 + $0xa0] sm:$0xff]
      %v4649 = vld [vmem:[%s8 + $0xa8] sm:$0xff]
      %v4650 = vld [vmem:[%s8 + $0xb0] sm:$0xff]
      %v4651 = vld [vmem:[%s8 + $0xb8] sm:$0xff]
      %v4652 = vld [vmem:[%s8 + $0xc0] sm:$0xff]
      %v4653 = vld [vmem:[%s8 + $0xc8] sm:$0xff]
      %v4654 = vld [vmem:[%s8 + $0xd0] sm:$0xff]
      %v4655 = vld [vmem:[%s8 + $0xd8] sm:$0xff]
      %v4656 = vld [vmem:[%s8 + $0xe0] sm:$0xff]
      %v4657 = vld [vmem:[%s8 + $0xe8] sm:$0xff]
      %v4658 = vld [vmem:[%s8 + $0xf0] sm:$0xff]
      %v4659 = vld [vmem:[%s8 + $0xf8] sm:$0xff]
      %v4660 = vld [vmem:[%s8 + $0x100] sm:$0xff]
      %v4661 = vld [vmem:[%s8 + $0x108] sm:$0xff]
      %v4662 = vld [vmem:[%s8 + $0x110] sm:$0xff]
      %v4663 = vld [vmem:[%s8 + $0x118] sm:$0xff]
      %v4664 = vld [vmem:[%s8 + $0x120] sm:$0xff]
      %v4665 = vld [vmem:[%s8 + $0x128] sm:$0xff]
      %v4666 = vld [vmem:[%s8 + $0x130] sm:$0xff]
      %v4667 = vld [vmem:[%s8 + $0x138] sm:$0xff]
      %v4668 = vld [vmem:[%s8 + $0x140] sm:$0xff]
      %v4669 = vld [vmem:[%s8 + $0x148] sm:$0xff]
      %v4670 = vld [vmem:[%s8 + $0x150] sm:$0xff]
      %v4671 = vld [vmem:[%s8 + $0x158] sm:$0xff]
      %v4672 = vld [vmem:[%s8 + $0x160] sm:$0xff]
      %v4673 = vld [vmem:[%s8 + $0x168] sm:$0xff]
      %v4674 = vld [vmem:[%s8 + $0x170] sm:$0xff]
      %v4675 = vld [vmem:[%s8 + $0x178] sm:$0xff]
      %v4676 = vld [vmem:[%s8 + $0x180] sm:$0xff]
      %v4677 = vld [vmem:[%s8 + $0x188] sm:$0xff]
      %v4678 = vld [vmem:[%s8 + $0x190] sm:$0xff]
      %v4679 = vld [vmem:[%s8 + $0x198] sm:$0xff]
      %v4680 = vld [vmem:[%s8 + $0x1a0] sm:$0xff]
      %v4681 = vld [vmem:[%s8 + $0x1a8] sm:$0xff]
      %v4682 = vld [vmem:[%s8 + $0x1b0] sm:$0xff]
      %v4683 = vld [vmem:[%s8 + $0x1b8] sm:$0xff]
      %v4684 = vld [vmem:[%s8 + $0x1c0] sm:$0xff]
      %v4685 = vld [vmem:[%s8 + $0x1c8] sm:$0xff]
      %v4686 = vld [vmem:[%s8 + $0x1d0] sm:$0xff]
      %v4687 = vld [vmem:[%s8 + $0x1d8] sm:$0xff]
      %v4688 = vld [vmem:[%s8 + $0x1e0] sm:$0xff]
      %v4689 = vld [vmem:[%s8 + $0x1e8] sm:$0xff]
      %v4690 = vld [vmem:[%s8 + $0x1f0] sm:$0xff]
      %v4691 = vld [vmem:[%s8 + $0x1f8] sm:$0xff]
      %v4692 = vld [vmem:[%s8 + $0x200] sm:$0xff]
      %v4693 = vld [vmem:[%s8 + $0x208] sm:$0xff]
      %v4694 = vld [vmem:[%s8 + $0x210] sm:$0xff]
      %v4695 = vld [vmem:[%s8 + $0x218] sm:$0xff]
      %v4696 = vld [vmem:[%s8 + $0x220] sm:$0xff]
      %v4697 = vld [vmem:[%s8 + $0x228] sm:$0xff]
      %v4698 = vld [vmem:[%s8 + $0x230] sm:$0xff]
      %v4699 = vld [vmem:[%s8 + $0x238] sm:$0xff]
      %v4700 = vld [vmem:[%s8 + $0x240] sm:$0xff]
      %v4701 = vld [vmem:[%s8 + $0x248] sm:$0xff]
      %v4702 = vld [vmem:[%s8 + $0x250] sm:$0xff]
      %v4703 = vld [vmem:[%s8 + $0x258] sm:$0xff]
      %v4704 = vld [vmem:[%s8 + $0x260] sm:$0xff]
      %v4705 = vld [vmem:[%s8 + $0x268] sm:$0xff]
      %v4706 = vld [vmem:[%s8 + $0x270] sm:$0xff]
      %v4707 = vld [vmem:[%s8 + $0x278] sm:$0xff]
      %v4708 = vld [vmem:[%s8 + $0x280] sm:$0xff]
      %v4709 = vld [vmem:[%s8 + $0x288] sm:$0xff]
      %v4710 = vld [vmem:[%s8 + $0x290] sm:$0xff]
      %v4711 = vld [vmem:[%s8 + $0x298] sm:$0xff]
      %v4712 = vld [vmem:[%s8 + $0x2a0] sm:$0xff]
      %v4713 = vld [vmem:[%s8 + $0x2a8] sm:$0xff]
      %v4714 = vld [vmem:[%s8 + $0x2b0] sm:$0xff]
      %v4715 = vld [vmem:[%s8 + $0x2b8] sm:$0xff]
      %v4716 = vld [vmem:[%s8 + $0x2c0] sm:$0xff]
      %v4717 = vld [vmem:[%s8 + $0x2c8] sm:$0xff]
      %v4718 = vld [vmem:[%s8 + $0x2d0] sm:$0xff]
      %v4719 = vld [vmem:[%s8 + $0x2d8] sm:$0xff]
      %v4720 = vld [vmem:[%s8 + $0x2e0] sm:$0xff]
      %v4721 = vld [vmem:[%s8 + $0x2e8] sm:$0xff]
      %v4722 = vld [vmem:[%s8 + $0x2f0] sm:$0xff]
      %v4723 = vld [vmem:[%s8 + $0x2f8] sm:$0xff]
      %v4724 = vld [vmem:[%s8 + $0x300] sm:$0xff]
      %v4725 = vld [vmem:[%s8 + $0x308] sm:$0xff]
      %v4726 = vld [vmem:[%s8 + $0x310] sm:$0xff]
      %v4727 = vld [vmem:[%s8 + $0x318] sm:$0xff]
      %v4728 = vld [vmem:[%s8 + $0x320] sm:$0xff]
      %v4729 = vld [vmem:[%s8 + $0x328] sm:$0xff]
      %v4730 = vld [vmem:[%s8 + $0x330] sm:$0xff]
      %v4731 = vld [vmem:[%s8 + $0x338] sm:$0xff]
      %v4732 = vld [vmem:[%s8 + $0x340] sm:$0xff]
      %v4733 = vld [vmem:[%s8 + $0x348] sm:$0xff]
      %v4734 = vld [vmem:[%s8 + $0x350] sm:$0xff]
      %v4735 = vld [vmem:[%s8 + $0x358] sm:$0xff]
      %v4736 = vld [vmem:[%s8 + $0x360] sm:$0xff]
      %v4737 = vld [vmem:[%s8 + $0x368] sm:$0xff]
      %v4738 = vld [vmem:[%s8 + $0x370] sm:$0xff]
      %v4739 = vld [vmem:[%s8 + $0x378] sm:$0xff]
      %v4740 = vld [vmem:[%s8 + $0x380] sm:$0xff]
      %v4741 = vld [vmem:[%s8 + $0x388] sm:$0xff]
      %v4742 = vld [vmem:[%s8 + $0x390] sm:$0xff]
      %v4743 = vld [vmem:[%s8 + $0x398] sm:$0xff]
      %v4744 = vld [vmem:[%s8 + $0x3a0] sm:$0xff]
      %v4745 = vld [vmem:[%s8 + $0x3a8] sm:$0xff]
      %v4746 = vld [vmem:[%s8 + $0x3b0] sm:$0xff]
      %v4747 = vld [vmem:[%s8 + $0x3b8] sm:$0xff]
      %v4748 = vld [vmem:[%s8 + $0x3c0] sm:$0xff]
      %v4749 = vld [vmem:[%s8 + $0x3c8] sm:$0xff]
      %v4750 = vld [vmem:[%s8 + $0x3d0] sm:$0xff]
      %v4751 = vld [vmem:[%s8 + $0x3d8] sm:$0xff]
      %v4752 = vld [vmem:[%s8 + $0x3e0] sm:$0xff]
      %v4753 = vld [vmem:[%s8 + $0x3e8] sm:$0xff]
      %v4754 = vld [vmem:[%s8 + $0x3f0] sm:$0xff]
      %v4755 = vld [vmem:[%s8 + $0x3f8] sm:$0xff]
      %v4756 = vld [vmem:[%s8 + $0x400] sm:$0xff]
      %v4757 = vld [vmem:[%s8 + $0x408] sm:$0xff]
      %v4758 = vld [vmem:[%s8 + $0x410] sm:$0xff]
      %v4759 = vld [vmem:[%s8 + $0x418] sm:$0xff]
      %v4760 = vld [vmem:[%s8 + $0x420] sm:$0xff]
      %v4761 = vld [vmem:[%s8 + $0x428] sm:$0xff]
      %v4762 = vld [vmem:[%s8 + $0x430] sm:$0xff]
      %v4763 = vld [vmem:[%s8 + $0x438] sm:$0xff]
      %v4764 = vld [vmem:[%s8 + $0x440] sm:$0xff]
      %v4765 = vld [vmem:[%s8 + $0x448] sm:$0xff]
      %v4766 = vld [vmem:[%s8 + $0x450] sm:$0xff]
      %v4767 = vld [vmem:[%s8 + $0x458] sm:$0xff]
      %v4768 = vld [vmem:[%s8 + $0x460] sm:$0xff]
      %v4769 = vld [vmem:[%s8 + $0x468] sm:$0xff]
      %v4770 = vld [vmem:[%s8 + $0x470] sm:$0xff]
      %v4771 = vld [vmem:[%s8 + $0x478] sm:$0xff]
      %v4772 = vld [vmem:[%s8 + $0x480] sm:$0xff]
      %v4773 = vld [vmem:[%s8 + $0x488] sm:$0xff]
      %v4774 = vld [vmem:[%s8 + $0x490] sm:$0xff]
      %v4775 = vld [vmem:[%s8 + $0x498] sm:$0xff]
      %v4776 = vld [vmem:[%s8 + $0x4a0] sm:$0xff]
      %v4777 = vld [vmem:[%s8 + $0x4a8] sm:$0xff]
      %v4778 = vld [vmem:[%s9] sm:$0x7]
      %v4780 = vlaneseq
      %v4781 = vshrl.u32 %v4780, 7
      %v4782 = vsub.s32 0, %v4781
      %v4783 = vrot.slane %v4778, %v4782
      %v4784 = vlaneseq
      %v4785 = vshrl.u32 %v4784, 7
      %v4786 = vsub.s32 1, %v4785
      %v4787 = vrot.slane %v4778, %v4786
      %v4788 = vlaneseq
      %v4789 = vshrl.u32 %v4788, 7
      %v4790 = vsub.s32 2, %v4789
      %v4791 = vrot.slane %v4778, %v4790
      %vm4795 = vcmask 130048
      %v4797 = vsel %vm4795, %v4627, 0
      %4799 = vmatprep.subr.mxu0 %v4629
      %4800 = vmatpush1.msra.mxu0 %v4628
      %4801 = vmatprep.subr.mxu0 %v4632
      %4802 = vmatpush1.msra.mxu0 %v4631
      %4803 = vmatprep.subr.mxu0 %v4635
      %4804 = vmatpush1.msra.mxu0 %v4634
      %4805 = vmatprep.subr.mxu0 %v4638
      %4806 = vmatpush1.msra.mxu0 %v4637
      %4807 = vmatprep.subr.mxu0 %v4641
      %4808 = vmatpush1.msra.mxu0 %v4640
      %4809 = vmatprep.subr.mxu0 %v4644
      %4810 = vmatpush1.msra.mxu0 %v4643
      %4811 = vmatprep.subr.mxu0 %v4647
      %4812 = vmatpush1.msra.mxu0 %v4646
      %4813 = vmatprep.subr.mxu0 %v4650
      %4814 = vmatpush1.msra.mxu0 %v4649
      %4815 = vmatprep.subr.mxu0 %v4653
      %4816 = vmatpush1.msra.mxu0 %v4652
      %4817 = vmatprep.subr.mxu0 %v4656
      %4818 = vmatpush1.msra.mxu0 %v4655
      %4819 = vmatprep.subr.mxu0 %v4659
      %4820 = vmatpush1.msra.mxu0 %v4658
      %4821 = vmatprep.subr.mxu0 %v4662
      %4822 = vmatpush1.msra.mxu0 %v4661
      %4823 = vmatprep.subr.mxu0 %v4665
      %4824 = vmatpush1.msra.mxu0 %v4664
      %4825 = vmatprep.subr.mxu0 %v4668
      %4826 = vmatpush1.msra.mxu0 %v4667
      %4827 = vmatprep.subr.mxu0 %v4671
      %4828 = vmatpush1.msra.mxu0 %v4670
      %4829 = vmatprep.subr.mxu0 %v4674
      %4830 = vmatpush1.msra.mxu0 %v4673
      %4831 = vmatprep.subr.mxu0 %v4677
      %4832 = vmatpush1.msra.mxu0 %v4676
      %4833 = vmatprep.subr.mxu0 %v4680
      %4834 = vmatpush1.msra.mxu0 %v4679
      %4835 = vmatprep.subr.mxu0 %v4683
      %4836 = vmatpush1.msra.mxu0 %v4682
      %4837 = vmatprep.subr.mxu0 %v4686
      %4838 = vmatpush1.msra.mxu0 %v4685
      %4839 = vmatprep.subr.mxu0 %v4689
      %4840 = vmatpush1.msra.mxu0 %v4688
      %4841 = vmatprep.subr.mxu0 %v4692
      %4842 = vmatpush1.msra.mxu0 %v4691
      %4843 = vmatprep.subr.mxu0 %v4695
      %4844 = vmatpush1.msra.mxu0 %v4694
      %4845 = vmatprep.subr.mxu0 %v4698
      %4846 = vmatpush1.msra.mxu0 %v4697
      %4847 = vmatprep.subr.mxu0 %v4701
      %4848 = vmatpush1.msra.mxu0 %v4700
      %4849 = vmatprep.subr.mxu0 %v4704
      %4850 = vmatpush1.msra.mxu0 %v4703
      %4851 = vmatprep.subr.mxu0 %v4707
      %4852 = vmatpush1.msra.mxu0 %v4706
      %4853 = vmatprep.subr.mxu0 %v4710
      %4854 = vmatpush1.msra.mxu0 %v4709
      %4855 = vmatprep.subr.mxu0 %v4713
      %4856 = vmatpush1.msra.mxu0 %v4712
      %4857 = vmatprep.subr.mxu0 %v4716
      %4858 = vmatpush1.msra.mxu0 %v4715
      %4859 = vmatprep.subr.mxu0 %v4719
      %4860 = vmatpush1.msra.mxu0 %v4718
      %4861 = vmatprep.subr.mxu0 %v4722
      %4862 = vmatpush1.msra.mxu0 %v4721
      %4863 = vmatprep.mubr.f32.mxu0 %v4625
      %4864 = vmatmul.mubr.f32.gmra.mrb[0].mxu0 %v4624
      %v4865 = vpop.f32.mrb[0].mxu0
      %v4866 = vadd.f32 %v4783, %v4865
      %v4867 = vpop.f32.mrb[0].mxu0
      %v4868 = vadd.f32 %v4787, %v4867
      %4869 = vdwg.mxu0
      %4870 = vmatprep.subr.mxu0 %v4725
      %4871 = vmatpush1.msra.mxu0 %v4724
      %4872 = vmatprep.subr.mxu0 %v4728
      %4873 = vmatpush1.msra.mxu0 %v4727
      %4874 = vmatprep.subr.mxu0 %v4731
      %4875 = vmatpush1.msra.mxu0 %v4730
      %4876 = vmatprep.subr.mxu0 %v4734
      %4877 = vmatpush1.msra.mxu0 %v4733
      %4878 = vmatprep.subr.mxu0 %v4737
      %4879 = vmatpush1.msra.mxu0 %v4736
      %4880 = vmatprep.subr.mxu0 %v4740
      %4881 = vmatpush1.msra.mxu0 %v4739
      %4882 = vmatprep.subr.mxu0 %v4743
      %4883 = vmatpush1.msra.mxu0 %v4742
      %4884 = vmatprep.subr.mxu0 %v4746
      %4885 = vmatpush1.msra.mxu0 %v4745
      %4886 = vmatprep.subr.mxu0 %v4749
      %4887 = vmatpush1.msra.mxu0 %v4748
      %4888 = vmatprep.subr.mxu0 %v4752
      %4889 = vmatpush1.msra.mxu0 %v4751
      %4890 = vmatprep.subr.mxu0 %v4755
      %4891 = vmatpush1.msra.mxu0 %v4754
      %4892 = vmatprep.subr.mxu0 %v4758
      %4893 = vmatpush1.msra.mxu0 %v4757
      %4894 = vmatprep.subr.mxu0 %v4761
      %4895 = vmatpush1.msra.mxu0 %v4760
      %4896 = vmatprep.subr.mxu0 %v4764
      %4897 = vmatpush1.msra.mxu0 %v4763
      %4898 = vmatprep.subr.mxu0 %v4767
      %4899 = vmatpush1.msra.mxu0 %v4766
      %4900 = vmatprep.subr.mxu0 %v4770
      %4901 = vmatpush1.msra.mxu0 %v4769
      %4902 = vmatprep.subr.mxu0 %v4773
      %4903 = vmatpush1.msra.mxu0 %v4772
      %4904 = vmatprep.subr.mxu0 %v4776
      %4905 = vmatpush1.msra.mxu0 %v4775
      %4906 = vmatprep.subr.mxu0 0.0
      %4907 = vmatpush1.msra.mxu0 0.0
      %4908 = vmatprep.subr.mxu0 0.0
      %4909 = vmatpush1.msra.mxu0 0.0
      %4910 = vmatprep.subr.mxu0 0.0
      %4911 = vmatpush1.msra.mxu0 0.0
      %4912 = vmatprep.subr.mxu0 0.0
      %4913 = vmatpush1.msra.mxu0 0.0
      %4914 = vmatprep.subr.mxu0 0.0
      %4915 = vmatpush1.msra.mxu0 0.0
      %4916 = vmatprep.subr.mxu0 0.0
      %4917 = vmatpush1.msra.mxu0 0.0
      %4918 = vmatprep.subr.mxu0 0.0
      %4919 = vmatpush1.msra.mxu0 0.0
      %4920 = vmatprep.subr.mxu0 0.0
      %4921 = vmatpush1.msra.mxu0 0.0
      %4922 = vmatprep.subr.mxu0 0.0
      %4923 = vmatpush1.msra.mxu0 0.0
      %4924 = vmatprep.subr.mxu0 0.0
      %4925 = vmatpush1.msra.mxu0 0.0
      %4926 = vmatprep.subr.mxu0 0.0
      %4927 = vmatpush1.msra.mxu0 0.0
      %4928 = vmatprep.subr.mxu0 0.0
      %4929 = vmatpush1.msra.mxu0 0.0
      %4930 = vmatprep.subr.mxu0 0.0
      %4931 = vmatpush1.msra.mxu0 0.0
      %4932 = vmatprep.subr.mxu0 0.0
      %4933 = vmatpush1.msra.mxu0 0.0
      %4934 = vmatprep.mubr.f32.mxu0 %v4797
      %4935 = vmatmul.mubr.f32.gmra.mrb[0].mxu0 %v4626
      %v4936 = vpop.f32.mrb[0].mxu0
      %v4937 = vadd.f32 %v4866, %v4936
      %v4938 = vpop.f32.mrb[0].mxu0
      %v4939 = vadd.f32 %v4868, %v4938
      %4940 = vdwg.mxu0
      %4941 = vmatprep.subr.mxu0 0.0
      %4942 = vmatpush1.msra.mxu0 %v4630
      %4943 = vmatprep.subr.mxu0 0.0
      %4944 = vmatpush1.msra.mxu0 %v4633
      %4945 = vmatprep.subr.mxu0 0.0
      %4946 = vmatpush1.msra.mxu0 %v4636
      %4947 = vmatprep.subr.mxu0 0.0
      %4948 = vmatpush1.msra.mxu0 %v4639
      %4949 = vmatprep.subr.mxu0 0.0
      %4950 = vmatpush1.msra.mxu0 %v4642
      %4951 = vmatprep.subr.mxu0 0.0
      %4952 = vmatpush1.msra.mxu0 %v4645
      %4953 = vmatprep.subr.mxu0 0.0
      %4954 = vmatpush1.msra.mxu0 %v4648
      %4955 = vmatprep.subr.mxu0 0.0
      %4956 = vmatpush1.msra.mxu0 %v4651
      %4957 = vmatprep.subr.mxu0 0.0
      %4958 = vmatpush1.msra.mxu0 %v4654
      %4959 = vmatprep.subr.mxu0 0.0
      %4960 = vmatpush1.msra.mxu0 %v4657
      %4961 = vmatprep.subr.mxu0 0.0
      %4962 = vmatpush1.msra.mxu0 %v4660
      %4963 = vmatprep.subr.mxu0 0.0
      %4964 = vmatpush1.msra.mxu0 %v4663
      %4965 = vmatprep.subr.mxu0 0.0
      %4966 = vmatpush1.msra.mxu0 %v4666
      %4967 = vmatprep.subr.mxu0 0.0
      %4968 = vmatpush1.msra.mxu0 %v4669
      %4969 = vmatprep.subr.mxu0 0.0
      %4970 = vmatpush1.msra.mxu0 %v4672
      %4971 = vmatprep.subr.mxu0 0.0
      %4972 = vmatpush1.msra.mxu0 %v4675
      %4973 = vmatprep.subr.mxu0 0.0
      %4974 = vmatpush1.msra.mxu0 %v4678
      %4975 = vmatprep.subr.mxu0 0.0
      %4976 = vmatpush1.msra.mxu0 %v4681
      %4977 = vmatprep.subr.mxu0 0.0
      %4978 = vmatpush1.msra.mxu0 %v4684
      %4979 = vmatprep.subr.mxu0 0.0
      %4980 = vmatpush1.msra.mxu0 %v4687
      %4981 = vmatprep.subr.mxu0 0.0
      %4982 = vmatpush1.msra.mxu0 %v4690
      %4983 = vmatprep.subr.mxu0 0.0
      %4984 = vmatpush1.msra.mxu0 %v4693
      %4985 = vmatprep.subr.mxu0 0.0
      %4986 = vmatpush1.msra.mxu0 %v4696
      %4987 = vmatprep.subr.mxu0 0.0
      %4988 = vmatpush1.msra.mxu0 %v4699
      %4989 = vmatprep.subr.mxu0 0.0
      %4990 = vmatpush1.msra.mxu0 %v4702
      %4991 = vmatprep.subr.mxu0 0.0
      %4992 = vmatpush1.msra.mxu0 %v4705
      %4993 = vmatprep.subr.mxu0 0.0
      %4994 = vmatpush1.msra.mxu0 %v4708
      %4995 = vmatprep.subr.mxu0 0.0
      %4996 = vmatpush1.msra.mxu0 %v4711
      %4997 = vmatprep.subr.mxu0 0.0
      %4998 = vmatpush1.msra.mxu0 %v4714
      %4999 = vmatprep.subr.mxu0 0.0
      %5000 = vmatpush1.msra.mxu0 %v4717
      %5001 = vmatprep.subr.mxu0 0.0
      %5002 = vmatpush1.msra.mxu0 %v4720
      %5003 = vmatprep.subr.mxu0 0.0
      %5004 = vmatpush1.msra.mxu0 %v4723
      %5005 = vmatprep.mubr.f32.mxu0 %v4625
      %5006 = vmatmul.mubr.f32.gmra.mrb[0].mxu0 %v4624
      %v5007 = vpop.f32.mrb[0].mxu0
      %v5008 = vadd.f32 %v4791, %v5007
      %v5009 = vpop.f32.mrb[0].mxu0
      %5010 = vdwg.mxu0
      %5011 = vmatprep.subr.mxu0 0.0
      %5012 = vmatpush1.msra.mxu0 %v4726
      %5013 = vmatprep.subr.mxu0 0.0
      %5014 = vmatpush1.msra.mxu0 %v4729
      %5015 = vmatprep.subr.mxu0 0.0
      %5016 = vmatpush1.msra.mxu0 %v4732
      %5017 = vmatprep.subr.mxu0 0.0
      %5018 = vmatpush1.msra.mxu0 %v4735
      %5019 = vmatprep.subr.mxu0 0.0
      %5020 = vmatpush1.msra.mxu0 %v4738
      %5021 = vmatprep.subr.mxu0 0.0
      %5022 = vmatpush1.msra.mxu0 %v4741
      %5023 = vmatprep.subr.mxu0 0.0
      %5024 = vmatpush1.msra.mxu0 %v4744
      %5025 = vmatprep.subr.mxu0 0.0
      %5026 = vmatpush1.msra.mxu0 %v4747
      %5027 = vmatprep.subr.mxu0 0.0
      %5028 = vmatpush1.msra.mxu0 %v4750
      %5029 = vmatprep.subr.mxu0 0.0
      %5030 = vmatpush1.msra.mxu0 %v4753
      %5031 = vmatprep.subr.mxu0 0.0
      %5032 = vmatpush1.msra.mxu0 %v4756
      %5033 = vmatprep.subr.mxu0 0.0
      %5034 = vmatpush1.msra.mxu0 %v4759
      %5035 = vmatprep.subr.mxu0 0.0
      %5036 = vmatpush1.msra.mxu0 %v4762
      %5037 = vmatprep.subr.mxu0 0.0
      %5038 = vmatpush1.msra.mxu0 %v4765
      %5039 = vmatprep.subr.mxu0 0.0
      %5040 = vmatpush1.msra.mxu0 %v4768
      %5041 = vmatprep.subr.mxu0 0.0
      %5042 = vmatpush1.msra.mxu0 %v4771
      %5043 = vmatprep.subr.mxu0 0.0
      %5044 = vmatpush1.msra.mxu0 %v4774
      %5045 = vmatprep.subr.mxu0 0.0
      %5046 = vmatpush1.msra.mxu0 %v4777
      %5047 = vmatprep.subr.mxu0 0.0
      %5048 = vmatpush1.msra.mxu0 0.0
      %5049 = vmatprep.subr.mxu0 0.0
      %5050 = vmatpush1.msra.mxu0 0.0
      %5051 = vmatprep.subr.mxu0 0.0
      %5052 = vmatpush1.msra.mxu0 0.0
      %5053 = vmatprep.subr.mxu0 0.0
      %5054 = vmatpush1.msra.mxu0 0.0
      %5055 = vmatprep.subr.mxu0 0.0
      %5056 = vmatpush1.msra.mxu0 0.0
      %5057 = vmatprep.subr.mxu0 0.0
      %5058 = vmatpush1.msra.mxu0 0.0
      %5059 = vmatprep.subr.mxu0 0.0
      %5060 = vmatpush1.msra.mxu0 0.0
      %5061 = vmatprep.subr.mxu0 0.0
      %5062 = vmatpush1.msra.mxu0 0.0
      %5063 = vmatprep.subr.mxu0 0.0
      %5064 = vmatpush1.msra.mxu0 0.0
      %5065 = vmatprep.subr.mxu0 0.0
      %5066 = vmatpush1.msra.mxu0 0.0
      %5067 = vmatprep.subr.mxu0 0.0
      %5068 = vmatpush1.msra.mxu0 0.0
      %5069 = vmatprep.subr.mxu0 0.0
      %5070 = vmatpush1.msra.mxu0 0.0
      %5071 = vmatprep.subr.mxu0 0.0
      %5072 = vmatpush1.msra.mxu0 0.0
      %5073 = vmatprep.subr.mxu0 0.0
      %5074 = vmatpush1.msra.mxu0 0.0
      %5075 = vmatprep.mubr.f32.mxu0 %v4797
      %5076 = vmatmul.mubr.f32.gmra.mrb[0].mxu0 %v4626
      %v5077 = vpop.f32.mrb[0].mxu0
      %v5078 = vadd.f32 %v5008, %v5077
      %v5079 = vpop.f32.mrb[0].mxu0
      %5080 = vdwg.mxu0
      %v5081 = vmax.f32 %v4937, 0.0
      %v5082 = vmax.f32 %v4939, 0.0
      %v5083 = vmax.f32 %v5078, 0.0
      %v5084 = vld [vmem:[%s10] sm:$0x7]
      %v5086 = vlaneseq
      %v5087 = vshrl.u32 %v5086, 7
      %v5088 = vsub.s32 0, %v5087
      %v5089 = vrot.slane %v5084, %v5088
      %v5090 = vlaneseq
      %v5091 = vshrl.u32 %v5090, 7
      %v5092 = vsub.s32 1, %v5091
      %v5093 = vrot.slane %v5084, %v5092
      %v5094 = vlaneseq
      %v5095 = vshrl.u32 %v5094, 7
      %v5096 = vsub.s32 2, %v5095
      %v5097 = vrot.slane %v5084, %v5096
      %v5101 = vmul.f32 %v5081, %v5089
      %v5102 = vmul.f32 %v5082, %v5093
      %v5103 = vmul.f32 %v5083, %v5097
      %v5104 = vadd.f32 %v5101, %v5102
      %vm5105 = vcmask 359424
      %v5106 = vsel %vm5105, %v5103, 0.0
      %v5107 = vadd.f32 %v5104, %v5106
      %5108 = vadd.xlane.f32.xlu0 %v5107
      %v5109 = vpop.xlane.xlu0 %5108
      %v5110 = vld [vmem:[#allocation2] sm:$0x1]
      %v5112 = vlaneseq
      %v5113 = vshrl.u32 %v5112, 7
      %v5114 = vsub.s32 0, %v5113
      %v5115 = vrot.slane %v5110, %v5114
      %v5117 = vadd.f32 %v5109, %v5115
      %vm5118 = vcmask 7168
      %5119 = vst.msk [vmem:[%s435] sm:$0xff] %vm5118, %v5117
      %p5120 = scmp.lt.s32.totalorder %s25, 1
      %s5121 = scalar_select %p5120, %s25, 1
      %s5122 = smul.addr %s5121, 8
      %s5123 = scalar_lea.vmem %s12, %s5122
      // Predicated region
      $region69: #{critic_forward.1} parent=67 // pred_check
        %p5124 = pneg %p305
      $region70: #{critic_forward.1} parent=67 // pred_check_branch
        %5126 = sbr.rel (%p5124) target = $region72
      $region71: #{critic_forward.1} parent=67 // pred_region
        _
      $region72: #{critic_forward.1} parent=67 // pred_fallthru
        _
    $region68: #{critic_forward.1} parent=5 // pred_fallthru
      _
    %p5127 = scmp.le.s32.totalorder 2, %s20
    // Predicated region
    $region73: #{critic_forward.1} parent=5 // pred_check
      %p5128 = pneg %p5127
    $region74: #{critic_forward.1} parent=5 // pred_check_branch
      %5130 = sbr.rel (%p5128) target = $region76
    $region75: #{critic_forward.1} parent=5 // pred_region
      %s5131 = ssub.s32 %s20, 2
      // Predicated region
      $region77: #{critic_forward.1} parent=75 // pred_check
        %p5132 = pneg %p311
      $region78: #{critic_forward.1} parent=75 // pred_check_branch
        %5134 = sbr.rel (%p5132) target = $region80
      $region79: #{critic_forward.1} parent=75 // pred_region
        %p5135 = scmp.lt.s32.totalorder %s26, 1
        %s5136 = scalar_select %p5135, %s26, 1
        %s5137 = smul.addr %s5136, 8
        %s5138 = scalar_lea.vmem %s12, %s5137
      $region80: #{critic_forward.1} parent=75 // pred_fallthru
        _
    $region76: #{critic_forward.1} parent=5 // pred_fallthru
      _
  $region6: #{critic_forward.1} parent=0 // loop_footer
    %s24 = sadd.s32 1, %s20
  $region7: #{critic_forward.1} parent=0 // loop_footer_branch
    %19 = sbr.rel target = $region3
  $region8: #{critic_forward.1} parent=0 // loop_exit
    _

</llo_original>
